<compile_context>
chip_gen: v5e
topology: v5e:2x2
jax: 0.10.0
libtpu: 0.0.40
codegen_flags: <defaults>
</compile_context>

<pallas_src>
import jax
import jax.numpy as jnp
from jax.experimental import pallas as pl
from jax.experimental.pallas import tpu as pltpu

# ----------------------------- config (small, consistent with the module) ----
B = 2              # batch
L = 8              # sequence length
BL = B * L
H = 64             # hidden size (scaled down from 768)
NH = 2             # attention heads
DH = H // NH       # head dim
FF = 128           # intermediate (FFN) size
NUM_LAYERS = 2
VOCAB = 50
MAX_POS = 40
TYPE_VOCAB = 1     # RoBERTa uses type_vocab_size = 1
PAD_ID = 1         # RoBERTa padding idx
NUM_CLASSES = 3
SLOT = 128         # padded lane width for every weight slot / activation slab
CLS_PAD = SLOT
LN_EPS = 1e-5
INV_H = 1.0 / H
ATT_SCALE = float(DH) ** -0.5
F32 = jnp.float32
BF16 = jnp.bfloat16

# ----------------------------- slot / bias-row indexing ----------------------
SLOTS_PER_LAYER = 4 * NH + 2           # q,k,v,o per head + w1 + w2 = 10


def _q_slot(l, h): return l * SLOTS_PER_LAYER + h
def _k_slot(l, h): return l * SLOTS_PER_LAYER + NH + h
def _v_slot(l, h): return l * SLOTS_PER_LAYER + 2 * NH + h
def _o_slot(l, h): return l * SLOTS_PER_LAYER + 3 * NH + h
def _w1_slot(l):   return l * SLOTS_PER_LAYER + 4 * NH
def _w2_slot(l):   return l * SLOTS_PER_LAYER + 4 * NH + 1


PRE_SLOT = NUM_LAYERS * SLOTS_PER_LAYER
CLS_SLOT = PRE_SLOT + 1
N_SLOTS = CLS_SLOT + 1                 # 22

ROWS_PER_LAYER = 3 * NH + 7            # 13
EMB_G_ROW, EMB_B_ROW = 0, 1


def _bq_row(l, h): return 2 + l * ROWS_PER_LAYER + h
def _bk_row(l, h): return 2 + l * ROWS_PER_LAYER + NH + h
def _bv_row(l, h): return 2 + l * ROWS_PER_LAYER + 2 * NH + h
def _bo_row(l):    return 2 + l * ROWS_PER_LAYER + 3 * NH
def _ln1g_row(l):  return _bo_row(l) + 1
def _ln1b_row(l):  return _bo_row(l) + 2
def _b1_row(l):    return _bo_row(l) + 3
def _b2_row(l):    return _bo_row(l) + 4
def _ln2g_row(l):  return _bo_row(l) + 5
def _ln2b_row(l):  return _bo_row(l) + 6


PRE_B_ROW = 2 + NUM_LAYERS * ROWS_PER_LAYER
CLS_B_ROW = PRE_B_ROW + 1
N_BIAS_ROWS = CLS_B_ROW + 1            # 30


# ----------------------------- fused Pallas kernel ----------------------------
def _roberta_kernel(emb_ref, mask_ref, w_ref, b_ref, out_ref):
    """Single step: embedding-LN + both encoder layers + classifier head.

    Invariant: activation lanes [H:SLOT] are exactly zero everywhere (weights,
    biases and LN gamma/beta are zero-padded), so LN stats via sum*(1/H) are
    exact and every matmul can use the full padded 128x128 weight slot.
    """

    def brow(r):
        return b_ref[r:r + 1, :]                                   # (1, 128) f32

    def layer_norm(x, g_row, b_row):
        mean = jnp.sum(x, axis=-1, keepdims=True) * INV_H
        ex2 = jnp.sum(x * x, axis=-1, keepdims=True) * INV_H
        var = ex2 - mean * mean
        return (x - mean) * jax.lax.rsqrt(var + LN_EPS) * brow(g_row) + brow(b_row)

    def mm(x_bf, slot):
        # bf16 MXU matmul against a full padded weight slot, f32 accumulation.
        return jnp.dot(x_bf, w_ref[slot], preferred_element_type=jnp.float32)

    def gelu(y):
        # TODO(synk): HF RoBERTa default act is erf-GELU; using the tanh
        # approximation (gelu_new) for robust Mosaic lowering.
        return 0.5 * y * (1.0 + jnp.tanh(
            0.7978845608028654 * (y + 0.044715 * y * y * y)))

    x = layer_norm(emb_ref[...], EMB_G_ROW, EMB_B_ROW)             # (BL, 128) f32
    masks = [mask_ref[b] for b in range(B)]                        # hoisted (L, L) f32

    for l in range(NUM_LAYERS):
        # ---- self attention: per-head projections (no lane slicing) ----
        x_bf = x.astype(BF16)
        attn = None
        for h in range(NH):
            q = mm(x_bf, _q_slot(l, h)) + brow(_bq_row(l, h))      # (BL,128) f32
            k = mm(x_bf, _k_slot(l, h)) + brow(_bk_row(l, h))
            v = mm(x_bf, _v_slot(l, h)) + brow(_bv_row(l, h))
            ctx_rows = []
            for b in range(B):                                     # tile-aligned sublane slices
                qb = q[b * L:(b + 1) * L, :].astype(BF16)
                kb = k[b * L:(b + 1) * L, :].astype(BF16)
                vb = v[b * L:(b + 1) * L, :].astype(BF16)
                s = jax.lax.dot_general(qb, kb, (((1,), (1,)), ((), ())),
                                        preferred_element_type=jnp.float32)  # (L, L)
                s = s + masks[b]
                m = jnp.max(s, axis=-1, keepdims=True)
                p = jnp.exp(s - m)
                p = p * pl.reciprocal(jnp.sum(p, axis=-1, keepdims=True),
                                      approx=True)
                ctx_rows.append(jnp.dot(p.astype(BF16), vb,
                                        preferred_element_type=jnp.float32))
            ctx = jnp.concatenate(ctx_rows, axis=0)                # (BL, 128) f32
            o_h = mm(ctx.astype(BF16), _o_slot(l, h))              # per-head out-proj
            attn = o_h if attn is None else attn + o_h
        attn = attn + brow(_bo_row(l))
        x = layer_norm(attn + x, _ln1g_row(l), _ln1b_row(l))       # post-LN residual

        # ---- feed-forward ----
        x_bf = x.astype(BF16)
        h1 = gelu(mm(x_bf, _w1_slot(l)) + brow(_b1_row(l)))        # (BL, 128) f32
        h2 = mm(h1.astype(BF16), _w2_slot(l)) + brow(_b2_row(l))   # (BL, 128) f32
        x = layer_norm(h2 + x, _ln2g_row(l), _ln2b_row(l))

    # ---- classification head on both CLS rows at once ----
    cls = jnp.concatenate([x[b * L:b * L + 1, :] for b in range(B)], axis=0)  # (B, 128)
    pre = jnp.maximum(mm(cls.astype(BF16), PRE_SLOT) + brow(PRE_B_ROW), 0.0)
    # dropout -> identity (eval mode)
    logits = mm(pre.astype(BF16), CLS_SLOT) + brow(CLS_B_ROW)                 # (B, 128)
    out_ref[...] = logits.astype(out_ref.dtype)


# ----------------------------- pallas_call wrapper ----------------------------
_FLOPS = int(
    NUM_LAYERS * SLOTS_PER_LAYER * 2 * BL * SLOT * SLOT            # proj / FFN matmuls
    + NUM_LAYERS * B * NH * 2 * 2 * L * L * SLOT                   # scores + context
    + 2 * 2 * B * SLOT * SLOT)                                     # classifier head
_TRANSCENDENTALS = int(NUM_LAYERS * (BL * FF + B * NH * L * L) + BL)


def roberta_pallas_forward(packed, emb_pad, mask_bias):
    """emb_pad: (B*L, 128) f32 zero-padded embeddings; mask_bias: (B, L, L) f32."""
    w_all, b_all = packed["w_all"], packed["b_all"]
    bytes_accessed = int(emb_pad.size * 4 + mask_bias.size * 4
                         + w_all.size * 2 + b_all.size * 4 + B * CLS_PAD * 4)
    logits_pad = pl.pallas_call(
        _roberta_kernel,
        out_shape=jax.ShapeDtypeStruct((B, CLS_PAD), F32),
        grid=(1,),
        in_specs=[
            pl.BlockSpec((BL, SLOT), lambda i: (0, 0)),             # embeddings (padded)
            pl.BlockSpec((B, L, L), lambda i: (0, 0, 0)),           # additive mask bias
            pl.BlockSpec((N_SLOTS, SLOT, SLOT), lambda i: (0, 0, 0)),  # bf16 weight slab
            pl.BlockSpec((N_BIAS_ROWS, SLOT), lambda i: (0, 0)),    # f32 bias/LN slab
        ],
        out_specs=pl.BlockSpec((B, CLS_PAD), lambda i: (0, 0)),
        compiler_params=pltpu.CompilerParams(
            dimension_semantics=("arbitrary",)),
        cost_estimate=pl.CostEstimate(flops=_FLOPS,
                                      transcendentals=_TRANSCENDENTALS,
                                      bytes_accessed=bytes_accessed),
    )(emb_pad, mask_bias, w_all, b_all)
    return logits_pad[:, :NUM_CLASSES]


# ----------------------------- parameter init & packing ----------------------
def init_params(key):
    def nrm(k, shape, scale=0.02):
        return (scale * jax.random.normal(k, shape)).astype(F32)

    keys = iter(jax.random.split(key, 64))
    p = {
        "word_emb": nrm(next(keys), (VOCAB, H)),
        "pos_emb": nrm(next(keys), (MAX_POS, H)),
        "type_emb": nrm(next(keys), (TYPE_VOCAB, H)),
        "emb_ln_g": jnp.ones((H,), F32),
        "emb_ln_b": jnp.zeros((H,), F32),
        "layers": [],
        "pre_w": nrm(next(keys), (H, H)),
        "pre_b": jnp.zeros((H,), F32),
        "cls_w": nrm(next(keys), (H, NUM_CLASSES)),
        "cls_b": jnp.zeros((NUM_CLASSES,), F32),
    }
    for _ in range(NUM_LAYERS):
        lp = {
            "wq": nrm(next(keys), (H, H)), "bq": jnp.zeros((H,), F32),
            "wk": nrm(next(keys), (H, H)), "bk": jnp.zeros((H,), F32),
            "wv": nrm(next(keys), (H, H)), "bv": jnp.zeros((H,), F32),
            "wo": nrm(next(keys), (H, H)), "bo": jnp.zeros((H,), F32),
            "ln1_g": jnp.ones((H,), F32), "ln1_b": jnp.zeros((H,), F32),
            "w1": nrm(next(keys), (H, FF)), "b1": jnp.zeros((FF,), F32),
            "w2": nrm(next(keys), (FF, H)), "b2": jnp.zeros((H,), F32),
            "ln2_g": jnp.ones((H,), F32), "ln2_b": jnp.zeros((H,), F32),
        }
        p["layers"].append(lp)
    return p


def pack_params(p):
    """Pack all matmul weights into one zero-padded (N_SLOTS,128,128) bf16 slab
    (per-head Q/K/V/O pre-split, ATT_SCALE folded into Q in f32 first) and all
    bias / LayerNorm vectors into one zero-padded (N_BIAS_ROWS,128) f32 slab."""

    def slot(w):
        s = jnp.zeros((SLOT, SLOT), F32)
        return s.at[:w.shape[0], :w.shape[1]].set(w.astype(F32))

    def row(v):
        r = jnp.zeros((SLOT,), F32)
        return r.at[:v.shape[0]].set(v.astype(F32))

    slots, rows = [], []
    rows.append(row(p["emb_ln_g"]))
    rows.append(row(p["emb_ln_b"]))

    for lp in p["layers"]:
        # per-head Q (scaled), K, V projection weights; per-head O rows
        for h in range(NH):
            slots.append(slot(lp["wq"][:, h * DH:(h + 1) * DH] * ATT_SCALE))
        for h in range(NH):
            slots.append(slot(lp["wk"][:, h * DH:(h + 1) * DH]))
        for h in range(NH):
            slots.append(slot(lp["wv"][:, h * DH:(h + 1) * DH]))
        for h in range(NH):
            slots.append(slot(lp["wo"][h * DH:(h + 1) * DH, :]))
        slots.append(slot(lp["w1"]))
        slots.append(slot(lp["w2"]))

        for h in range(NH):
            rows.append(row(lp["bq"][h * DH:(h + 1) * DH] * ATT_SCALE))
        for h in range(NH):
            rows.append(row(lp["bk"][h * DH:(h + 1) * DH]))
        for h in range(NH):
            rows.append(row(lp["bv"][h * DH:(h + 1) * DH]))
        rows.append(row(lp["bo"]))
        rows.append(row(lp["ln1_g"]))
        rows.append(row(lp["ln1_b"]))
        rows.append(row(lp["b1"]))
        rows.append(row(lp["b2"]))
        rows.append(row(lp["ln2_g"]))
        rows.append(row(lp["ln2_b"]))

    slots.append(slot(p["pre_w"]))
    slots.append(slot(p["cls_w"]))
    rows.append(row(p["pre_b"]))
    rows.append(row(p["cls_b"]))

    assert len(slots) == N_SLOTS and len(rows) == N_BIAS_ROWS
    return {
        "word_emb": p["word_emb"], "pos_emb": p["pos_emb"], "type_emb": p["type_emb"],
        "w_all": jnp.stack(slots).astype(BF16),     # (22, 128, 128) bf16
        "b_all": jnp.stack(rows).astype(F32),       # (30, 128) f32
    }


# ----------------------------- forward pass -----------------------------------
def custom_roberta_forward(packed, input_ids, attention_mask, token_type_ids):
    # --- RoBERTa embeddings (plain-JAX gather glue) ---
    mask_i = (input_ids != PAD_ID).astype(jnp.int32)
    position_ids = jnp.cumsum(mask_i, axis=1) * mask_i + PAD_ID      # RoBERTa position ids
    emb = (packed["word_emb"][input_ids]
           + packed["pos_emb"][position_ids]
           + packed["type_emb"][token_type_ids]).astype(F32)         # (B, L, H)

    # batch-folded, zero-padded to 128 lanes (keeps the in-kernel zero-lane invariant)
    emb_pad = jnp.zeros((BL, SLOT), F32).at[:, :H].set(emb.reshape(BL, H))

    # dense per-batch additive attention-mask bias, precomputed once (no in-kernel broadcast)
    mask_bias = jnp.broadcast_to(
        ((1.0 - attention_mask.astype(F32)) * (-1e9))[:, None, :], (B, L, L))

    # everything else (embedding LN, encoder stack, classification head) runs
    # in a single fused Pallas kernel
    return roberta_pallas_forward(packed, emb_pad, mask_bias)


# ----------------------------- main -------------------------------------------
if __name__ == "__main__":
    root = jax.random.PRNGKey(0)
    k_params, k_ids = jax.random.split(root, 2)

    params = init_params(k_params)
    packed = pack_params(params)

    input_ids = jax.random.randint(k_ids, (B, L), 2, VOCAB, dtype=jnp.int32)
    input_ids = input_ids.at[:, 0].set(0)              # <s> token
    input_ids = input_ids.at[1, L - 2:].set(PAD_ID)    # some padding in batch 1
    attention_mask = (input_ids != PAD_ID).astype(jnp.int32)
    token_type_ids = jnp.zeros((B, L), dtype=jnp.int32)

    logits = custom_roberta_forward(packed, input_ids, attention_mask, token_type_ids)
    logits = jax.block_until_ready(logits)
    assert logits.shape == (B, NUM_CLASSES)
    assert bool(jnp.all(jnp.isfinite(logits)))
    print("KERNEL_OK")
</pallas_src>

<mosaic_0001>
module attributes {stable_mosaic.version = 11 : i64} {
  func.func @_roberta_kernel(%arg0: i32, %arg1: memref<16x128xf32, #tpu.memory_space<vmem>>, %arg2: memref<2x8x8xf32, #tpu.memory_space<vmem>>, %arg3: memref<22x128x128xbf16, #tpu.memory_space<vmem>>, %arg4: memref<30x128xf32, #tpu.memory_space<vmem>>, %arg5: memref<2x128xf32, #tpu.memory_space<vmem>>) attributes {dimension_semantics = [#tpu.dimension_semantics<arbitrary>], iteration_bounds = array<i64: 1>, scalar_prefetch = 0 : i64, scratch_operands = 0 : i64, tpu.core_type = #tpu.core_type<tc>, window_params = [{pipeline_mode = #tpu.pipeline_mode<synchronous>, transform_indices = @transform_0, window_bounds = array<i64: 16, 128>}, {pipeline_mode = #tpu.pipeline_mode<synchronous>, transform_indices = @transform_1, window_bounds = array<i64: 2, 8, 8>}, {pipeline_mode = #tpu.pipeline_mode<synchronous>, transform_indices = @transform_2, window_bounds = array<i64: 22, 128, 128>}, {pipeline_mode = #tpu.pipeline_mode<synchronous>, transform_indices = @transform_3, window_bounds = array<i64: 30, 128>}, {pipeline_mode = #tpu.pipeline_mode<synchronous>, transform_indices = @transform_4, window_bounds = array<i64: 2, 128>}]} {
    %c0 = arith.constant 0 : index
    %c0_0 = arith.constant 0 : index
    %0 = vector.load %arg1[%c0, %c0_0] : memref<16x128xf32, #tpu.memory_space<vmem>>, vector<16x128xf32>
    %cst = arith.constant dense<0.000000e+00> : vector<16xf32>
    %1 = vector.multi_reduction <add>, %0, %cst [1] : vector<16x128xf32> to vector<16xf32>
    %2 = vector.shape_cast %1 : vector<16xf32> to vector<16x1xf32>
    %cst_1 = arith.constant 1.562500e-02 : f32
    %3 = vector.broadcast %cst_1 : f32 to vector<16x1xf32>
    %4 = arith.mulf %2, %3 : vector<16x1xf32>
    %5 = arith.mulf %0, %0 : vector<16x128xf32>
    %cst_2 = arith.constant dense<0.000000e+00> : vector<16xf32>
    %6 = vector.multi_reduction <add>, %5, %cst_2 [1] : vector<16x128xf32> to vector<16xf32>
    %7 = vector.shape_cast %6 : vector<16xf32> to vector<16x1xf32>
    %cst_3 = arith.constant 1.562500e-02 : f32
    %8 = vector.broadcast %cst_3 : f32 to vector<16x1xf32>
    %9 = arith.mulf %7, %8 : vector<16x1xf32>
    %10 = arith.mulf %4, %4 : vector<16x1xf32>
    %11 = arith.subf %9, %10 : vector<16x1xf32>
    %12 = vector.broadcast %4 : vector<16x1xf32> to vector<16x128xf32>
    %13 = arith.subf %0, %12 : vector<16x128xf32>
    %cst_4 = arith.constant 9.99999974E-6 : f32
    %14 = vector.broadcast %cst_4 : f32 to vector<16x1xf32>
    %15 = arith.addf %11, %14 : vector<16x1xf32>
    %16 = math.rsqrt %15 : vector<16x1xf32>
    %17 = vector.broadcast %16 : vector<16x1xf32> to vector<16x128xf32>
    %18 = arith.mulf %13, %17 : vector<16x128xf32>
    %c0_5 = arith.constant 0 : index
    %c0_6 = arith.constant 0 : index
    %19 = vector.load %arg4[%c0_5, %c0_6] : memref<30x128xf32, #tpu.memory_space<vmem>>, vector<1x128xf32>
    %20 = vector.broadcast %19 : vector<1x128xf32> to vector<16x128xf32>
    %21 = arith.mulf %18, %20 : vector<16x128xf32>
    %c1 = arith.constant 1 : index
    %c0_7 = arith.constant 0 : index
    %22 = vector.load %arg4[%c1, %c0_7] : memref<30x128xf32, #tpu.memory_space<vmem>>, vector<1x128xf32>
    %23 = vector.broadcast %22 : vector<1x128xf32> to vector<16x128xf32>
    %24 = arith.addf %21, %23 : vector<16x128xf32>
    %c0_8 = arith.constant 0 : index
    %c0_9 = arith.constant 0 : index
    %c0_10 = arith.constant 0 : index
    %25 = vector.load %arg2[%c0_8, %c0_9, %c0_10] : memref<2x8x8xf32, #tpu.memory_space<vmem>>, vector<1x8x8xf32>
    %26 = vector.shape_cast %25 : vector<1x8x8xf32> to vector<8x8xf32>
    %c1_11 = arith.constant 1 : index
    %c0_12 = arith.constant 0 : index
    %c0_13 = arith.constant 0 : index
    %27 = vector.load %arg2[%c1_11, %c0_12, %c0_13] : memref<2x8x8xf32, #tpu.memory_space<vmem>>, vector<1x8x8xf32>
    %28 = vector.shape_cast %27 : vector<1x8x8xf32> to vector<8x8xf32>
    %29 = arith.truncf %24 : vector<16x128xf32> to vector<16x128xbf16>
    %c0_14 = arith.constant 0 : index
    %c0_15 = arith.constant 0 : index
    %c0_16 = arith.constant 0 : index
    %30 = vector.load %arg3[%c0_14, %c0_15, %c0_16] : memref<22x128x128xbf16, #tpu.memory_space<vmem>>, vector<1x128x128xbf16>
    %31 = vector.shape_cast %30 : vector<1x128x128xbf16> to vector<128x128xbf16>
    %cst_17 = arith.constant dense<0.000000e+00> : vector<16x128xf32>
    %32 = tpu.matmul %29, %31, %cst_17 {dimension_numbers = #tpu.dot_dimension_numbers<[1], [0], [0], [1], [0, 0, 1, 1], [], []>} : vector<16x128xbf16>, vector<128x128xbf16>, vector<16x128xf32> -> vector<16x128xf32>
    %c2 = arith.constant 2 : index
    %c0_18 = arith.constant 0 : index
    %33 = vector.load %arg4[%c2, %c0_18] : memref<30x128xf32, #tpu.memory_space<vmem>>, vector<1x128xf32>
    %34 = vector.broadcast %33 : vector<1x128xf32> to vector<16x128xf32>
    %35 = arith.addf %32, %34 : vector<16x128xf32>
    %c2_19 = arith.constant 2 : index
    %c0_20 = arith.constant 0 : index
    %c0_21 = arith.constant 0 : index
    %36 = vector.load %arg3[%c2_19, %c0_20, %c0_21] : memref<22x128x128xbf16, #tpu.memory_space<vmem>>, vector<1x128x128xbf16>
    %37 = vector.shape_cast %36 : vector<1x128x128xbf16> to vector<128x128xbf16>
    %cst_22 = arith.constant dense<0.000000e+00> : vector<16x128xf32>
    %38 = tpu.matmul %29, %37, %cst_22 {dimension_numbers = #tpu.dot_dimension_numbers<[1], [0], [0], [1], [0, 0, 1, 1], [], []>} : vector<16x128xbf16>, vector<128x128xbf16>, vector<16x128xf32> -> vector<16x128xf32>
    %c4 = arith.constant 4 : index
    %c0_23 = arith.constant 0 : index
    %39 = vector.load %arg4[%c4, %c0_23] : memref<30x128xf32, #tpu.memory_space<vmem>>, vector<1x128xf32>
    %40 = vector.broadcast %39 : vector<1x128xf32> to vector<16x128xf32>
    %41 = arith.addf %38, %40 : vector<16x128xf32>
    %c4_24 = arith.constant 4 : index
    %c0_25 = arith.constant 0 : index
    %c0_26 = arith.constant 0 : index
    %42 = vector.load %arg3[%c4_24, %c0_25, %c0_26] : memref<22x128x128xbf16, #tpu.memory_space<vmem>>, vector<1x128x128xbf16>
    %43 = vector.shape_cast %42 : vector<1x128x128xbf16> to vector<128x128xbf16>
    %cst_27 = arith.constant dense<0.000000e+00> : vector<16x128xf32>
    %44 = tpu.matmul %29, %43, %cst_27 {dimension_numbers = #tpu.dot_dimension_numbers<[1], [0], [0], [1], [0, 0, 1, 1], [], []>} : vector<16x128xbf16>, vector<128x128xbf16>, vector<16x128xf32> -> vector<16x128xf32>
    %c6 = arith.constant 6 : index
    %c0_28 = arith.constant 0 : index
    %45 = vector.load %arg4[%c6, %c0_28] : memref<30x128xf32, #tpu.memory_space<vmem>>, vector<1x128xf32>
    %46 = vector.broadcast %45 : vector<1x128xf32> to vector<16x128xf32>
    %47 = arith.addf %44, %46 : vector<16x128xf32>
    %48 = vector.extract_strided_slice %35 {offsets = [0, 0], sizes = [8, 128], strides = [1, 1]} : vector<16x128xf32> to vector<8x128xf32>
    %49 = arith.truncf %48 : vector<8x128xf32> to vector<8x128xbf16>
    %50 = vector.extract_strided_slice %41 {offsets = [0, 0], sizes = [8, 128], strides = [1, 1]} : vector<16x128xf32> to vector<8x128xf32>
    %51 = arith.truncf %50 : vector<8x128xf32> to vector<8x128xbf16>
    %52 = vector.extract_strided_slice %47 {offsets = [0, 0], sizes = [8, 128], strides = [1, 1]} : vector<16x128xf32> to vector<8x128xf32>
    %53 = arith.truncf %52 : vector<8x128xf32> to vector<8x128xbf16>
    %cst_29 = arith.constant dense<0.000000e+00> : vector<8x8xf32>
    %54 = tpu.matmul %49, %51, %cst_29 {dimension_numbers = #tpu.dot_dimension_numbers<[1], [1], [0], [0], [0, 0, 1, 0], [], []>} : vector<8x128xbf16>, vector<8x128xbf16>, vector<8x8xf32> -> vector<8x8xf32>
    %55 = arith.addf %54, %26 : vector<8x8xf32>
    %cst_30 = arith.constant dense<0xFF800000> : vector<8xf32>
    %56 = vector.multi_reduction <maximumf>, %55, %cst_30 [1] : vector<8x8xf32> to vector<8xf32>
    %57 = vector.shape_cast %56 : vector<8xf32> to vector<8x1xf32>
    %58 = vector.broadcast %57 : vector<8x1xf32> to vector<8x8xf32>
    %59 = arith.subf %55, %58 : vector<8x8xf32>
    %60 = math.exp %59 : vector<8x8xf32>
    %cst_31 = arith.constant dense<0.000000e+00> : vector<8xf32>
    %61 = vector.multi_reduction <add>, %60, %cst_31 [1] : vector<8x8xf32> to vector<8xf32>
    %62 = vector.shape_cast %61 : vector<8xf32> to vector<8x1xf32>
    %63 = tpu.reciprocal %62 {approx = true} : vector<8x1xf32> -> vector<8x1xf32>
    %64 = vector.broadcast %63 : vector<8x1xf32> to vector<8x8xf32>
    %65 = arith.mulf %60, %64 : vector<8x8xf32>
    %66 = arith.truncf %65 : vector<8x8xf32> to vector<8x8xbf16>
    %cst_32 = arith.constant dense<0.000000e+00> : vector<8x128xf32>
    %67 = tpu.matmul %66, %53, %cst_32 {dimension_numbers = #tpu.dot_dimension_numbers<[1], [0], [0], [1], [0, 0, 1, 1], [], []>} : vector<8x8xbf16>, vector<8x128xbf16>, vector<8x128xf32> -> vector<8x128xf32>
    %68 = vector.extract_strided_slice %35 {offsets = [8, 0], sizes = [8, 128], strides = [1, 1]} : vector<16x128xf32> to vector<8x128xf32>
    %69 = arith.truncf %68 : vector<8x128xf32> to vector<8x128xbf16>
    %70 = vector.extract_strided_slice %41 {offsets = [8, 0], sizes = [8, 128], strides = [1, 1]} : vector<16x128xf32> to vector<8x128xf32>
    %71 = arith.truncf %70 : vector<8x128xf32> to vector<8x128xbf16>
    %72 = vector.extract_strided_slice %47 {offsets = [8, 0], sizes = [8, 128], strides = [1, 1]} : vector<16x128xf32> to vector<8x128xf32>
    %73 = arith.truncf %72 : vector<8x128xf32> to vector<8x128xbf16>
    %cst_33 = arith.constant dense<0.000000e+00> : vector<8x8xf32>
    %74 = tpu.matmul %69, %71, %cst_33 {dimension_numbers = #tpu.dot_dimension_numbers<[1], [1], [0], [0], [0, 0, 1, 0], [], []>} : vector<8x128xbf16>, vector<8x128xbf16>, vector<8x8xf32> -> vector<8x8xf32>
    %75 = arith.addf %74, %28 : vector<8x8xf32>
    %cst_34 = arith.constant dense<0xFF800000> : vector<8xf32>
    %76 = vector.multi_reduction <maximumf>, %75, %cst_34 [1] : vector<8x8xf32> to vector<8xf32>
    %77 = vector.shape_cast %76 : vector<8xf32> to vector<8x1xf32>
    %78 = vector.broadcast %77 : vector<8x1xf32> to vector<8x8xf32>
    %79 = arith.subf %75, %78 : vector<8x8xf32>
    %80 = math.exp %79 : vector<8x8xf32>
    %cst_35 = arith.constant dense<0.000000e+00> : vector<8xf32>
    %81 = vector.multi_reduction <add>, %80, %cst_35 [1] : vector<8x8xf32> to vector<8xf32>
    %82 = vector.shape_cast %81 : vector<8xf32> to vector<8x1xf32>
    %83 = tpu.reciprocal %82 {approx = true} : vector<8x1xf32> -> vector<8x1xf32>
    %84 = vector.broadcast %83 : vector<8x1xf32> to vector<8x8xf32>
    %85 = arith.mulf %80, %84 : vector<8x8xf32>
    %86 = arith.truncf %85 : vector<8x8xf32> to vector<8x8xbf16>
    %cst_36 = arith.constant dense<0.000000e+00> : vector<8x128xf32>
    %87 = tpu.matmul %86, %73, %cst_36 {dimension_numbers = #tpu.dot_dimension_numbers<[1], [0], [0], [1], [0, 0, 1, 1], [], []>} : vector<8x8xbf16>, vector<8x128xbf16>, vector<8x128xf32> -> vector<8x128xf32>
    %88 = tpu.concatenate %67, %87 in 0 : vector<8x128xf32>, vector<8x128xf32> -> vector<16x128xf32>
    %89 = arith.truncf %88 : vector<16x128xf32> to vector<16x128xbf16>
    %c6_37 = arith.constant 6 : index
    %c0_38 = arith.constant 0 : index
    %c0_39 = arith.constant 0 : index
    %90 = vector.load %arg3[%c6_37, %c0_38, %c0_39] : memref<22x128x128xbf16, #tpu.memory_space<vmem>>, vector<1x128x128xbf16>
    %91 = vector.shape_cast %90 : vector<1x128x128xbf16> to vector<128x128xbf16>
    %cst_40 = arith.constant dense<0.000000e+00> : vector<16x128xf32>
    %92 = tpu.matmul %89, %91, %cst_40 {dimension_numbers = #tpu.dot_dimension_numbers<[1], [0], [0], [1], [0, 0, 1, 1], [], []>} : vector<16x128xbf16>, vector<128x128xbf16>, vector<16x128xf32> -> vector<16x128xf32>
    %c1_41 = arith.constant 1 : index
    %c0_42 = arith.constant 0 : index
    %c0_43 = arith.constant 0 : index
    %93 = vector.load %arg3[%c1_41, %c0_42, %c0_43] : memref<22x128x128xbf16, #tpu.memory_space<vmem>>, vector<1x128x128xbf16>
    %94 = vector.shape_cast %93 : vector<1x128x128xbf16> to vector<128x128xbf16>
    %cst_44 = arith.constant dense<0.000000e+00> : vector<16x128xf32>
    %95 = tpu.matmul %29, %94, %cst_44 {dimension_numbers = #tpu.dot_dimension_numbers<[1], [0], [0], [1], [0, 0, 1, 1], [], []>} : vector<16x128xbf16>, vector<128x128xbf16>, vector<16x128xf32> -> vector<16x128xf32>
    %c3 = arith.constant 3 : index
    %c0_45 = arith.constant 0 : index
    %96 = vector.load %arg4[%c3, %c0_45] : memref<30x128xf32, #tpu.memory_space<vmem>>, vector<1x128xf32>
    %97 = vector.broadcast %96 : vector<1x128xf32> to vector<16x128xf32>
    %98 = arith.addf %95, %97 : vector<16x128xf32>
    %c3_46 = arith.constant 3 : index
    %c0_47 = arith.constant 0 : index
    %c0_48 = arith.constant 0 : index
    %99 = vector.load %arg3[%c3_46, %c0_47, %c0_48] : memref<22x128x128xbf16, #tpu.memory_space<vmem>>, vector<1x128x128xbf16>
    %100 = vector.shape_cast %99 : vector<1x128x128xbf16> to vector<128x128xbf16>
    %cst_49 = arith.constant dense<0.000000e+00> : vector<16x128xf32>
    %101 = tpu.matmul %29, %100, %cst_49 {dimension_numbers = #tpu.dot_dimension_numbers<[1], [0], [0], [1], [0, 0, 1, 1], [], []>} : vector<16x128xbf16>, vector<128x128xbf16>, vector<16x128xf32> -> vector<16x128xf32>
    %c5 = arith.constant 5 : index
    %c0_50 = arith.constant 0 : index
    %102 = vector.load %arg4[%c5, %c0_50] : memref<30x128xf32, #tpu.memory_space<vmem>>, vector<1x128xf32>
    %103 = vector.broadcast %102 : vector<1x128xf32> to vector<16x128xf32>
    %104 = arith.addf %101, %103 : vector<16x128xf32>
    %c5_51 = arith.constant 5 : index
    %c0_52 = arith.constant 0 : index
    %c0_53 = arith.constant 0 : index
    %105 = vector.load %arg3[%c5_51, %c0_52, %c0_53] : memref<22x128x128xbf16, #tpu.memory_space<vmem>>, vector<1x128x128xbf16>
    %106 = vector.shape_cast %105 : vector<1x128x128xbf16> to vector<128x128xbf16>
    %cst_54 = arith.constant dense<0.000000e+00> : vector<16x128xf32>
    %107 = tpu.matmul %29, %106, %cst_54 {dimension_numbers = #tpu.dot_dimension_numbers<[1], [0], [0], [1], [0, 0, 1, 1], [], []>} : vector<16x128xbf16>, vector<128x128xbf16>, vector<16x128xf32> -> vector<16x128xf32>
    %c7 = arith.constant 7 : index
    %c0_55 = arith.constant 0 : index
    %108 = vector.load %arg4[%c7, %c0_55] : memref<30x128xf32, #tpu.memory_space<vmem>>, vector<1x128xf32>
    %109 = vector.broadcast %108 : vector<1x128xf32> to vector<16x128xf32>
    %110 = arith.addf %107, %109 : vector<16x128xf32>
    %111 = vector.extract_strided_slice %98 {offsets = [0, 0], sizes = [8, 128], strides = [1, 1]} : vector<16x128xf32> to vector<8x128xf32>
    %112 = arith.truncf %111 : vector<8x128xf32> to vector<8x128xbf16>
    %113 = vector.extract_strided_slice %104 {offsets = [0, 0], sizes = [8, 128], strides = [1, 1]} : vector<16x128xf32> to vector<8x128xf32>
    %114 = arith.truncf %113 : vector<8x128xf32> to vector<8x128xbf16>
    %115 = vector.extract_strided_slice %110 {offsets = [0, 0], sizes = [8, 128], strides = [1, 1]} : vector<16x128xf32> to vector<8x128xf32>
    %116 = arith.truncf %115 : vector<8x128xf32> to vector<8x128xbf16>
    %cst_56 = arith.constant dense<0.000000e+00> : vector<8x8xf32>
    %117 = tpu.matmul %112, %114, %cst_56 {dimension_numbers = #tpu.dot_dimension_numbers<[1], [1], [0], [0], [0, 0, 1, 0], [], []>} : vector<8x128xbf16>, vector<8x128xbf16>, vector<8x8xf32> -> vector<8x8xf32>
    %118 = arith.addf %117, %26 : vector<8x8xf32>
    %cst_57 = arith.constant dense<0xFF800000> : vector<8xf32>
    %119 = vector.multi_reduction <maximumf>, %118, %cst_57 [1] : vector<8x8xf32> to vector<8xf32>
    %120 = vector.shape_cast %119 : vector<8xf32> to vector<8x1xf32>
    %121 = vector.broadcast %120 : vector<8x1xf32> to vector<8x8xf32>
    %122 = arith.subf %118, %121 : vector<8x8xf32>
    %123 = math.exp %122 : vector<8x8xf32>
    %cst_58 = arith.constant dense<0.000000e+00> : vector<8xf32>
    %124 = vector.multi_reduction <add>, %123, %cst_58 [1] : vector<8x8xf32> to vector<8xf32>
    %125 = vector.shape_cast %124 : vector<8xf32> to vector<8x1xf32>
    %126 = tpu.reciprocal %125 {approx = true} : vector<8x1xf32> -> vector<8x1xf32>
    %127 = vector.broadcast %126 : vector<8x1xf32> to vector<8x8xf32>
    %128 = arith.mulf %123, %127 : vector<8x8xf32>
    %129 = arith.truncf %128 : vector<8x8xf32> to vector<8x8xbf16>
    %cst_59 = arith.constant dense<0.000000e+00> : vector<8x128xf32>
    %130 = tpu.matmul %129, %116, %cst_59 {dimension_numbers = #tpu.dot_dimension_numbers<[1], [0], [0], [1], [0, 0, 1, 1], [], []>} : vector<8x8xbf16>, vector<8x128xbf16>, vector<8x128xf32> -> vector<8x128xf32>
    %131 = vector.extract_strided_slice %98 {offsets = [8, 0], sizes = [8, 128], strides = [1, 1]} : vector<16x128xf32> to vector<8x128xf32>
    %132 = arith.truncf %131 : vector<8x128xf32> to vector<8x128xbf16>
    %133 = vector.extract_strided_slice %104 {offsets = [8, 0], sizes = [8, 128], strides = [1, 1]} : vector<16x128xf32> to vector<8x128xf32>
    %134 = arith.truncf %133 : vector<8x128xf32> to vector<8x128xbf16>
    %135 = vector.extract_strided_slice %110 {offsets = [8, 0], sizes = [8, 128], strides = [1, 1]} : vector<16x128xf32> to vector<8x128xf32>
    %136 = arith.truncf %135 : vector<8x128xf32> to vector<8x128xbf16>
    %cst_60 = arith.constant dense<0.000000e+00> : vector<8x8xf32>
    %137 = tpu.matmul %132, %134, %cst_60 {dimension_numbers = #tpu.dot_dimension_numbers<[1], [1], [0], [0], [0, 0, 1, 0], [], []>} : vector<8x128xbf16>, vector<8x128xbf16>, vector<8x8xf32> -> vector<8x8xf32>
    %138 = arith.addf %137, %28 : vector<8x8xf32>
    %cst_61 = arith.constant dense<0xFF800000> : vector<8xf32>
    %139 = vector.multi_reduction <maximumf>, %138, %cst_61 [1] : vector<8x8xf32> to vector<8xf32>
    %140 = vector.shape_cast %139 : vector<8xf32> to vector<8x1xf32>
    %141 = vector.broadcast %140 : vector<8x1xf32> to vector<8x8xf32>
    %142 = arith.subf %138, %141 : vector<8x8xf32>
    %143 = math.exp %142 : vector<8x8xf32>
    %cst_62 = arith.constant dense<0.000000e+00> : vector<8xf32>
    %144 = vector.multi_reduction <add>, %143, %cst_62 [1] : vector<8x8xf32> to vector<8xf32>
    %145 = vector.shape_cast %144 : vector<8xf32> to vector<8x1xf32>
    %146 = tpu.reciprocal %145 {approx = true} : vector<8x1xf32> -> vector<8x1xf32>
    %147 = vector.broadcast %146 : vector<8x1xf32> to vector<8x8xf32>
    %148 = arith.mulf %143, %147 : vector<8x8xf32>
    %149 = arith.truncf %148 : vector<8x8xf32> to vector<8x8xbf16>
    %cst_63 = arith.constant dense<0.000000e+00> : vector<8x128xf32>
    %150 = tpu.matmul %149, %136, %cst_63 {dimension_numbers = #tpu.dot_dimension_numbers<[1], [0], [0], [1], [0, 0, 1, 1], [], []>} : vector<8x8xbf16>, vector<8x128xbf16>, vector<8x128xf32> -> vector<8x128xf32>
    %151 = tpu.concatenate %130, %150 in 0 : vector<8x128xf32>, vector<8x128xf32> -> vector<16x128xf32>
    %152 = arith.truncf %151 : vector<16x128xf32> to vector<16x128xbf16>
    %c7_64 = arith.constant 7 : index
    %c0_65 = arith.constant 0 : index
    %c0_66 = arith.constant 0 : index
    %153 = vector.load %arg3[%c7_64, %c0_65, %c0_66] : memref<22x128x128xbf16, #tpu.memory_space<vmem>>, vector<1x128x128xbf16>
    %154 = vector.shape_cast %153 : vector<1x128x128xbf16> to vector<128x128xbf16>
    %cst_67 = arith.constant dense<0.000000e+00> : vector<16x128xf32>
    %155 = tpu.matmul %152, %154, %cst_67 {dimension_numbers = #tpu.dot_dimension_numbers<[1], [0], [0], [1], [0, 0, 1, 1], [], []>} : vector<16x128xbf16>, vector<128x128xbf16>, vector<16x128xf32> -> vector<16x128xf32>
    %156 = arith.addf %92, %155 : vector<16x128xf32>
    %c8 = arith.constant 8 : index
    %c0_68 = arith.constant 0 : index
    %157 = vector.load %arg4[%c8, %c0_68] : memref<30x128xf32, #tpu.memory_space<vmem>>, vector<1x128xf32>
    %158 = vector.broadcast %157 : vector<1x128xf32> to vector<16x128xf32>
    %159 = arith.addf %156, %158 : vector<16x128xf32>
    %160 = arith.addf %159, %24 : vector<16x128xf32>
    %cst_69 = arith.constant dense<0.000000e+00> : vector<16xf32>
    %161 = vector.multi_reduction <add>, %160, %cst_69 [1] : vector<16x128xf32> to vector<16xf32>
    %162 = vector.shape_cast %161 : vector<16xf32> to vector<16x1xf32>
    %cst_70 = arith.constant 1.562500e-02 : f32
    %163 = vector.broadcast %cst_70 : f32 to vector<16x1xf32>
    %164 = arith.mulf %162, %163 : vector<16x1xf32>
    %165 = arith.mulf %160, %160 : vector<16x128xf32>
    %cst_71 = arith.constant dense<0.000000e+00> : vector<16xf32>
    %166 = vector.multi_reduction <add>, %165, %cst_71 [1] : vector<16x128xf32> to vector<16xf32>
    %167 = vector.shape_cast %166 : vector<16xf32> to vector<16x1xf32>
    %cst_72 = arith.constant 1.562500e-02 : f32
    %168 = vector.broadcast %cst_72 : f32 to vector<16x1xf32>
    %169 = arith.mulf %167, %168 : vector<16x1xf32>
    %170 = arith.mulf %164, %164 : vector<16x1xf32>
    %171 = arith.subf %169, %170 : vector<16x1xf32>
    %172 = vector.broadcast %164 : vector<16x1xf32> to vector<16x128xf32>
    %173 = arith.subf %160, %172 : vector<16x128xf32>
    %cst_73 = arith.constant 9.99999974E-6 : f32
    %174 = vector.broadcast %cst_73 : f32 to vector<16x1xf32>
    %175 = arith.addf %171, %174 : vector<16x1xf32>
    %176 = math.rsqrt %175 : vector<16x1xf32>
    %177 = vector.broadcast %176 : vector<16x1xf32> to vector<16x128xf32>
    %178 = arith.mulf %173, %177 : vector<16x128xf32>
    %c9 = arith.constant 9 : index
    %c0_74 = arith.constant 0 : index
    %179 = vector.load %arg4[%c9, %c0_74] : memref<30x128xf32, #tpu.memory_space<vmem>>, vector<1x128xf32>
    %180 = vector.broadcast %179 : vector<1x128xf32> to vector<16x128xf32>
    %181 = arith.mulf %178, %180 : vector<16x128xf32>
    %c10 = arith.constant 10 : index
    %c0_75 = arith.constant 0 : index
    %182 = vector.load %arg4[%c10, %c0_75] : memref<30x128xf32, #tpu.memory_space<vmem>>, vector<1x128xf32>
    %183 = vector.broadcast %182 : vector<1x128xf32> to vector<16x128xf32>
    %184 = arith.addf %181, %183 : vector<16x128xf32>
    %185 = arith.truncf %184 : vector<16x128xf32> to vector<16x128xbf16>
    %c8_76 = arith.constant 8 : index
    %c0_77 = arith.constant 0 : index
    %c0_78 = arith.constant 0 : index
    %186 = vector.load %arg3[%c8_76, %c0_77, %c0_78] : memref<22x128x128xbf16, #tpu.memory_space<vmem>>, vector<1x128x128xbf16>
    %187 = vector.shape_cast %186 : vector<1x128x128xbf16> to vector<128x128xbf16>
    %cst_79 = arith.constant dense<0.000000e+00> : vector<16x128xf32>
    %188 = tpu.matmul %185, %187, %cst_79 {dimension_numbers = #tpu.dot_dimension_numbers<[1], [0], [0], [1], [0, 0, 1, 1], [], []>} : vector<16x128xbf16>, vector<128x128xbf16>, vector<16x128xf32> -> vector<16x128xf32>
    %c11 = arith.constant 11 : index
    %c0_80 = arith.constant 0 : index
    %189 = vector.load %arg4[%c11, %c0_80] : memref<30x128xf32, #tpu.memory_space<vmem>>, vector<1x128xf32>
    %190 = vector.broadcast %189 : vector<1x128xf32> to vector<16x128xf32>
    %191 = arith.addf %188, %190 : vector<16x128xf32>
    %cst_81 = arith.constant 5.000000e-01 : f32
    %192 = vector.broadcast %cst_81 : f32 to vector<16x128xf32>
    %193 = arith.mulf %192, %191 : vector<16x128xf32>
    %cst_82 = arith.constant 4.471500e-02 : f32
    %194 = vector.broadcast %cst_82 : f32 to vector<16x128xf32>
    %195 = arith.mulf %194, %191 : vector<16x128xf32>
    %196 = arith.mulf %195, %191 : vector<16x128xf32>
    %197 = arith.mulf %196, %191 : vector<16x128xf32>
    %198 = arith.addf %191, %197 : vector<16x128xf32>
    %cst_83 = arith.constant 0.797884583 : f32
    %199 = vector.broadcast %cst_83 : f32 to vector<16x128xf32>
    %200 = arith.mulf %199, %198 : vector<16x128xf32>
    %201 = math.tanh %200 : vector<16x128xf32>
    %cst_84 = arith.constant 1.000000e+00 : f32
    %202 = vector.broadcast %cst_84 : f32 to vector<16x128xf32>
    %203 = arith.addf %202, %201 : vector<16x128xf32>
    %204 = arith.mulf %193, %203 : vector<16x128xf32>
    %205 = arith.truncf %204 : vector<16x128xf32> to vector<16x128xbf16>
    %c9_85 = arith.constant 9 : index
    %c0_86 = arith.constant 0 : index
    %c0_87 = arith.constant 0 : index
    %206 = vector.load %arg3[%c9_85, %c0_86, %c0_87] : memref<22x128x128xbf16, #tpu.memory_space<vmem>>, vector<1x128x128xbf16>
    %207 = vector.shape_cast %206 : vector<1x128x128xbf16> to vector<128x128xbf16>
    %cst_88 = arith.constant dense<0.000000e+00> : vector<16x128xf32>
    %208 = tpu.matmul %205, %207, %cst_88 {dimension_numbers = #tpu.dot_dimension_numbers<[1], [0], [0], [1], [0, 0, 1, 1], [], []>} : vector<16x128xbf16>, vector<128x128xbf16>, vector<16x128xf32> -> vector<16x128xf32>
    %c12 = arith.constant 12 : index
    %c0_89 = arith.constant 0 : index
    %209 = vector.load %arg4[%c12, %c0_89] : memref<30x128xf32, #tpu.memory_space<vmem>>, vector<1x128xf32>
    %210 = vector.broadcast %209 : vector<1x128xf32> to vector<16x128xf32>
    %211 = arith.addf %208, %210 : vector<16x128xf32>
    %212 = arith.addf %211, %184 : vector<16x128xf32>
    %cst_90 = arith.constant dense<0.000000e+00> : vector<16xf32>
    %213 = vector.multi_reduction <add>, %212, %cst_90 [1] : vector<16x128xf32> to vector<16xf32>
    %214 = vector.shape_cast %213 : vector<16xf32> to vector<16x1xf32>
    %cst_91 = arith.constant 1.562500e-02 : f32
    %215 = vector.broadcast %cst_91 : f32 to vector<16x1xf32>
    %216 = arith.mulf %214, %215 : vector<16x1xf32>
    %217 = arith.mulf %212, %212 : vector<16x128xf32>
    %cst_92 = arith.constant dense<0.000000e+00> : vector<16xf32>
    %218 = vector.multi_reduction <add>, %217, %cst_92 [1] : vector<16x128xf32> to vector<16xf32>
    %219 = vector.shape_cast %218 : vector<16xf32> to vector<16x1xf32>
    %cst_93 = arith.constant 1.562500e-02 : f32
    %220 = vector.broadcast %cst_93 : f32 to vector<16x1xf32>
    %221 = arith.mulf %219, %220 : vector<16x1xf32>
    %222 = arith.mulf %216, %216 : vector<16x1xf32>
    %223 = arith.subf %221, %222 : vector<16x1xf32>
    %224 = vector.broadcast %216 : vector<16x1xf32> to vector<16x128xf32>
    %225 = arith.subf %212, %224 : vector<16x128xf32>
    %cst_94 = arith.constant 9.99999974E-6 : f32
    %226 = vector.broadcast %cst_94 : f32 to vector<16x1xf32>
    %227 = arith.addf %223, %226 : vector<16x1xf32>
    %228 = math.rsqrt %227 : vector<16x1xf32>
    %229 = vector.broadcast %228 : vector<16x1xf32> to vector<16x128xf32>
    %230 = arith.mulf %225, %229 : vector<16x128xf32>
    %c13 = arith.constant 13 : index
    %c0_95 = arith.constant 0 : index
    %231 = vector.load %arg4[%c13, %c0_95] : memref<30x128xf32, #tpu.memory_space<vmem>>, vector<1x128xf32>
    %232 = vector.broadcast %231 : vector<1x128xf32> to vector<16x128xf32>
    %233 = arith.mulf %230, %232 : vector<16x128xf32>
    %c14 = arith.constant 14 : index
    %c0_96 = arith.constant 0 : index
    %234 = vector.load %arg4[%c14, %c0_96] : memref<30x128xf32, #tpu.memory_space<vmem>>, vector<1x128xf32>
    %235 = vector.broadcast %234 : vector<1x128xf32> to vector<16x128xf32>
    %236 = arith.addf %233, %235 : vector<16x128xf32>
    %237 = arith.truncf %236 : vector<16x128xf32> to vector<16x128xbf16>
    %c10_97 = arith.constant 10 : index
    %c0_98 = arith.constant 0 : index
    %c0_99 = arith.constant 0 : index
    %238 = vector.load %arg3[%c10_97, %c0_98, %c0_99] : memref<22x128x128xbf16, #tpu.memory_space<vmem>>, vector<1x128x128xbf16>
    %239 = vector.shape_cast %238 : vector<1x128x128xbf16> to vector<128x128xbf16>
    %cst_100 = arith.constant dense<0.000000e+00> : vector<16x128xf32>
    %240 = tpu.matmul %237, %239, %cst_100 {dimension_numbers = #tpu.dot_dimension_numbers<[1], [0], [0], [1], [0, 0, 1, 1], [], []>} : vector<16x128xbf16>, vector<128x128xbf16>, vector<16x128xf32> -> vector<16x128xf32>
    %c15 = arith.constant 15 : index
    %c0_101 = arith.constant 0 : index
    %241 = vector.load %arg4[%c15, %c0_101] : memref<30x128xf32, #tpu.memory_space<vmem>>, vector<1x128xf32>
    %242 = vector.broadcast %241 : vector<1x128xf32> to vector<16x128xf32>
    %243 = arith.addf %240, %242 : vector<16x128xf32>
    %c12_102 = arith.constant 12 : index
    %c0_103 = arith.constant 0 : index
    %c0_104 = arith.constant 0 : index
    %244 = vector.load %arg3[%c12_102, %c0_103, %c0_104] : memref<22x128x128xbf16, #tpu.memory_space<vmem>>, vector<1x128x128xbf16>
    %245 = vector.shape_cast %244 : vector<1x128x128xbf16> to vector<128x128xbf16>
    %cst_105 = arith.constant dense<0.000000e+00> : vector<16x128xf32>
    %246 = tpu.matmul %237, %245, %cst_105 {dimension_numbers = #tpu.dot_dimension_numbers<[1], [0], [0], [1], [0, 0, 1, 1], [], []>} : vector<16x128xbf16>, vector<128x128xbf16>, vector<16x128xf32> -> vector<16x128xf32>
    %c17 = arith.constant 17 : index
    %c0_106 = arith.constant 0 : index
    %247 = vector.load %arg4[%c17, %c0_106] : memref<30x128xf32, #tpu.memory_space<vmem>>, vector<1x128xf32>
    %248 = vector.broadcast %247 : vector<1x128xf32> to vector<16x128xf32>
    %249 = arith.addf %246, %248 : vector<16x128xf32>
    %c14_107 = arith.constant 14 : index
    %c0_108 = arith.constant 0 : index
    %c0_109 = arith.constant 0 : index
    %250 = vector.load %arg3[%c14_107, %c0_108, %c0_109] : memref<22x128x128xbf16, #tpu.memory_space<vmem>>, vector<1x128x128xbf16>
    %251 = vector.shape_cast %250 : vector<1x128x128xbf16> to vector<128x128xbf16>
    %cst_110 = arith.constant dense<0.000000e+00> : vector<16x128xf32>
    %252 = tpu.matmul %237, %251, %cst_110 {dimension_numbers = #tpu.dot_dimension_numbers<[1], [0], [0], [1], [0, 0, 1, 1], [], []>} : vector<16x128xbf16>, vector<128x128xbf16>, vector<16x128xf32> -> vector<16x128xf32>
    %c19 = arith.constant 19 : index
    %c0_111 = arith.constant 0 : index
    %253 = vector.load %arg4[%c19, %c0_111] : memref<30x128xf32, #tpu.memory_space<vmem>>, vector<1x128xf32>
    %254 = vector.broadcast %253 : vector<1x128xf32> to vector<16x128xf32>
    %255 = arith.addf %252, %254 : vector<16x128xf32>
    %256 = vector.extract_strided_slice %243 {offsets = [0, 0], sizes = [8, 128], strides = [1, 1]} : vector<16x128xf32> to vector<8x128xf32>
    %257 = arith.truncf %256 : vector<8x128xf32> to vector<8x128xbf16>
    %258 = vector.extract_strided_slice %249 {offsets = [0, 0], sizes = [8, 128], strides = [1, 1]} : vector<16x128xf32> to vector<8x128xf32>
    %259 = arith.truncf %258 : vector<8x128xf32> to vector<8x128xbf16>
    %260 = vector.extract_strided_slice %255 {offsets = [0, 0], sizes = [8, 128], strides = [1, 1]} : vector<16x128xf32> to vector<8x128xf32>
    %261 = arith.truncf %260 : vector<8x128xf32> to vector<8x128xbf16>
    %cst_112 = arith.constant dense<0.000000e+00> : vector<8x8xf32>
    %262 = tpu.matmul %257, %259, %cst_112 {dimension_numbers = #tpu.dot_dimension_numbers<[1], [1], [0], [0], [0, 0, 1, 0], [], []>} : vector<8x128xbf16>, vector<8x128xbf16>, vector<8x8xf32> -> vector<8x8xf32>
    %263 = arith.addf %262, %26 : vector<8x8xf32>
    %cst_113 = arith.constant dense<0xFF800000> : vector<8xf32>
    %264 = vector.multi_reduction <maximumf>, %263, %cst_113 [1] : vector<8x8xf32> to vector<8xf32>
    %265 = vector.shape_cast %264 : vector<8xf32> to vector<8x1xf32>
    %266 = vector.broadcast %265 : vector<8x1xf32> to vector<8x8xf32>
    %267 = arith.subf %263, %266 : vector<8x8xf32>
    %268 = math.exp %267 : vector<8x8xf32>
    %cst_114 = arith.constant dense<0.000000e+00> : vector<8xf32>
    %269 = vector.multi_reduction <add>, %268, %cst_114 [1] : vector<8x8xf32> to vector<8xf32>
    %270 = vector.shape_cast %269 : vector<8xf32> to vector<8x1xf32>
    %271 = tpu.reciprocal %270 {approx = true} : vector<8x1xf32> -> vector<8x1xf32>
    %272 = vector.broadcast %271 : vector<8x1xf32> to vector<8x8xf32>
    %273 = arith.mulf %268, %272 : vector<8x8xf32>
    %274 = arith.truncf %273 : vector<8x8xf32> to vector<8x8xbf16>
    %cst_115 = arith.constant dense<0.000000e+00> : vector<8x128xf32>
    %275 = tpu.matmul %274, %261, %cst_115 {dimension_numbers = #tpu.dot_dimension_numbers<[1], [0], [0], [1], [0, 0, 1, 1], [], []>} : vector<8x8xbf16>, vector<8x128xbf16>, vector<8x128xf32> -> vector<8x128xf32>
    %276 = vector.extract_strided_slice %243 {offsets = [8, 0], sizes = [8, 128], strides = [1, 1]} : vector<16x128xf32> to vector<8x128xf32>
    %277 = arith.truncf %276 : vector<8x128xf32> to vector<8x128xbf16>
    %278 = vector.extract_strided_slice %249 {offsets = [8, 0], sizes = [8, 128], strides = [1, 1]} : vector<16x128xf32> to vector<8x128xf32>
    %279 = arith.truncf %278 : vector<8x128xf32> to vector<8x128xbf16>
    %280 = vector.extract_strided_slice %255 {offsets = [8, 0], sizes = [8, 128], strides = [1, 1]} : vector<16x128xf32> to vector<8x128xf32>
    %281 = arith.truncf %280 : vector<8x128xf32> to vector<8x128xbf16>
    %cst_116 = arith.constant dense<0.000000e+00> : vector<8x8xf32>
    %282 = tpu.matmul %277, %279, %cst_116 {dimension_numbers = #tpu.dot_dimension_numbers<[1], [1], [0], [0], [0, 0, 1, 0], [], []>} : vector<8x128xbf16>, vector<8x128xbf16>, vector<8x8xf32> -> vector<8x8xf32>
    %283 = arith.addf %282, %28 : vector<8x8xf32>
    %cst_117 = arith.constant dense<0xFF800000> : vector<8xf32>
    %284 = vector.multi_reduction <maximumf>, %283, %cst_117 [1] : vector<8x8xf32> to vector<8xf32>
    %285 = vector.shape_cast %284 : vector<8xf32> to vector<8x1xf32>
    %286 = vector.broadcast %285 : vector<8x1xf32> to vector<8x8xf32>
    %287 = arith.subf %283, %286 : vector<8x8xf32>
    %288 = math.exp %287 : vector<8x8xf32>
    %cst_118 = arith.constant dense<0.000000e+00> : vector<8xf32>
    %289 = vector.multi_reduction <add>, %288, %cst_118 [1] : vector<8x8xf32> to vector<8xf32>
    %290 = vector.shape_cast %289 : vector<8xf32> to vector<8x1xf32>
    %291 = tpu.reciprocal %290 {approx = true} : vector<8x1xf32> -> vector<8x1xf32>
    %292 = vector.broadcast %291 : vector<8x1xf32> to vector<8x8xf32>
    %293 = arith.mulf %288, %292 : vector<8x8xf32>
    %294 = arith.truncf %293 : vector<8x8xf32> to vector<8x8xbf16>
    %cst_119 = arith.constant dense<0.000000e+00> : vector<8x128xf32>
    %295 = tpu.matmul %294, %281, %cst_119 {dimension_numbers = #tpu.dot_dimension_numbers<[1], [0], [0], [1], [0, 0, 1, 1], [], []>} : vector<8x8xbf16>, vector<8x128xbf16>, vector<8x128xf32> -> vector<8x128xf32>
    %296 = tpu.concatenate %275, %295 in 0 : vector<8x128xf32>, vector<8x128xf32> -> vector<16x128xf32>
    %297 = arith.truncf %296 : vector<16x128xf32> to vector<16x128xbf16>
    %c16 = arith.constant 16 : index
    %c0_120 = arith.constant 0 : index
    %c0_121 = arith.constant 0 : index
    %298 = vector.load %arg3[%c16, %c0_120, %c0_121] : memref<22x128x128xbf16, #tpu.memory_space<vmem>>, vector<1x128x128xbf16>
    %299 = vector.shape_cast %298 : vector<1x128x128xbf16> to vector<128x128xbf16>
    %cst_122 = arith.constant dense<0.000000e+00> : vector<16x128xf32>
    %300 = tpu.matmul %297, %299, %cst_122 {dimension_numbers = #tpu.dot_dimension_numbers<[1], [0], [0], [1], [0, 0, 1, 1], [], []>} : vector<16x128xbf16>, vector<128x128xbf16>, vector<16x128xf32> -> vector<16x128xf32>
    %c11_123 = arith.constant 11 : index
    %c0_124 = arith.constant 0 : index
    %c0_125 = arith.constant 0 : index
    %301 = vector.load %arg3[%c11_123, %c0_124, %c0_125] : memref<22x128x128xbf16, #tpu.memory_space<vmem>>, vector<1x128x128xbf16>
    %302 = vector.shape_cast %301 : vector<1x128x128xbf16> to vector<128x128xbf16>
    %cst_126 = arith.constant dense<0.000000e+00> : vector<16x128xf32>
    %303 = tpu.matmul %237, %302, %cst_126 {dimension_numbers = #tpu.dot_dimension_numbers<[1], [0], [0], [1], [0, 0, 1, 1], [], []>} : vector<16x128xbf16>, vector<128x128xbf16>, vector<16x128xf32> -> vector<16x128xf32>
    %c16_127 = arith.constant 16 : index
    %c0_128 = arith.constant 0 : index
    %304 = vector.load %arg4[%c16_127, %c0_128] : memref<30x128xf32, #tpu.memory_space<vmem>>, vector<1x128xf32>
    %305 = vector.broadcast %304 : vector<1x128xf32> to vector<16x128xf32>
    %306 = arith.addf %303, %305 : vector<16x128xf32>
    %c13_129 = arith.constant 13 : index
    %c0_130 = arith.constant 0 : index
    %c0_131 = arith.constant 0 : index
    %307 = vector.load %arg3[%c13_129, %c0_130, %c0_131] : memref<22x128x128xbf16, #tpu.memory_space<vmem>>, vector<1x128x128xbf16>
    %308 = vector.shape_cast %307 : vector<1x128x128xbf16> to vector<128x128xbf16>
    %cst_132 = arith.constant dense<0.000000e+00> : vector<16x128xf32>
    %309 = tpu.matmul %237, %308, %cst_132 {dimension_numbers = #tpu.dot_dimension_numbers<[1], [0], [0], [1], [0, 0, 1, 1], [], []>} : vector<16x128xbf16>, vector<128x128xbf16>, vector<16x128xf32> -> vector<16x128xf32>
    %c18 = arith.constant 18 : index
    %c0_133 = arith.constant 0 : index
    %310 = vector.load %arg4[%c18, %c0_133] : memref<30x128xf32, #tpu.memory_space<vmem>>, vector<1x128xf32>
    %311 = vector.broadcast %310 : vector<1x128xf32> to vector<16x128xf32>
    %312 = arith.addf %309, %311 : vector<16x128xf32>
    %c15_134 = arith.constant 15 : index
    %c0_135 = arith.constant 0 : index
    %c0_136 = arith.constant 0 : index
    %313 = vector.load %arg3[%c15_134, %c0_135, %c0_136] : memref<22x128x128xbf16, #tpu.memory_space<vmem>>, vector<1x128x128xbf16>
    %314 = vector.shape_cast %313 : vector<1x128x128xbf16> to vector<128x128xbf16>
    %cst_137 = arith.constant dense<0.000000e+00> : vector<16x128xf32>
    %315 = tpu.matmul %237, %314, %cst_137 {dimension_numbers = #tpu.dot_dimension_numbers<[1], [0], [0], [1], [0, 0, 1, 1], [], []>} : vector<16x128xbf16>, vector<128x128xbf16>, vector<16x128xf32> -> vector<16x128xf32>
    %c20 = arith.constant 20 : index
    %c0_138 = arith.constant 0 : index
    %316 = vector.load %arg4[%c20, %c0_138] : memref<30x128xf32, #tpu.memory_space<vmem>>, vector<1x128xf32>
    %317 = vector.broadcast %316 : vector<1x128xf32> to vector<16x128xf32>
    %318 = arith.addf %315, %317 : vector<16x128xf32>
    %319 = vector.extract_strided_slice %306 {offsets = [0, 0], sizes = [8, 128], strides = [1, 1]} : vector<16x128xf32> to vector<8x128xf32>
    %320 = arith.truncf %319 : vector<8x128xf32> to vector<8x128xbf16>
    %321 = vector.extract_strided_slice %312 {offsets = [0, 0], sizes = [8, 128], strides = [1, 1]} : vector<16x128xf32> to vector<8x128xf32>
    %322 = arith.truncf %321 : vector<8x128xf32> to vector<8x128xbf16>
    %323 = vector.extract_strided_slice %318 {offsets = [0, 0], sizes = [8, 128], strides = [1, 1]} : vector<16x128xf32> to vector<8x128xf32>
    %324 = arith.truncf %323 : vector<8x128xf32> to vector<8x128xbf16>
    %cst_139 = arith.constant dense<0.000000e+00> : vector<8x8xf32>
    %325 = tpu.matmul %320, %322, %cst_139 {dimension_numbers = #tpu.dot_dimension_numbers<[1], [1], [0], [0], [0, 0, 1, 0], [], []>} : vector<8x128xbf16>, vector<8x128xbf16>, vector<8x8xf32> -> vector<8x8xf32>
    %326 = arith.addf %325, %26 : vector<8x8xf32>
    %cst_140 = arith.constant dense<0xFF800000> : vector<8xf32>
    %327 = vector.multi_reduction <maximumf>, %326, %cst_140 [1] : vector<8x8xf32> to vector<8xf32>
    %328 = vector.shape_cast %327 : vector<8xf32> to vector<8x1xf32>
    %329 = vector.broadcast %328 : vector<8x1xf32> to vector<8x8xf32>
    %330 = arith.subf %326, %329 : vector<8x8xf32>
    %331 = math.exp %330 : vector<8x8xf32>
    %cst_141 = arith.constant dense<0.000000e+00> : vector<8xf32>
    %332 = vector.multi_reduction <add>, %331, %cst_141 [1] : vector<8x8xf32> to vector<8xf32>
    %333 = vector.shape_cast %332 : vector<8xf32> to vector<8x1xf32>
    %334 = tpu.reciprocal %333 {approx = true} : vector<8x1xf32> -> vector<8x1xf32>
    %335 = vector.broadcast %334 : vector<8x1xf32> to vector<8x8xf32>
    %336 = arith.mulf %331, %335 : vector<8x8xf32>
    %337 = arith.truncf %336 : vector<8x8xf32> to vector<8x8xbf16>
    %cst_142 = arith.constant dense<0.000000e+00> : vector<8x128xf32>
    %338 = tpu.matmul %337, %324, %cst_142 {dimension_numbers = #tpu.dot_dimension_numbers<[1], [0], [0], [1], [0, 0, 1, 1], [], []>} : vector<8x8xbf16>, vector<8x128xbf16>, vector<8x128xf32> -> vector<8x128xf32>
    %339 = vector.extract_strided_slice %306 {offsets = [8, 0], sizes = [8, 128], strides = [1, 1]} : vector<16x128xf32> to vector<8x128xf32>
    %340 = arith.truncf %339 : vector<8x128xf32> to vector<8x128xbf16>
    %341 = vector.extract_strided_slice %312 {offsets = [8, 0], sizes = [8, 128], strides = [1, 1]} : vector<16x128xf32> to vector<8x128xf32>
    %342 = arith.truncf %341 : vector<8x128xf32> to vector<8x128xbf16>
    %343 = vector.extract_strided_slice %318 {offsets = [8, 0], sizes = [8, 128], strides = [1, 1]} : vector<16x128xf32> to vector<8x128xf32>
    %344 = arith.truncf %343 : vector<8x128xf32> to vector<8x128xbf16>
    %cst_143 = arith.constant dense<0.000000e+00> : vector<8x8xf32>
    %345 = tpu.matmul %340, %342, %cst_143 {dimension_numbers = #tpu.dot_dimension_numbers<[1], [1], [0], [0], [0, 0, 1, 0], [], []>} : vector<8x128xbf16>, vector<8x128xbf16>, vector<8x8xf32> -> vector<8x8xf32>
    %346 = arith.addf %345, %28 : vector<8x8xf32>
    %cst_144 = arith.constant dense<0xFF800000> : vector<8xf32>
    %347 = vector.multi_reduction <maximumf>, %346, %cst_144 [1] : vector<8x8xf32> to vector<8xf32>
    %348 = vector.shape_cast %347 : vector<8xf32> to vector<8x1xf32>
    %349 = vector.broadcast %348 : vector<8x1xf32> to vector<8x8xf32>
    %350 = arith.subf %346, %349 : vector<8x8xf32>
    %351 = math.exp %350 : vector<8x8xf32>
    %cst_145 = arith.constant dense<0.000000e+00> : vector<8xf32>
    %352 = vector.multi_reduction <add>, %351, %cst_145 [1] : vector<8x8xf32> to vector<8xf32>
    %353 = vector.shape_cast %352 : vector<8xf32> to vector<8x1xf32>
    %354 = tpu.reciprocal %353 {approx = true} : vector<8x1xf32> -> vector<8x1xf32>
    %355 = vector.broadcast %354 : vector<8x1xf32> to vector<8x8xf32>
    %356 = arith.mulf %351, %355 : vector<8x8xf32>
    %357 = arith.truncf %356 : vector<8x8xf32> to vector<8x8xbf16>
    %cst_146 = arith.constant dense<0.000000e+00> : vector<8x128xf32>
    %358 = tpu.matmul %357, %344, %cst_146 {dimension_numbers = #tpu.dot_dimension_numbers<[1], [0], [0], [1], [0, 0, 1, 1], [], []>} : vector<8x8xbf16>, vector<8x128xbf16>, vector<8x128xf32> -> vector<8x128xf32>
    %359 = tpu.concatenate %338, %358 in 0 : vector<8x128xf32>, vector<8x128xf32> -> vector<16x128xf32>
    %360 = arith.truncf %359 : vector<16x128xf32> to vector<16x128xbf16>
    %c17_147 = arith.constant 17 : index
    %c0_148 = arith.constant 0 : index
    %c0_149 = arith.constant 0 : index
    %361 = vector.load %arg3[%c17_147, %c0_148, %c0_149] : memref<22x128x128xbf16, #tpu.memory_space<vmem>>, vector<1x128x128xbf16>
    %362 = vector.shape_cast %361 : vector<1x128x128xbf16> to vector<128x128xbf16>
    %cst_150 = arith.constant dense<0.000000e+00> : vector<16x128xf32>
    %363 = tpu.matmul %360, %362, %cst_150 {dimension_numbers = #tpu.dot_dimension_numbers<[1], [0], [0], [1], [0, 0, 1, 1], [], []>} : vector<16x128xbf16>, vector<128x128xbf16>, vector<16x128xf32> -> vector<16x128xf32>
    %364 = arith.addf %300, %363 : vector<16x128xf32>
    %c21 = arith.constant 21 : index
    %c0_151 = arith.constant 0 : index
    %365 = vector.load %arg4[%c21, %c0_151] : memref<30x128xf32, #tpu.memory_space<vmem>>, vector<1x128xf32>
    %366 = vector.broadcast %365 : vector<1x128xf32> to vector<16x128xf32>
    %367 = arith.addf %364, %366 : vector<16x128xf32>
    %368 = arith.addf %367, %236 : vector<16x128xf32>
    %cst_152 = arith.constant dense<0.000000e+00> : vector<16xf32>
    %369 = vector.multi_reduction <add>, %368, %cst_152 [1] : vector<16x128xf32> to vector<16xf32>
    %370 = vector.shape_cast %369 : vector<16xf32> to vector<16x1xf32>
    %cst_153 = arith.constant 1.562500e-02 : f32
    %371 = vector.broadcast %cst_153 : f32 to vector<16x1xf32>
    %372 = arith.mulf %370, %371 : vector<16x1xf32>
    %373 = arith.mulf %368, %368 : vector<16x128xf32>
    %cst_154 = arith.constant dense<0.000000e+00> : vector<16xf32>
    %374 = vector.multi_reduction <add>, %373, %cst_154 [1] : vector<16x128xf32> to vector<16xf32>
    %375 = vector.shape_cast %374 : vector<16xf32> to vector<16x1xf32>
    %cst_155 = arith.constant 1.562500e-02 : f32
    %376 = vector.broadcast %cst_155 : f32 to vector<16x1xf32>
    %377 = arith.mulf %375, %376 : vector<16x1xf32>
    %378 = arith.mulf %372, %372 : vector<16x1xf32>
    %379 = arith.subf %377, %378 : vector<16x1xf32>
    %380 = vector.broadcast %372 : vector<16x1xf32> to vector<16x128xf32>
    %381 = arith.subf %368, %380 : vector<16x128xf32>
    %cst_156 = arith.constant 9.99999974E-6 : f32
    %382 = vector.broadcast %cst_156 : f32 to vector<16x1xf32>
    %383 = arith.addf %379, %382 : vector<16x1xf32>
    %384 = math.rsqrt %383 : vector<16x1xf32>
    %385 = vector.broadcast %384 : vector<16x1xf32> to vector<16x128xf32>
    %386 = arith.mulf %381, %385 : vector<16x128xf32>
    %c22 = arith.constant 22 : index
    %c0_157 = arith.constant 0 : index
    %387 = vector.load %arg4[%c22, %c0_157] : memref<30x128xf32, #tpu.memory_space<vmem>>, vector<1x128xf32>
    %388 = vector.broadcast %387 : vector<1x128xf32> to vector<16x128xf32>
    %389 = arith.mulf %386, %388 : vector<16x128xf32>
    %c23 = arith.constant 23 : index
    %c0_158 = arith.constant 0 : index
    %390 = vector.load %arg4[%c23, %c0_158] : memref<30x128xf32, #tpu.memory_space<vmem>>, vector<1x128xf32>
    %391 = vector.broadcast %390 : vector<1x128xf32> to vector<16x128xf32>
    %392 = arith.addf %389, %391 : vector<16x128xf32>
    %393 = arith.truncf %392 : vector<16x128xf32> to vector<16x128xbf16>
    %c18_159 = arith.constant 18 : index
    %c0_160 = arith.constant 0 : index
    %c0_161 = arith.constant 0 : index
    %394 = vector.load %arg3[%c18_159, %c0_160, %c0_161] : memref<22x128x128xbf16, #tpu.memory_space<vmem>>, vector<1x128x128xbf16>
    %395 = vector.shape_cast %394 : vector<1x128x128xbf16> to vector<128x128xbf16>
    %cst_162 = arith.constant dense<0.000000e+00> : vector<16x128xf32>
    %396 = tpu.matmul %393, %395, %cst_162 {dimension_numbers = #tpu.dot_dimension_numbers<[1], [0], [0], [1], [0, 0, 1, 1], [], []>} : vector<16x128xbf16>, vector<128x128xbf16>, vector<16x128xf32> -> vector<16x128xf32>
    %c24 = arith.constant 24 : index
    %c0_163 = arith.constant 0 : index
    %397 = vector.load %arg4[%c24, %c0_163] : memref<30x128xf32, #tpu.memory_space<vmem>>, vector<1x128xf32>
    %398 = vector.broadcast %397 : vector<1x128xf32> to vector<16x128xf32>
    %399 = arith.addf %396, %398 : vector<16x128xf32>
    %cst_164 = arith.constant 5.000000e-01 : f32
    %400 = vector.broadcast %cst_164 : f32 to vector<16x128xf32>
    %401 = arith.mulf %400, %399 : vector<16x128xf32>
    %cst_165 = arith.constant 4.471500e-02 : f32
    %402 = vector.broadcast %cst_165 : f32 to vector<16x128xf32>
    %403 = arith.mulf %402, %399 : vector<16x128xf32>
    %404 = arith.mulf %403, %399 : vector<16x128xf32>
    %405 = arith.mulf %404, %399 : vector<16x128xf32>
    %406 = arith.addf %399, %405 : vector<16x128xf32>
    %cst_166 = arith.constant 0.797884583 : f32
    %407 = vector.broadcast %cst_166 : f32 to vector<16x128xf32>
    %408 = arith.mulf %407, %406 : vector<16x128xf32>
    %409 = math.tanh %408 : vector<16x128xf32>
    %cst_167 = arith.constant 1.000000e+00 : f32
    %410 = vector.broadcast %cst_167 : f32 to vector<16x128xf32>
    %411 = arith.addf %410, %409 : vector<16x128xf32>
    %412 = arith.mulf %401, %411 : vector<16x128xf32>
    %413 = arith.truncf %412 : vector<16x128xf32> to vector<16x128xbf16>
    %c19_168 = arith.constant 19 : index
    %c0_169 = arith.constant 0 : index
    %c0_170 = arith.constant 0 : index
    %414 = vector.load %arg3[%c19_168, %c0_169, %c0_170] : memref<22x128x128xbf16, #tpu.memory_space<vmem>>, vector<1x128x128xbf16>
    %415 = vector.shape_cast %414 : vector<1x128x128xbf16> to vector<128x128xbf16>
    %cst_171 = arith.constant dense<0.000000e+00> : vector<16x128xf32>
    %416 = tpu.matmul %413, %415, %cst_171 {dimension_numbers = #tpu.dot_dimension_numbers<[1], [0], [0], [1], [0, 0, 1, 1], [], []>} : vector<16x128xbf16>, vector<128x128xbf16>, vector<16x128xf32> -> vector<16x128xf32>
    %c25 = arith.constant 25 : index
    %c0_172 = arith.constant 0 : index
    %417 = vector.load %arg4[%c25, %c0_172] : memref<30x128xf32, #tpu.memory_space<vmem>>, vector<1x128xf32>
    %418 = vector.broadcast %417 : vector<1x128xf32> to vector<16x128xf32>
    %419 = arith.addf %416, %418 : vector<16x128xf32>
    %420 = arith.addf %419, %392 : vector<16x128xf32>
    %cst_173 = arith.constant dense<0.000000e+00> : vector<16xf32>
    %421 = vector.multi_reduction <add>, %420, %cst_173 [1] : vector<16x128xf32> to vector<16xf32>
    %422 = vector.shape_cast %421 : vector<16xf32> to vector<16x1xf32>
    %cst_174 = arith.constant 1.562500e-02 : f32
    %423 = vector.broadcast %cst_174 : f32 to vector<16x1xf32>
    %424 = arith.mulf %422, %423 : vector<16x1xf32>
    %425 = arith.mulf %420, %420 : vector<16x128xf32>
    %cst_175 = arith.constant dense<0.000000e+00> : vector<16xf32>
    %426 = vector.multi_reduction <add>, %425, %cst_175 [1] : vector<16x128xf32> to vector<16xf32>
    %427 = vector.shape_cast %426 : vector<16xf32> to vector<16x1xf32>
    %cst_176 = arith.constant 1.562500e-02 : f32
    %428 = vector.broadcast %cst_176 : f32 to vector<16x1xf32>
    %429 = arith.mulf %427, %428 : vector<16x1xf32>
    %430 = arith.mulf %424, %424 : vector<16x1xf32>
    %431 = arith.subf %429, %430 : vector<16x1xf32>
    %432 = vector.broadcast %424 : vector<16x1xf32> to vector<16x128xf32>
    %433 = arith.subf %420, %432 : vector<16x128xf32>
    %cst_177 = arith.constant 9.99999974E-6 : f32
    %434 = vector.broadcast %cst_177 : f32 to vector<16x1xf32>
    %435 = arith.addf %431, %434 : vector<16x1xf32>
    %436 = math.rsqrt %435 : vector<16x1xf32>
    %437 = vector.broadcast %436 : vector<16x1xf32> to vector<16x128xf32>
    %438 = arith.mulf %433, %437 : vector<16x128xf32>
    %c26 = arith.constant 26 : index
    %c0_178 = arith.constant 0 : index
    %439 = vector.load %arg4[%c26, %c0_178] : memref<30x128xf32, #tpu.memory_space<vmem>>, vector<1x128xf32>
    %440 = vector.broadcast %439 : vector<1x128xf32> to vector<16x128xf32>
    %441 = arith.mulf %438, %440 : vector<16x128xf32>
    %c27 = arith.constant 27 : index
    %c0_179 = arith.constant 0 : index
    %442 = vector.load %arg4[%c27, %c0_179] : memref<30x128xf32, #tpu.memory_space<vmem>>, vector<1x128xf32>
    %443 = vector.broadcast %442 : vector<1x128xf32> to vector<16x128xf32>
    %444 = arith.addf %441, %443 : vector<16x128xf32>
    %445 = vector.extract_strided_slice %444 {offsets = [0, 0], sizes = [1, 128], strides = [1, 1]} : vector<16x128xf32> to vector<1x128xf32>
    %446 = vector.extract_strided_slice %444 {offsets = [8, 0], sizes = [1, 128], strides = [1, 1]} : vector<16x128xf32> to vector<1x128xf32>
    %447 = tpu.concatenate %445, %446 in 0 : vector<1x128xf32>, vector<1x128xf32> -> vector<2x128xf32>
    %448 = arith.truncf %447 : vector<2x128xf32> to vector<2x128xbf16>
    %c20_180 = arith.constant 20 : index
    %c0_181 = arith.constant 0 : index
    %c0_182 = arith.constant 0 : index
    %449 = vector.load %arg3[%c20_180, %c0_181, %c0_182] : memref<22x128x128xbf16, #tpu.memory_space<vmem>>, vector<1x128x128xbf16>
    %450 = vector.shape_cast %449 : vector<1x128x128xbf16> to vector<128x128xbf16>
    %cst_183 = arith.constant dense<0.000000e+00> : vector<2x128xf32>
    %451 = tpu.matmul %448, %450, %cst_183 {dimension_numbers = #tpu.dot_dimension_numbers<[1], [0], [0], [1], [0, 0, 1, 1], [], []>} : vector<2x128xbf16>, vector<128x128xbf16>, vector<2x128xf32> -> vector<2x128xf32>
    %c28 = arith.constant 28 : index
    %c0_184 = arith.constant 0 : index
    %452 = vector.load %arg4[%c28, %c0_184] : memref<30x128xf32, #tpu.memory_space<vmem>>, vector<1x128xf32>
    %453 = vector.broadcast %452 : vector<1x128xf32> to vector<2x128xf32>
    %454 = arith.addf %451, %453 : vector<2x128xf32>
    %cst_185 = arith.constant 0.000000e+00 : f32
    %455 = vector.broadcast %cst_185 : f32 to vector<2x128xf32>
    %456 = arith.maximumf %454, %455 : vector<2x128xf32>
    %457 = arith.truncf %456 : vector<2x128xf32> to vector<2x128xbf16>
    %c21_186 = arith.constant 21 : index
    %c0_187 = arith.constant 0 : index
    %c0_188 = arith.constant 0 : index
    %458 = vector.load %arg3[%c21_186, %c0_187, %c0_188] : memref<22x128x128xbf16, #tpu.memory_space<vmem>>, vector<1x128x128xbf16>
    %459 = vector.shape_cast %458 : vector<1x128x128xbf16> to vector<128x128xbf16>
    %cst_189 = arith.constant dense<0.000000e+00> : vector<2x128xf32>
    %460 = tpu.matmul %457, %459, %cst_189 {dimension_numbers = #tpu.dot_dimension_numbers<[1], [0], [0], [1], [0, 0, 1, 1], [], []>} : vector<2x128xbf16>, vector<128x128xbf16>, vector<2x128xf32> -> vector<2x128xf32>
    %c29 = arith.constant 29 : index
    %c0_190 = arith.constant 0 : index
    %461 = vector.load %arg4[%c29, %c0_190] : memref<30x128xf32, #tpu.memory_space<vmem>>, vector<1x128xf32>
    %462 = vector.broadcast %461 : vector<1x128xf32> to vector<2x128xf32>
    %463 = arith.addf %460, %462 : vector<2x128xf32>
    %c0_191 = arith.constant 0 : index
    %c0_192 = arith.constant 0 : index
    %464 = vector.load %arg5[%c0_191, %c0_192] : memref<2x128xf32, #tpu.memory_space<vmem>>, vector<2x128xf32>
    tpu.vector_store %arg5[%c0_191, %c0_192], %463 {strides = array<i32>} : memref<2x128xf32, #tpu.memory_space<vmem>>, vector<2x128xf32>,
    return
  }
  func.func @transform_0(%arg0: i32) -> (i32, i32) {
    %c0_i32 = arith.constant 0 : i32
    %c0_i32_0 = arith.constant 0 : i32
    %c0_i32_1 = arith.constant 0 : i32
    return %c0_i32, %c0_i32_0 : i32, i32
  }
  func.func @transform_1(%arg0: i32) -> (i32, i32, i32) {
    %c0_i32 = arith.constant 0 : i32
    %c0_i32_0 = arith.constant 0 : i32
    %c0_i32_1 = arith.constant 0 : i32
    %c0_i32_2 = arith.constant 0 : i32
    return %c0_i32, %c0_i32_0, %c0_i32_1 : i32, i32, i32
  }
  func.func @transform_2(%arg0: i32) -> (i32, i32, i32) {
    %c0_i32 = arith.constant 0 : i32
    %c0_i32_0 = arith.constant 0 : i32
    %c0_i32_1 = arith.constant 0 : i32
    %c0_i32_2 = arith.constant 0 : i32
    return %c0_i32, %c0_i32_0, %c0_i32_1 : i32, i32, i32
  }
  func.func @transform_3(%arg0: i32) -> (i32, i32) {
    %c0_i32 = arith.constant 0 : i32
    %c0_i32_0 = arith.constant 0 : i32
    %c0_i32_1 = arith.constant 0 : i32
    return %c0_i32, %c0_i32_0 : i32, i32
  }
  func.func @transform_4(%arg0: i32) -> (i32, i32) {
    %c0_i32 = arith.constant 0 : i32
    %c0_i32_0 = arith.constant 0 : i32
    %c0_i32_1 = arith.constant 0 : i32
    return %c0_i32, %c0_i32_0 : i32, i32
  }
}

</mosaic_0001>

<llo_original>
// kernel: tpu_custom_call.1
$region0: #{tpu_custom_call.1}
  #allocation0 [shape = 'u32[]', space=smem, size = 0x4, offset = 0x4, fixed_abs, tag = 'smem constant byte address 0x4 - core index']
  #allocation1 [shape = 'u32[72,128]{1,0:T(1,128)}', space=vmem, size = 0x9000, scoped, tag = 'internal scratch']
  %s0 = inlined_call_operand.hbm [shape: f32[16,128], index: 0, kind: input, shape index: {}]
  %s1 = inlined_call_operand.hbm [shape: f32[2,8,8], index: 1, kind: input, shape index: {}]
  %s2 = inlined_call_operand.hbm [shape: bf16[22,128,128], index: 2, kind: input, shape index: {}]
  %s3 = inlined_call_operand.hbm [shape: f32[30,128], index: 3, kind: input, shape index: {}]
  %s4 = inlined_call_operand.hbm [shape: f32[2,128], index: 4, kind: output, shape index: {}]
  %s5 = sld [smem:[#allocation0]]
  $region42: #{tpu_custom_call.1} parent=0
    _
  %s7 = ssub.s32 1, %s5
  %s8 = scalar_select 0, %s7, %s5
  $region1: #{tpu_custom_call.1} parent=0
    #allocation2 [shape = 'u8[8192]{0}', space=vmem, size = 0x2000, scoped, tag = 'input window, operand 0, single buffered']
    #allocation3 [shape = 's32[1]{0}', space=sflag, size = 0x4, scoped, tag = 'scoped memory for tpu_custom_call.1']
    #allocation4 [shape = 's32[1]{0}', space=sflag, size = 0x4, scoped, tag = 'scoped memory for tpu_custom_call.1']
    #allocation5 [shape = 'u8[8192]{0}', space=vmem, size = 0x2000, scoped, tag = 'input window, operand 1, single buffered']
    #allocation6 [shape = 's32[1]{0}', space=sflag, size = 0x4, scoped, tag = 'scoped memory for tpu_custom_call.1']
    #allocation7 [shape = 'u8[720896]{0}', space=vmem, size = 0xb0000, scoped, tag = 'input window, operand 2, single buffered']
    #allocation8 [shape = 'u8[16384]{0}', space=vmem, size = 0x4000, scoped, tag = 'input window, operand 3, single buffered']
    #allocation9 [shape = 's32[1]{0}', space=sflag, size = 0x4, scoped, tag = 'scoped memory for tpu_custom_call.1']
    #allocation10 [shape = 'u8[1024]{0}', space=vmem, size = 0x400, scoped, tag = 'output window, operand 0, single buffered']
    %9 = vsyncpa [#allocation3], 0
    %10 = vsyncpa [#allocation6], 0
    %11 = vsyncpa [#allocation9], 0
    %12 = vsyncpa [#allocation4], 0
    // Predicated region
    $region2: #{tpu_custom_call.1} parent=1 // pred_check
      _
    $region3: #{tpu_custom_call.1} parent=1 // pred_check_branch
      %14 = sbr.rel (0) target = $region5
    $region4: #{tpu_custom_call.1} parent=1 // pred_region
      %16 = vsyncadd [#allocation3], 0
      %s17 = sshll.u32 %s0, 4
      %s18 = int_to_ptr.hbm [resolvable:$true] %s17
      %s19 = sshll.u32 [#allocation2], 4
      %s20 = int_to_ptr.vmem [resolvable:$true] %s19
      %25 = dma.hbm_to_vmem [thread:$0]  %s18, 256, %s20, [#allocation3], 128, 128, 8
    $region5: #{tpu_custom_call.1} parent=1 // pred_fallthru
      _
    // Predicated region
    $region6: #{tpu_custom_call.1} parent=1 // pred_check
      _
    $region7: #{tpu_custom_call.1} parent=1 // pred_check_branch
      %27 = sbr.rel (0) target = $region9
    $region8: #{tpu_custom_call.1} parent=1 // pred_region
      %29 = vsyncadd [#allocation6], 0
      %s30 = sshll.u32 %s1, 4
      %s31 = int_to_ptr.hbm [resolvable:$true] %s30
      %s32 = sshll.u32 [#allocation5], 4
      %s33 = int_to_ptr.vmem [resolvable:$true] %s32
      %38 = dma.hbm_to_vmem [thread:$0]  %s31, 256, %s33, [#allocation6], 128, 128, 8
    $region9: #{tpu_custom_call.1} parent=1 // pred_fallthru
      _
    // Predicated region
    $region10: #{tpu_custom_call.1} parent=1 // pred_check
      _
    $region11: #{tpu_custom_call.1} parent=1 // pred_check_branch
      %40 = sbr.rel (0) target = $region13
    $region12: #{tpu_custom_call.1} parent=1 // pred_region
      %42 = vsyncadd [#allocation6], 0
      %s43 = sshll.u32 %s2, 4
      %s44 = int_to_ptr.hbm [resolvable:$true] %s43
      %s45 = sshll.u32 [#allocation7], 4
      %s46 = int_to_ptr.vmem [resolvable:$true] %s45
      %51 = dma.hbm_to_vmem [thread:$0]  %s44, 22528, %s46, [#allocation6], 64, 64, 4
    $region13: #{tpu_custom_call.1} parent=1 // pred_fallthru
      _
    // Predicated region
    $region14: #{tpu_custom_call.1} parent=1 // pred_check
      _
    $region15: #{tpu_custom_call.1} parent=1 // pred_check_branch
      %53 = sbr.rel (0) target = $region17
    $region16: #{tpu_custom_call.1} parent=1 // pred_region
      %55 = vsyncadd [#allocation9], 0
      %s56 = sshll.u32 %s3, 4
      %s57 = int_to_ptr.hbm [resolvable:$true] %s56
      %s58 = sshll.u32 [#allocation8], 4
      %s59 = int_to_ptr.vmem [resolvable:$true] %s58
      %64 = dma.hbm_to_vmem [thread:$0]  %s57, 512, %s59, [#allocation9], 128, 128, 8
    $region17: #{tpu_custom_call.1} parent=1 // pred_fallthru
      _
    // Predicated region
    $region18: #{tpu_custom_call.1} parent=1 // pred_check
      _
    $region19: #{tpu_custom_call.1} parent=1 // pred_check_branch
      %66 = sbr.rel (0) target = $region21
    $region20: #{tpu_custom_call.1} parent=1 // pred_region
      %68 = dma.done [#allocation3], 256
    $region21: #{tpu_custom_call.1} parent=1 // pred_fallthru
      _
    // Predicated region
    $region22: #{tpu_custom_call.1} parent=1 // pred_check
      _
    $region23: #{tpu_custom_call.1} parent=1 // pred_check_branch
      %70 = sbr.rel (0) target = $region25
    $region24: #{tpu_custom_call.1} parent=1 // pred_region
      %72 = dma.done [#allocation6], 256
    $region25: #{tpu_custom_call.1} parent=1 // pred_fallthru
      _
    // Predicated region
    $region26: #{tpu_custom_call.1} parent=1 // pred_check
      _
    $region27: #{tpu_custom_call.1} parent=1 // pred_check_branch
      %74 = sbr.rel (0) target = $region29
    $region28: #{tpu_custom_call.1} parent=1 // pred_region
      %76 = dma.done [#allocation6], 22528
    $region29: #{tpu_custom_call.1} parent=1 // pred_fallthru
      _
    // Predicated region
    $region30: #{tpu_custom_call.1} parent=1 // pred_check
      _
    $region31: #{tpu_custom_call.1} parent=1 // pred_check_branch
      %78 = sbr.rel (0) target = $region33
    $region32: #{tpu_custom_call.1} parent=1 // pred_region
      %80 = dma.done [#allocation9], 512
    $region33: #{tpu_custom_call.1} parent=1 // pred_fallthru
      _
    %v82 = vld [vmem:[#allocation2] sm:$0xff]
    %v83 = vld [vmem:[#allocation2 + $0x8] sm:$0xff]
    %84 = vadd.xlane.f32.xlu0 %v82
    %v85 = vpop.xlane.xlu0 %84
    %86 = vadd.xlane.f32.xlu0 %v83
    %v87 = vpop.xlane.xlu0 %86
    %v88 = vmul.f32 %v85, 0.015625
    %v89 = vmul.f32 %v87, 0.015625
    %v90 = vmul.f32 %v82, %v82
    %v91 = vmul.f32 %v83, %v83
    %92 = vadd.xlane.f32.xlu0 %v90
    %v93 = vpop.xlane.xlu0 %92
    %94 = vadd.xlane.f32.xlu0 %v91
    %v95 = vpop.xlane.xlu0 %94
    %v96 = vmul.f32 %v93, 0.015625
    %v97 = vmul.f32 %v95, 0.015625
    %v98 = vmul.f32 %v88, %v88
    %v99 = vmul.f32 %v89, %v89
    %v100 = vsub.f32 %v96, %v98
    %v101 = vsub.f32 %v97, %v99
    %v102 = vsub.f32 %v82, %v88
    %v103 = vsub.f32 %v83, %v89
    %v104 = vadd.f32 %v100, 1e-05
    %v105 = vadd.f32 %v101, 1e-05
    %v106 = vrsqrt.pop %v104
    %v107 = vmul.f32 %v106, %v104
    %v108 = vmul.f32 %v107, %v106
    %v109 = vmul.f32 0.5, %v108
    %v110 = vsub.f32 1.5, %v109
    %v111 = vmul.f32 %v106, %v110
    %vm112 = vweird.f32 %v104
    %vm113 = vweird.f32 %v106
    %vm114 = vmor %vm112, %vm113
    %v115 = vsel %vm114, %v106, %v111
    %v116 = vrsqrt.pop %v105
    %v117 = vmul.f32 %v116, %v105
    %v118 = vmul.f32 %v117, %v116
    %v119 = vmul.f32 0.5, %v118
    %v120 = vsub.f32 1.5, %v119
    %v121 = vmul.f32 %v116, %v120
    %vm122 = vweird.f32 %v105
    %vm123 = vweird.f32 %v116
    %vm124 = vmor %vm122, %vm123
    %v125 = vsel %vm124, %v116, %v121
    %v126 = vmul.f32 %v102, %v115
    %v127 = vmul.f32 %v103, %v125
    %v128 = vld [vmem:[#allocation8] sm:$0x1]
    %v129 = vperm.slane %v128, 0
    %v130 = vmul.f32 %v126, %v129
    %v131 = vmul.f32 %v127, %v129
    %v132 = vld [vmem:[#allocation8 + $0x1] sm:$0x1]
    %v133 = vperm.slane %v132, 0
    %v134 = vadd.f32 %v130, %v133
    %v135 = vadd.f32 %v131, %v133
    %v136 = vld [vmem:[#allocation5] sm:$0xff]
    %s137 = scalar_lea.vmem [#allocation5], 8
    %v138 = vld [vmem:[%s137] sm:$0xff]
    %v139 = vpack.c.bf16 %v135, %v134
    %v140 = vld [vmem:[#allocation7] sm:$0xf]
    %v141 = vld [vmem:[#allocation7 + $0x4] sm:$0xf]
    %v142 = vld [vmem:[#allocation7 + $0x8] sm:$0xf]
    %v143 = vld [vmem:[#allocation7 + $0xc] sm:$0xf]
    %v144 = vld [vmem:[#allocation7 + $0x10] sm:$0xf]
    %v145 = vld [vmem:[#allocation7 + $0x14] sm:$0xf]
    %v146 = vld [vmem:[#allocation7 + $0x18] sm:$0xf]
    %v147 = vld [vmem:[#allocation7 + $0x1c] sm:$0xf]
    %v148 = vld [vmem:[#allocation7 + $0x20] sm:$0xf]
    %v149 = vld [vmem:[#allocation7 + $0x24] sm:$0xf]
    %v150 = vld [vmem:[#allocation7 + $0x28] sm:$0xf]
    %v151 = vld [vmem:[#allocation7 + $0x2c] sm:$0xf]
    %v152 = vld [vmem:[#allocation7 + $0x30] sm:$0xf]
    %v153 = vld [vmem:[#allocation7 + $0x34] sm:$0xf]
    %v154 = vld [vmem:[#allocation7 + $0x38] sm:$0xf]
    %v155 = vld [vmem:[#allocation7 + $0x3c] sm:$0xf]
    %v156 = vld [vmem:[#allocation8 + $0x2] sm:$0x1]
    %v157 = vperm.slane %v156, 0
    %v174 = vunpack.c.l.b16 %v140
    %v175 = vunpack.c.l.b16 %v141
    %v176 = vunpack.c.l.b16 %v142
    %v177 = vunpack.c.l.b16 %v143
    %v178 = vunpack.c.l.b16 %v144
    %v179 = vunpack.c.l.b16 %v145
    %v180 = vunpack.c.l.b16 %v146
    %v181 = vunpack.c.l.b16 %v147
    %v182 = vunpack.c.l.b16 %v148
    %v183 = vunpack.c.l.b16 %v149
    %v184 = vunpack.c.l.b16 %v150
    %v185 = vunpack.c.l.b16 %v151
    %v186 = vunpack.c.l.b16 %v152
    %v187 = vunpack.c.l.b16 %v153
    %v188 = vunpack.c.l.b16 %v154
    %v189 = vunpack.c.l.b16 %v155
    %v190 = vpack.c.b16 %v175, %v174
    %v191 = vpack.c.b16 %v177, %v176
    %v192 = vpack.c.b16 %v179, %v178
    %v193 = vpack.c.b16 %v181, %v180
    %v194 = vpack.c.b16 %v183, %v182
    %v195 = vpack.c.b16 %v185, %v184
    %v196 = vpack.c.b16 %v187, %v186
    %v197 = vpack.c.b16 %v189, %v188
    %206 = vmatpush.bf16.msra.mxu0 %v197
    %207 = vmatpush.bf16.msra.mxu0 %v196
    %208 = vmatpush.bf16.msra.mxu0 %v195
    %209 = vmatpush.bf16.msra.mxu0 %v194
    %210 = vmatpush.bf16.msra.mxu0 %v193
    %211 = vmatpush.bf16.msra.mxu0 %v192
    %212 = vmatpush.bf16.msra.mxu0 %v191
    %213 = vmatpush.bf16.msra.mxu0 %v190
    %214 = vmatmul.bf16.gmra.mxu0 %v139
    %v215 = vpop.f32.mrf.mxu0
    %v216 = vadd.f32 %v157, %v215
    %v217 = vpop.f32.mrf.mxu0
    %v218 = vadd.f32 %v157, %v217
    %219 = vdwg.mxu0
    %s220 = scalar_lea.vmem [#allocation7], 128
    %v221 = vld [vmem:[%s220] sm:$0xf]
    %v222 = vld [vmem:[%s220 + $0x4] sm:$0xf]
    %v223 = vld [vmem:[%s220 + $0x8] sm:$0xf]
    %v224 = vld [vmem:[%s220 + $0xc] sm:$0xf]
    %v225 = vld [vmem:[%s220 + $0x10] sm:$0xf]
    %v226 = vld [vmem:[%s220 + $0x14] sm:$0xf]
    %v227 = vld [vmem:[%s220 + $0x18] sm:$0xf]
    %v228 = vld [vmem:[%s220 + $0x1c] sm:$0xf]
    %v229 = vld [vmem:[%s220 + $0x20] sm:$0xf]
    %v230 = vld [vmem:[%s220 + $0x24] sm:$0xf]
    %v231 = vld [vmem:[%s220 + $0x28] sm:$0xf]
    %v232 = vld [vmem:[%s220 + $0x2c] sm:$0xf]
    %v233 = vld [vmem:[%s220 + $0x30] sm:$0xf]
    %v234 = vld [vmem:[%s220 + $0x34] sm:$0xf]
    %v235 = vld [vmem:[%s220 + $0x38] sm:$0xf]
    %v236 = vld [vmem:[%s220 + $0x3c] sm:$0xf]
    %v237 = vld [vmem:[#allocation8 + $0x4] sm:$0x1]
    %v238 = vperm.slane %v237, 0
    %v255 = vunpack.c.l.b16 %v221
    %v256 = vunpack.c.l.b16 %v222
    %v257 = vunpack.c.l.b16 %v223
    %v258 = vunpack.c.l.b16 %v224
    %v259 = vunpack.c.l.b16 %v225
    %v260 = vunpack.c.l.b16 %v226
    %v261 = vunpack.c.l.b16 %v227
    %v262 = vunpack.c.l.b16 %v228
    %v263 = vunpack.c.l.b16 %v229
    %v264 = vunpack.c.l.b16 %v230
    %v265 = vunpack.c.l.b16 %v231
    %v266 = vunpack.c.l.b16 %v232
    %v267 = vunpack.c.l.b16 %v233
    %v268 = vunpack.c.l.b16 %v234
    %v269 = vunpack.c.l.b16 %v235
    %v270 = vunpack.c.l.b16 %v236
    %v271 = vpack.c.b16 %v256, %v255
    %v272 = vpack.c.b16 %v258, %v257
    %v273 = vpack.c.b16 %v260, %v259
    %v274 = vpack.c.b16 %v262, %v261
    %v275 = vpack.c.b16 %v264, %v263
    %v276 = vpack.c.b16 %v266, %v265
    %v277 = vpack.c.b16 %v268, %v267
    %v278 = vpack.c.b16 %v270, %v269
    %287 = vmatpush.bf16.msra.mxu0 %v278
    %288 = vmatpush.bf16.msra.mxu0 %v277
    %289 = vmatpush.bf16.msra.mxu0 %v276
    %290 = vmatpush.bf16.msra.mxu0 %v275
    %291 = vmatpush.bf16.msra.mxu0 %v274
    %292 = vmatpush.bf16.msra.mxu0 %v273
    %293 = vmatpush.bf16.msra.mxu0 %v272
    %294 = vmatpush.bf16.msra.mxu0 %v271
    %295 = vmatmul.bf16.gmra.mxu0 %v139
    %v296 = vpop.f32.mrf.mxu0
    %v297 = vadd.f32 %v238, %v296
    %v298 = vpop.f32.mrf.mxu0
    %v299 = vadd.f32 %v238, %v298
    %300 = vdwg.mxu0
    %s301 = scalar_lea.vmem [#allocation7], 256
    %v302 = vld [vmem:[%s301] sm:$0xf]
    %v303 = vld [vmem:[%s301 + $0x4] sm:$0xf]
    %v304 = vld [vmem:[%s301 + $0x8] sm:$0xf]
    %v305 = vld [vmem:[%s301 + $0xc] sm:$0xf]
    %v306 = vld [vmem:[%s301 + $0x10] sm:$0xf]
    %v307 = vld [vmem:[%s301 + $0x14] sm:$0xf]
    %v308 = vld [vmem:[%s301 + $0x18] sm:$0xf]
    %v309 = vld [vmem:[%s301 + $0x1c] sm:$0xf]
    %v310 = vld [vmem:[%s301 + $0x20] sm:$0xf]
    %v311 = vld [vmem:[%s301 + $0x24] sm:$0xf]
    %v312 = vld [vmem:[%s301 + $0x28] sm:$0xf]
    %v313 = vld [vmem:[%s301 + $0x2c] sm:$0xf]
    %v314 = vld [vmem:[%s301 + $0x30] sm:$0xf]
    %v315 = vld [vmem:[%s301 + $0x34] sm:$0xf]
    %v316 = vld [vmem:[%s301 + $0x38] sm:$0xf]
    %v317 = vld [vmem:[%s301 + $0x3c] sm:$0xf]
    %v318 = vld [vmem:[#allocation8 + $0x6] sm:$0x1]
    %v319 = vperm.slane %v318, 0
    %v336 = vunpack.c.l.b16 %v302
    %v337 = vunpack.c.l.b16 %v303
    %v338 = vunpack.c.l.b16 %v304
    %v339 = vunpack.c.l.b16 %v305
    %v340 = vunpack.c.l.b16 %v306
    %v341 = vunpack.c.l.b16 %v307
    %v342 = vunpack.c.l.b16 %v308
    %v343 = vunpack.c.l.b16 %v309
    %v344 = vunpack.c.l.b16 %v310
    %v345 = vunpack.c.l.b16 %v311
    %v346 = vunpack.c.l.b16 %v312
    %v347 = vunpack.c.l.b16 %v313
    %v348 = vunpack.c.l.b16 %v314
    %v349 = vunpack.c.l.b16 %v315
    %v350 = vunpack.c.l.b16 %v316
    %v351 = vunpack.c.l.b16 %v317
    %v352 = vpack.c.b16 %v337, %v336
    %v353 = vpack.c.b16 %v339, %v338
    %v354 = vpack.c.b16 %v341, %v340
    %v355 = vpack.c.b16 %v343, %v342
    %v356 = vpack.c.b16 %v345, %v344
    %v357 = vpack.c.b16 %v347, %v346
    %v358 = vpack.c.b16 %v349, %v348
    %v359 = vpack.c.b16 %v351, %v350
    %368 = vmatpush.bf16.msra.mxu0 %v359
    %369 = vmatpush.bf16.msra.mxu0 %v358
    %370 = vmatpush.bf16.msra.mxu0 %v357
    %371 = vmatpush.bf16.msra.mxu0 %v356
    %372 = vmatpush.bf16.msra.mxu0 %v355
    %373 = vmatpush.bf16.msra.mxu0 %v354
    %374 = vmatpush.bf16.msra.mxu0 %v353
    %375 = vmatpush.bf16.msra.mxu0 %v352
    %376 = vmatmul.bf16.gmra.mxu0 %v139
    %v377 = vpop.f32.mrf.mxu0
    %v378 = vadd.f32 %v319, %v377
    %v379 = vpop.f32.mrf.mxu0
    %v380 = vadd.f32 %v319, %v379
    %381 = vdwg.mxu0
    %v382 = vpack.c.bf16 %v216, %v216
    %v383 = vpack.c.bf16 %v297, %v297
    %v384 = vpack.c.bf16 %v378, %v378
    %385 = vmatpush.bf16.xpose.msra.mxu0 0
    %386 = vmatpush.bf16.xpose.msra.mxu0 0
    %387 = vmatpush.bf16.xpose.msra.mxu0 0
    %388 = vmatpush.bf16.xpose.msra.mxu0 0
    %389 = vmatpush.bf16.xpose.msra.mxu0 0
    %390 = vmatpush.bf16.xpose.msra.mxu0 0
    %391 = vmatpush.bf16.xpose.msra.mxu0 0
    %392 = vmatpush.bf16.xpose.msra.mxu0 %v383
    %393 = vmatmul.bf16.gmra.mxu0 %v382
    %v394 = vpop.f32.mrf.mxu0
    %v395 = vadd.f32 %v136, %v394
    %v396 = vpop.f32.mrf.mxu0
    %397 = vdwg.mxu0
    %vm398 = vcmask 64512
    %v399 = vsel %vm398, %v395, -inf
    %400 = vmax.xlane.f32.xlu0 %v399
    %v401 = vpop.xlane.xlu0 %400
    %v402 = vsub.f32 %v395, %v401
    %v403 = vmul.f32 %v402, 1.442695
    %v404 = vpow.pop %v403
    %v405 = vsel %vm398, %v404, 0.0
    %406 = vadd.xlane.f32.xlu0 %v405
    %v407 = vpop.xlane.xlu0 %406
    %v408 = vrcp.pop %v407
    %v409 = vmul.f32 %v404, %v408
    %v410 = vpack.c.bf16 %v409, %v409
    %v412 = vsel %vm398, %v410, 0
    %vm414 = vcmask 1043456
    %v416 = vsel %vm414, %v384, 0
    %418 = vmatpush.bf16.msra.mxu0 0
    %419 = vmatpush.bf16.msra.mxu0 0
    %420 = vmatpush.bf16.msra.mxu0 0
    %421 = vmatpush.bf16.msra.mxu0 0
    %422 = vmatpush.bf16.msra.mxu0 0
    %423 = vmatpush.bf16.msra.mxu0 0
    %424 = vmatpush.bf16.msra.mxu0 0
    %425 = vmatpush.bf16.msra.mxu0 %v416
    %426 = vmatmul.bf16.gmra.mxu0 %v412
    %v427 = vpop.f32.mrf.mxu0
    %v428 = vadd.f32 0.0, %v427
    %v429 = vpop.f32.mrf.mxu0
    %430 = vdwg.mxu0
    %v431 = vpack.c.bf16 %v218, %v218
    %v432 = vpack.c.bf16 %v299, %v299
    %v433 = vpack.c.bf16 %v380, %v380
    %434 = vmatpush.bf16.xpose.msra.mxu0 0
    %435 = vmatpush.bf16.xpose.msra.mxu0 0
    %436 = vmatpush.bf16.xpose.msra.mxu0 0
    %437 = vmatpush.bf16.xpose.msra.mxu0 0
    %438 = vmatpush.bf16.xpose.msra.mxu0 0
    %439 = vmatpush.bf16.xpose.msra.mxu0 0
    %440 = vmatpush.bf16.xpose.msra.mxu0 0
    %441 = vmatpush.bf16.xpose.msra.mxu0 %v432
    %442 = vmatmul.bf16.gmra.mxu0 %v431
    %v443 = vpop.f32.mrf.mxu0
    %v444 = vadd.f32 %v138, %v443
    %v445 = vpop.f32.mrf.mxu0
    %446 = vdwg.mxu0
    %v447 = vsel %vm398, %v444, -inf
    %448 = vmax.xlane.f32.xlu0 %v447
    %v449 = vpop.xlane.xlu0 %448
    %v450 = vsub.f32 %v444, %v449
    %v451 = vmul.f32 %v450, 1.442695
    %v452 = vpow.pop %v451
    %v453 = vsel %vm398, %v452, 0.0
    %454 = vadd.xlane.f32.xlu0 %v453
    %v455 = vpop.xlane.xlu0 %454
    %v456 = vrcp.pop %v455
    %v457 = vmul.f32 %v452, %v456
    %v458 = vpack.c.bf16 %v457, %v457
    %v460 = vsel %vm398, %v458, 0
    %v463 = vsel %vm414, %v433, 0
    %465 = vmatpush.bf16.msra.mxu0 0
    %466 = vmatpush.bf16.msra.mxu0 0
    %467 = vmatpush.bf16.msra.mxu0 0
    %468 = vmatpush.bf16.msra.mxu0 0
    %469 = vmatpush.bf16.msra.mxu0 0
    %470 = vmatpush.bf16.msra.mxu0 0
    %471 = vmatpush.bf16.msra.mxu0 0
    %472 = vmatpush.bf16.msra.mxu0 %v463
    %473 = vmatmul.bf16.gmra.mxu0 %v460
    %v474 = vpop.f32.mrf.mxu0
    %v475 = vadd.f32 0.0, %v474
    %v476 = vpop.f32.mrf.mxu0
    %477 = vdwg.mxu0
    %v478 = vpack.c.bf16 %v475, %v428
    %s479 = scalar_lea.vmem [#allocation7], 384
    %v480 = vld [vmem:[%s479] sm:$0xf]
    %v481 = vld [vmem:[%s479 + $0x4] sm:$0xf]
    %v482 = vld [vmem:[%s479 + $0x8] sm:$0xf]
    %v483 = vld [vmem:[%s479 + $0xc] sm:$0xf]
    %v484 = vld [vmem:[%s479 + $0x10] sm:$0xf]
    %v485 = vld [vmem:[%s479 + $0x14] sm:$0xf]
    %v486 = vld [vmem:[%s479 + $0x18] sm:$0xf]
    %v487 = vld [vmem:[%s479 + $0x1c] sm:$0xf]
    %v488 = vld [vmem:[%s479 + $0x20] sm:$0xf]
    %v489 = vld [vmem:[%s479 + $0x24] sm:$0xf]
    %v490 = vld [vmem:[%s479 + $0x28] sm:$0xf]
    %v491 = vld [vmem:[%s479 + $0x2c] sm:$0xf]
    %v492 = vld [vmem:[%s479 + $0x30] sm:$0xf]
    %v493 = vld [vmem:[%s479 + $0x34] sm:$0xf]
    %v494 = vld [vmem:[%s479 + $0x38] sm:$0xf]
    %v495 = vld [vmem:[%s479 + $0x3c] sm:$0xf]
    %s496 = scalar_lea.vmem [#allocation7], 64
    %v497 = vld [vmem:[%s496] sm:$0xf]
    %v498 = vld [vmem:[%s496 + $0x4] sm:$0xf]
    %v499 = vld [vmem:[%s496 + $0x8] sm:$0xf]
    %v500 = vld [vmem:[%s496 + $0xc] sm:$0xf]
    %v501 = vld [vmem:[%s496 + $0x10] sm:$0xf]
    %v502 = vld [vmem:[%s496 + $0x14] sm:$0xf]
    %v503 = vld [vmem:[%s496 + $0x18] sm:$0xf]
    %v504 = vld [vmem:[%s496 + $0x1c] sm:$0xf]
    %v505 = vld [vmem:[%s496 + $0x20] sm:$0xf]
    %v506 = vld [vmem:[%s496 + $0x24] sm:$0xf]
    %v507 = vld [vmem:[%s496 + $0x28] sm:$0xf]
    %v508 = vld [vmem:[%s496 + $0x2c] sm:$0xf]
    %v509 = vld [vmem:[%s496 + $0x30] sm:$0xf]
    %v510 = vld [vmem:[%s496 + $0x34] sm:$0xf]
    %v511 = vld [vmem:[%s496 + $0x38] sm:$0xf]
    %v512 = vld [vmem:[%s496 + $0x3c] sm:$0xf]
    %v513 = vld [vmem:[#allocation8 + $0x3] sm:$0x1]
    %v514 = vperm.slane %v513, 0
    %v531 = vunpack.c.l.b16 %v497
    %v532 = vunpack.c.l.b16 %v498
    %v533 = vunpack.c.l.b16 %v499
    %v534 = vunpack.c.l.b16 %v500
    %v535 = vunpack.c.l.b16 %v501
    %v536 = vunpack.c.l.b16 %v502
    %v537 = vunpack.c.l.b16 %v503
    %v538 = vunpack.c.l.b16 %v504
    %v539 = vunpack.c.l.b16 %v505
    %v540 = vunpack.c.l.b16 %v506
    %v541 = vunpack.c.l.b16 %v507
    %v542 = vunpack.c.l.b16 %v508
    %v543 = vunpack.c.l.b16 %v509
    %v544 = vunpack.c.l.b16 %v510
    %v545 = vunpack.c.l.b16 %v511
    %v546 = vunpack.c.l.b16 %v512
    %v547 = vpack.c.b16 %v532, %v531
    %v548 = vpack.c.b16 %v534, %v533
    %v549 = vpack.c.b16 %v536, %v535
    %v550 = vpack.c.b16 %v538, %v537
    %v551 = vpack.c.b16 %v540, %v539
    %v552 = vpack.c.b16 %v542, %v541
    %v553 = vpack.c.b16 %v544, %v543
    %v554 = vpack.c.b16 %v546, %v545
    %563 = vmatpush.bf16.msra.mxu0 %v554
    %564 = vmatpush.bf16.msra.mxu0 %v553
    %565 = vmatpush.bf16.msra.mxu0 %v552
    %566 = vmatpush.bf16.msra.mxu0 %v551
    %567 = vmatpush.bf16.msra.mxu0 %v550
    %568 = vmatpush.bf16.msra.mxu0 %v549
    %569 = vmatpush.bf16.msra.mxu0 %v548
    %570 = vmatpush.bf16.msra.mxu0 %v547
    %571 = vmatmul.bf16.gmra.mxu0 %v139
    %v572 = vpop.f32.mrf.mxu0
    %v573 = vadd.f32 %v514, %v572
    %v574 = vpop.f32.mrf.mxu0
    %v575 = vadd.f32 %v514, %v574
    %576 = vdwg.mxu0
    %s577 = scalar_lea.vmem [#allocation7], 192
    %v578 = vld [vmem:[%s577] sm:$0xf]
    %v579 = vld [vmem:[%s577 + $0x4] sm:$0xf]
    %v580 = vld [vmem:[%s577 + $0x8] sm:$0xf]
    %v581 = vld [vmem:[%s577 + $0xc] sm:$0xf]
    %v582 = vld [vmem:[%s577 + $0x10] sm:$0xf]
    %v583 = vld [vmem:[%s577 + $0x14] sm:$0xf]
    %v584 = vld [vmem:[%s577 + $0x18] sm:$0xf]
    %v585 = vld [vmem:[%s577 + $0x1c] sm:$0xf]
    %v586 = vld [vmem:[%s577 + $0x20] sm:$0xf]
    %v587 = vld [vmem:[%s577 + $0x24] sm:$0xf]
    %v588 = vld [vmem:[%s577 + $0x28] sm:$0xf]
    %v589 = vld [vmem:[%s577 + $0x2c] sm:$0xf]
    %v590 = vld [vmem:[%s577 + $0x30] sm:$0xf]
    %v591 = vld [vmem:[%s577 + $0x34] sm:$0xf]
    %v592 = vld [vmem:[%s577 + $0x38] sm:$0xf]
    %v593 = vld [vmem:[%s577 + $0x3c] sm:$0xf]
    %v594 = vld [vmem:[#allocation8 + $0x5] sm:$0x1]
    %v595 = vperm.slane %v594, 0
    %v612 = vunpack.c.l.b16 %v578
    %v613 = vunpack.c.l.b16 %v579
    %v614 = vunpack.c.l.b16 %v580
    %v615 = vunpack.c.l.b16 %v581
    %v616 = vunpack.c.l.b16 %v582
    %v617 = vunpack.c.l.b16 %v583
    %v618 = vunpack.c.l.b16 %v584
    %v619 = vunpack.c.l.b16 %v585
    %v620 = vunpack.c.l.b16 %v586
    %v621 = vunpack.c.l.b16 %v587
    %v622 = vunpack.c.l.b16 %v588
    %v623 = vunpack.c.l.b16 %v589
    %v624 = vunpack.c.l.b16 %v590
    %v625 = vunpack.c.l.b16 %v591
    %v626 = vunpack.c.l.b16 %v592
    %v627 = vunpack.c.l.b16 %v593
    %v628 = vpack.c.b16 %v613, %v612
    %v629 = vpack.c.b16 %v615, %v614
    %v630 = vpack.c.b16 %v617, %v616
    %v631 = vpack.c.b16 %v619, %v618
    %v632 = vpack.c.b16 %v621, %v620
    %v633 = vpack.c.b16 %v623, %v622
    %v634 = vpack.c.b16 %v625, %v624
    %v635 = vpack.c.b16 %v627, %v626
    %644 = vmatpush.bf16.msra.mxu0 %v635
    %645 = vmatpush.bf16.msra.mxu0 %v634
    %646 = vmatpush.bf16.msra.mxu0 %v633
    %647 = vmatpush.bf16.msra.mxu0 %v632
    %648 = vmatpush.bf16.msra.mxu0 %v631
    %649 = vmatpush.bf16.msra.mxu0 %v630
    %650 = vmatpush.bf16.msra.mxu0 %v629
    %651 = vmatpush.bf16.msra.mxu0 %v628
    %652 = vmatmul.bf16.gmra.mxu0 %v139
    %v653 = vpop.f32.mrf.mxu0
    %v654 = vadd.f32 %v595, %v653
    %v655 = vpop.f32.mrf.mxu0
    %v656 = vadd.f32 %v595, %v655
    %657 = vdwg.mxu0
    %s658 = scalar_lea.vmem [#allocation7], 320
    %v659 = vld [vmem:[%s658] sm:$0xf]
    %v660 = vld [vmem:[%s658 + $0x4] sm:$0xf]
    %v661 = vld [vmem:[%s658 + $0x8] sm:$0xf]
    %v662 = vld [vmem:[%s658 + $0xc] sm:$0xf]
    %v663 = vld [vmem:[%s658 + $0x10] sm:$0xf]
    %v664 = vld [vmem:[%s658 + $0x14] sm:$0xf]
    %v665 = vld [vmem:[%s658 + $0x18] sm:$0xf]
    %v666 = vld [vmem:[%s658 + $0x1c] sm:$0xf]
    %v667 = vld [vmem:[%s658 + $0x20] sm:$0xf]
    %v668 = vld [vmem:[%s658 + $0x24] sm:$0xf]
    %v669 = vld [vmem:[%s658 + $0x28] sm:$0xf]
    %v670 = vld [vmem:[%s658 + $0x2c] sm:$0xf]
    %v671 = vld [vmem:[%s658 + $0x30] sm:$0xf]
    %v672 = vld [vmem:[%s658 + $0x34] sm:$0xf]
    %v673 = vld [vmem:[%s658 + $0x38] sm:$0xf]
    %v674 = vld [vmem:[%s658 + $0x3c] sm:$0xf]
    %v675 = vld [vmem:[#allocation8 + $0x7] sm:$0x1]
    %v676 = vperm.slane %v675, 0
    %v693 = vunpack.c.l.b16 %v659
    %v694 = vunpack.c.l.b16 %v660
    %v695 = vunpack.c.l.b16 %v661
    %v696 = vunpack.c.l.b16 %v662
    %v697 = vunpack.c.l.b16 %v663
    %v698 = vunpack.c.l.b16 %v664
    %v699 = vunpack.c.l.b16 %v665
    %v700 = vunpack.c.l.b16 %v666
    %v701 = vunpack.c.l.b16 %v667
    %v702 = vunpack.c.l.b16 %v668
    %v703 = vunpack.c.l.b16 %v669
    %v704 = vunpack.c.l.b16 %v670
    %v705 = vunpack.c.l.b16 %v671
    %v706 = vunpack.c.l.b16 %v672
    %v707 = vunpack.c.l.b16 %v673
    %v708 = vunpack.c.l.b16 %v674
    %v709 = vpack.c.b16 %v694, %v693
    %v710 = vpack.c.b16 %v696, %v695
    %v711 = vpack.c.b16 %v698, %v697
    %v712 = vpack.c.b16 %v700, %v699
    %v713 = vpack.c.b16 %v702, %v701
    %v714 = vpack.c.b16 %v704, %v703
    %v715 = vpack.c.b16 %v706, %v705
    %v716 = vpack.c.b16 %v708, %v707
    %725 = vmatpush.bf16.msra.mxu0 %v716
    %726 = vmatpush.bf16.msra.mxu0 %v715
    %727 = vmatpush.bf16.msra.mxu0 %v714
    %728 = vmatpush.bf16.msra.mxu0 %v713
    %729 = vmatpush.bf16.msra.mxu0 %v712
    %730 = vmatpush.bf16.msra.mxu0 %v711
    %731 = vmatpush.bf16.msra.mxu0 %v710
    %732 = vmatpush.bf16.msra.mxu0 %v709
    %733 = vmatmul.bf16.gmra.mxu0 %v139
    %v734 = vpop.f32.mrf.mxu0
    %v735 = vadd.f32 %v676, %v734
    %v736 = vpop.f32.mrf.mxu0
    %v737 = vadd.f32 %v676, %v736
    %738 = vdwg.mxu0
    %v739 = vpack.c.bf16 %v573, %v573
    %v740 = vpack.c.bf16 %v654, %v654
    %v741 = vpack.c.bf16 %v735, %v735
    %742 = vmatpush.bf16.xpose.msra.mxu0 0
    %743 = vmatpush.bf16.xpose.msra.mxu0 0
    %744 = vmatpush.bf16.xpose.msra.mxu0 0
    %745 = vmatpush.bf16.xpose.msra.mxu0 0
    %746 = vmatpush.bf16.xpose.msra.mxu0 0
    %747 = vmatpush.bf16.xpose.msra.mxu0 0
    %748 = vmatpush.bf16.xpose.msra.mxu0 0
    %749 = vmatpush.bf16.xpose.msra.mxu0 %v740
    %750 = vmatmul.bf16.gmra.mxu0 %v739
    %v751 = vpop.f32.mrf.mxu0
    %v752 = vadd.f32 %v136, %v751
    %v753 = vpop.f32.mrf.mxu0
    %754 = vdwg.mxu0
    %v755 = vsel %vm398, %v752, -inf
    %756 = vmax.xlane.f32.xlu0 %v755
    %v757 = vpop.xlane.xlu0 %756
    %v758 = vsub.f32 %v752, %v757
    %v759 = vmul.f32 %v758, 1.442695
    %v760 = vpow.pop %v759
    %v761 = vsel %vm398, %v760, 0.0
    %762 = vadd.xlane.f32.xlu0 %v761
    %v763 = vpop.xlane.xlu0 %762
    %v764 = vrcp.pop %v763
    %v765 = vmul.f32 %v760, %v764
    %v766 = vpack.c.bf16 %v765, %v765
    %v768 = vsel %vm398, %v766, 0
    %v771 = vsel %vm414, %v741, 0
    %773 = vmatpush.bf16.msra.mxu0 0
    %774 = vmatpush.bf16.msra.mxu0 0
    %775 = vmatpush.bf16.msra.mxu0 0
    %776 = vmatpush.bf16.msra.mxu0 0
    %777 = vmatpush.bf16.msra.mxu0 0
    %778 = vmatpush.bf16.msra.mxu0 0
    %779 = vmatpush.bf16.msra.mxu0 0
    %780 = vmatpush.bf16.msra.mxu0 %v771
    %781 = vmatmul.bf16.gmra.mxu0 %v768
    %v782 = vpop.f32.mrf.mxu0
    %v783 = vadd.f32 0.0, %v782
    %v784 = vpop.f32.mrf.mxu0
    %785 = vdwg.mxu0
    %v786 = vpack.c.bf16 %v575, %v575
    %v787 = vpack.c.bf16 %v656, %v656
    %v788 = vpack.c.bf16 %v737, %v737
    %789 = vmatpush.bf16.xpose.msra.mxu0 0
    %790 = vmatpush.bf16.xpose.msra.mxu0 0
    %791 = vmatpush.bf16.xpose.msra.mxu0 0
    %792 = vmatpush.bf16.xpose.msra.mxu0 0
    %793 = vmatpush.bf16.xpose.msra.mxu0 0
    %794 = vmatpush.bf16.xpose.msra.mxu0 0
    %795 = vmatpush.bf16.xpose.msra.mxu0 0
    %796 = vmatpush.bf16.xpose.msra.mxu0 %v787
    %797 = vmatmul.bf16.gmra.mxu0 %v786
    %v798 = vpop.f32.mrf.mxu0
    %v799 = vadd.f32 %v138, %v798
    %v800 = vpop.f32.mrf.mxu0
    %801 = vdwg.mxu0
    %v802 = vsel %vm398, %v799, -inf
    %803 = vmax.xlane.f32.xlu0 %v802
    %v804 = vpop.xlane.xlu0 %803
    %v805 = vsub.f32 %v799, %v804
    %v806 = vmul.f32 %v805, 1.442695
    %v807 = vpow.pop %v806
    %v808 = vsel %vm398, %v807, 0.0
    %809 = vadd.xlane.f32.xlu0 %v808
    %v810 = vpop.xlane.xlu0 %809
    %v811 = vrcp.pop %v810
    %v812 = vmul.f32 %v807, %v811
    %v813 = vpack.c.bf16 %v812, %v812
    %v815 = vsel %vm398, %v813, 0
    %v818 = vsel %vm414, %v788, 0
    %820 = vmatpush.bf16.msra.mxu0 0
    %821 = vmatpush.bf16.msra.mxu0 0
    %822 = vmatpush.bf16.msra.mxu0 0
    %823 = vmatpush.bf16.msra.mxu0 0
    %824 = vmatpush.bf16.msra.mxu0 0
    %825 = vmatpush.bf16.msra.mxu0 0
    %826 = vmatpush.bf16.msra.mxu0 0
    %827 = vmatpush.bf16.msra.mxu0 %v818
    %828 = vmatmul.bf16.gmra.mxu0 %v815
    %v829 = vpop.f32.mrf.mxu0
    %v830 = vadd.f32 0.0, %v829
    %v831 = vpop.f32.mrf.mxu0
    %832 = vdwg.mxu0
    %v833 = vpack.c.bf16 %v830, %v783
    %s834 = scalar_lea.vmem [#allocation7], 448
    %v835 = vld [vmem:[%s834] sm:$0xf]
    %v836 = vld [vmem:[%s834 + $0x4] sm:$0xf]
    %v837 = vld [vmem:[%s834 + $0x8] sm:$0xf]
    %v838 = vld [vmem:[%s834 + $0xc] sm:$0xf]
    %v839 = vld [vmem:[%s834 + $0x10] sm:$0xf]
    %v840 = vld [vmem:[%s834 + $0x14] sm:$0xf]
    %v841 = vld [vmem:[%s834 + $0x18] sm:$0xf]
    %v842 = vld [vmem:[%s834 + $0x1c] sm:$0xf]
    %v843 = vld [vmem:[%s834 + $0x20] sm:$0xf]
    %v844 = vld [vmem:[%s834 + $0x24] sm:$0xf]
    %v845 = vld [vmem:[%s834 + $0x28] sm:$0xf]
    %v846 = vld [vmem:[%s834 + $0x2c] sm:$0xf]
    %v847 = vld [vmem:[%s834 + $0x30] sm:$0xf]
    %v848 = vld [vmem:[%s834 + $0x34] sm:$0xf]
    %v849 = vld [vmem:[%s834 + $0x38] sm:$0xf]
    %v850 = vld [vmem:[%s834 + $0x3c] sm:$0xf]
    %v867 = vunpack.c.l.b16 %v835
    %v868 = vunpack.c.l.b16 %v836
    %v869 = vunpack.c.l.b16 %v837
    %v870 = vunpack.c.l.b16 %v838
    %v871 = vunpack.c.l.b16 %v839
    %v872 = vunpack.c.l.b16 %v840
    %v873 = vunpack.c.l.b16 %v841
    %v874 = vunpack.c.l.b16 %v842
    %v875 = vunpack.c.l.b16 %v843
    %v876 = vunpack.c.l.b16 %v844
    %v877 = vunpack.c.l.b16 %v845
    %v878 = vunpack.c.l.b16 %v846
    %v879 = vunpack.c.l.b16 %v847
    %v880 = vunpack.c.l.b16 %v848
    %v881 = vunpack.c.l.b16 %v849
    %v882 = vunpack.c.l.b16 %v850
    %v883 = vpack.c.b16 %v868, %v867
    %v884 = vpack.c.b16 %v870, %v869
    %v885 = vpack.c.b16 %v872, %v871
    %v886 = vpack.c.b16 %v874, %v873
    %v887 = vpack.c.b16 %v876, %v875
    %v888 = vpack.c.b16 %v878, %v877
    %v889 = vpack.c.b16 %v880, %v879
    %v890 = vpack.c.b16 %v882, %v881
    %899 = vmatpush.bf16.msra.mxu0 %v890
    %900 = vmatpush.bf16.msra.mxu0 %v889
    %901 = vmatpush.bf16.msra.mxu0 %v888
    %902 = vmatpush.bf16.msra.mxu0 %v887
    %903 = vmatpush.bf16.msra.mxu0 %v886
    %904 = vmatpush.bf16.msra.mxu0 %v885
    %905 = vmatpush.bf16.msra.mxu0 %v884
    %906 = vmatpush.bf16.msra.mxu0 %v883
    %907 = vmatmul.bf16.gmra.mxu0 %v833
    %v908 = vpop.f32.mrf.mxu0
    %v909 = vadd.f32 0.0, %v908
    %v910 = vpop.f32.mrf.mxu0
    %v911 = vadd.f32 0.0, %v910
    %912 = vdwg.mxu0
    %v929 = vunpack.c.l.b16 %v480
    %v930 = vunpack.c.l.b16 %v481
    %v931 = vunpack.c.l.b16 %v482
    %v932 = vunpack.c.l.b16 %v483
    %v933 = vunpack.c.l.b16 %v484
    %v934 = vunpack.c.l.b16 %v485
    %v935 = vunpack.c.l.b16 %v486
    %v936 = vunpack.c.l.b16 %v487
    %v937 = vunpack.c.l.b16 %v488
    %v938 = vunpack.c.l.b16 %v489
    %v939 = vunpack.c.l.b16 %v490
    %v940 = vunpack.c.l.b16 %v491
    %v941 = vunpack.c.l.b16 %v492
    %v942 = vunpack.c.l.b16 %v493
    %v943 = vunpack.c.l.b16 %v494
    %v944 = vunpack.c.l.b16 %v495
    %v945 = vpack.c.b16 %v930, %v929
    %v946 = vpack.c.b16 %v932, %v931
    %v947 = vpack.c.b16 %v934, %v933
    %v948 = vpack.c.b16 %v936, %v935
    %v949 = vpack.c.b16 %v938, %v937
    %v950 = vpack.c.b16 %v940, %v939
    %v951 = vpack.c.b16 %v942, %v941
    %v952 = vpack.c.b16 %v944, %v943
    %961 = vmatpush.bf16.msra.mxu0 %v952
    %962 = vmatpush.bf16.msra.mxu0 %v951
    %963 = vmatpush.bf16.msra.mxu0 %v950
    %964 = vmatpush.bf16.msra.mxu0 %v949
    %965 = vmatpush.bf16.msra.mxu0 %v948
    %966 = vmatpush.bf16.msra.mxu0 %v947
    %967 = vmatpush.bf16.msra.mxu0 %v946
    %968 = vmatpush.bf16.msra.mxu0 %v945
    %969 = vmatmul.bf16.gmra.mxu0 %v478
    %v970 = vpop.f32.mrf.mxu0
    %v971 = vadd.f32 %v909, %v970
    %v972 = vpop.f32.mrf.mxu0
    %v973 = vadd.f32 %v911, %v972
    %974 = vdwg.mxu0
    %v975 = vld [vmem:[#allocation8 + $0x8] sm:$0x1]
    %v976 = vperm.slane %v975, 0
    %v977 = vadd.f32 %v971, %v976
    %v978 = vadd.f32 %v973, %v976
    %v979 = vadd.f32 %v977, %v134
    %v980 = vadd.f32 %v978, %v135
    %981 = vadd.xlane.f32.xlu0 %v979
    %v982 = vpop.xlane.xlu0 %981
    %983 = vadd.xlane.f32.xlu0 %v980
    %v984 = vpop.xlane.xlu0 %983
    %v985 = vmul.f32 %v982, 0.015625
    %v986 = vmul.f32 %v984, 0.015625
    %v987 = vmul.f32 %v979, %v979
    %v988 = vmul.f32 %v980, %v980
    %989 = vadd.xlane.f32.xlu0 %v987
    %v990 = vpop.xlane.xlu0 %989
    %991 = vadd.xlane.f32.xlu0 %v988
    %v992 = vpop.xlane.xlu0 %991
    %v993 = vmul.f32 %v990, 0.015625
    %v994 = vmul.f32 %v992, 0.015625
    %v995 = vmul.f32 %v985, %v985
    %v996 = vmul.f32 %v986, %v986
    %v997 = vsub.f32 %v993, %v995
    %v998 = vsub.f32 %v994, %v996
    %v999 = vsub.f32 %v979, %v985
    %v1000 = vsub.f32 %v980, %v986
    %v1001 = vadd.f32 %v997, 1e-05
    %v1002 = vadd.f32 %v998, 1e-05
    %v1003 = vrsqrt.pop %v1001
    %v1004 = vmul.f32 %v1003, %v1001
    %v1005 = vmul.f32 %v1004, %v1003
    %v1006 = vmul.f32 0.5, %v1005
    %v1007 = vsub.f32 1.5, %v1006
    %v1008 = vmul.f32 %v1003, %v1007
    %vm1009 = vweird.f32 %v1001
    %vm1010 = vweird.f32 %v1003
    %vm1011 = vmor %vm1009, %vm1010
    %v1012 = vsel %vm1011, %v1003, %v1008
    %v1013 = vrsqrt.pop %v1002
    %v1014 = vmul.f32 %v1013, %v1002
    %v1015 = vmul.f32 %v1014, %v1013
    %v1016 = vmul.f32 0.5, %v1015
    %v1017 = vsub.f32 1.5, %v1016
    %v1018 = vmul.f32 %v1013, %v1017
    %vm1019 = vweird.f32 %v1002
    %vm1020 = vweird.f32 %v1013
    %vm1021 = vmor %vm1019, %vm1020
    %v1022 = vsel %vm1021, %v1013, %v1018
    %v1023 = vmul.f32 %v999, %v1012
    %v1024 = vmul.f32 %v1000, %v1022
    %v1025 = vld [vmem:[#allocation8 + $0x9] sm:$0x1]
    %v1026 = vperm.slane %v1025, 0
    %v1027 = vmul.f32 %v1023, %v1026
    %v1028 = vmul.f32 %v1024, %v1026
    %v1029 = vld [vmem:[#allocation8 + $0xa] sm:$0x1]
    %v1030 = vperm.slane %v1029, 0
    %v1031 = vadd.f32 %v1027, %v1030
    %v1032 = vadd.f32 %v1028, %v1030
    %v1033 = vpack.c.bf16 %v1032, %v1031
    %s1034 = scalar_lea.vmem [#allocation7], 512
    %v1035 = vld [vmem:[%s1034] sm:$0xf]
    %v1036 = vld [vmem:[%s1034 + $0x4] sm:$0xf]
    %v1037 = vld [vmem:[%s1034 + $0x8] sm:$0xf]
    %v1038 = vld [vmem:[%s1034 + $0xc] sm:$0xf]
    %v1039 = vld [vmem:[%s1034 + $0x10] sm:$0xf]
    %v1040 = vld [vmem:[%s1034 + $0x14] sm:$0xf]
    %v1041 = vld [vmem:[%s1034 + $0x18] sm:$0xf]
    %v1042 = vld [vmem:[%s1034 + $0x1c] sm:$0xf]
    %v1043 = vld [vmem:[%s1034 + $0x20] sm:$0xf]
    %v1044 = vld [vmem:[%s1034 + $0x24] sm:$0xf]
    %v1045 = vld [vmem:[%s1034 + $0x28] sm:$0xf]
    %v1046 = vld [vmem:[%s1034 + $0x2c] sm:$0xf]
    %v1047 = vld [vmem:[%s1034 + $0x30] sm:$0xf]
    %v1048 = vld [vmem:[%s1034 + $0x34] sm:$0xf]
    %v1049 = vld [vmem:[%s1034 + $0x38] sm:$0xf]
    %v1050 = vld [vmem:[%s1034 + $0x3c] sm:$0xf]
    %v1051 = vld [vmem:[#allocation8 + $0xb] sm:$0x1]
    %v1052 = vperm.slane %v1051, 0
    %v1069 = vunpack.c.l.b16 %v1035
    %v1070 = vunpack.c.l.b16 %v1036
    %v1071 = vunpack.c.l.b16 %v1037
    %v1072 = vunpack.c.l.b16 %v1038
    %v1073 = vunpack.c.l.b16 %v1039
    %v1074 = vunpack.c.l.b16 %v1040
    %v1075 = vunpack.c.l.b16 %v1041
    %v1076 = vunpack.c.l.b16 %v1042
    %v1077 = vunpack.c.l.b16 %v1043
    %v1078 = vunpack.c.l.b16 %v1044
    %v1079 = vunpack.c.l.b16 %v1045
    %v1080 = vunpack.c.l.b16 %v1046
    %v1081 = vunpack.c.l.b16 %v1047
    %v1082 = vunpack.c.l.b16 %v1048
    %v1083 = vunpack.c.l.b16 %v1049
    %v1084 = vunpack.c.l.b16 %v1050
    %v1085 = vpack.c.b16 %v1070, %v1069
    %v1086 = vpack.c.b16 %v1072, %v1071
    %v1087 = vpack.c.b16 %v1074, %v1073
    %v1088 = vpack.c.b16 %v1076, %v1075
    %v1089 = vpack.c.b16 %v1078, %v1077
    %v1090 = vpack.c.b16 %v1080, %v1079
    %v1091 = vpack.c.b16 %v1082, %v1081
    %v1092 = vpack.c.b16 %v1084, %v1083
    %1101 = vmatpush.bf16.msra.mxu0 %v1092
    %1102 = vmatpush.bf16.msra.mxu0 %v1091
    %1103 = vmatpush.bf16.msra.mxu0 %v1090
    %1104 = vmatpush.bf16.msra.mxu0 %v1089
    %1105 = vmatpush.bf16.msra.mxu0 %v1088
    %1106 = vmatpush.bf16.msra.mxu0 %v1087
    %1107 = vmatpush.bf16.msra.mxu0 %v1086
    %1108 = vmatpush.bf16.msra.mxu0 %v1085
    %1109 = vmatmul.bf16.gmra.mxu0 %v1033
    %v1110 = vpop.f32.mrf.mxu0
    %v1111 = vadd.f32 %v1052, %v1110
    %v1112 = vpop.f32.mrf.mxu0
    %v1113 = vadd.f32 %v1052, %v1112
    %1114 = vdwg.mxu0
    %v1115 = vmul.f32 %v1111, 0.5
    %v1116 = vmul.f32 %v1113, 0.5
    %v1117 = vmul.f32 %v1111, 0.044715
    %v1118 = vmul.f32 %v1113, 0.044715
    %v1119 = vmul.f32 %v1117, %v1111
    %v1120 = vmul.f32 %v1118, %v1113
    %v1121 = vmul.f32 %v1119, %v1111
    %v1122 = vmul.f32 %v1120, %v1113
    %v1123 = vadd.f32 %v1111, %v1121
    %v1124 = vadd.f32 %v1113, %v1122
    %v1125 = vmul.f32 %v1123, 0.7978846
    %v1126 = vmul.f32 %v1124, 0.7978846
    %v1127 = vtanh.pop %v1125
    %v1128 = vtanh.pop %v1126
    %v1129 = vadd.f32 %v1127, 1.0
    %v1130 = vadd.f32 %v1128, 1.0
    %v1131 = vmul.f32 %v1115, %v1129
    %v1132 = vmul.f32 %v1116, %v1130
    %v1133 = vpack.c.bf16 %v1132, %v1131
    %s1134 = scalar_lea.vmem [#allocation7], 576
    %v1135 = vld [vmem:[%s1134] sm:$0xf]
    %v1136 = vld [vmem:[%s1134 + $0x4] sm:$0xf]
    %v1137 = vld [vmem:[%s1134 + $0x8] sm:$0xf]
    %v1138 = vld [vmem:[%s1134 + $0xc] sm:$0xf]
    %v1139 = vld [vmem:[%s1134 + $0x10] sm:$0xf]
    %v1140 = vld [vmem:[%s1134 + $0x14] sm:$0xf]
    %v1141 = vld [vmem:[%s1134 + $0x18] sm:$0xf]
    %v1142 = vld [vmem:[%s1134 + $0x1c] sm:$0xf]
    %v1143 = vld [vmem:[%s1134 + $0x20] sm:$0xf]
    %v1144 = vld [vmem:[%s1134 + $0x24] sm:$0xf]
    %v1145 = vld [vmem:[%s1134 + $0x28] sm:$0xf]
    %v1146 = vld [vmem:[%s1134 + $0x2c] sm:$0xf]
    %v1147 = vld [vmem:[%s1134 + $0x30] sm:$0xf]
    %v1148 = vld [vmem:[%s1134 + $0x34] sm:$0xf]
    %v1149 = vld [vmem:[%s1134 + $0x38] sm:$0xf]
    %v1150 = vld [vmem:[%s1134 + $0x3c] sm:$0xf]
    %v1151 = vld [vmem:[#allocation8 + $0xc] sm:$0x1]
    %v1152 = vperm.slane %v1151, 0
    %v1169 = vunpack.c.l.b16 %v1135
    %v1170 = vunpack.c.l.b16 %v1136
    %v1171 = vunpack.c.l.b16 %v1137
    %v1172 = vunpack.c.l.b16 %v1138
    %v1173 = vunpack.c.l.b16 %v1139
    %v1174 = vunpack.c.l.b16 %v1140
    %v1175 = vunpack.c.l.b16 %v1141
    %v1176 = vunpack.c.l.b16 %v1142
    %v1177 = vunpack.c.l.b16 %v1143
    %v1178 = vunpack.c.l.b16 %v1144
    %v1179 = vunpack.c.l.b16 %v1145
    %v1180 = vunpack.c.l.b16 %v1146
    %v1181 = vunpack.c.l.b16 %v1147
    %v1182 = vunpack.c.l.b16 %v1148
    %v1183 = vunpack.c.l.b16 %v1149
    %v1184 = vunpack.c.l.b16 %v1150
    %v1185 = vpack.c.b16 %v1170, %v1169
    %v1186 = vpack.c.b16 %v1172, %v1171
    %v1187 = vpack.c.b16 %v1174, %v1173
    %v1188 = vpack.c.b16 %v1176, %v1175
    %v1189 = vpack.c.b16 %v1178, %v1177
    %v1190 = vpack.c.b16 %v1180, %v1179
    %v1191 = vpack.c.b16 %v1182, %v1181
    %v1192 = vpack.c.b16 %v1184, %v1183
    %1201 = vmatpush.bf16.msra.mxu0 %v1192
    %1202 = vmatpush.bf16.msra.mxu0 %v1191
    %1203 = vmatpush.bf16.msra.mxu0 %v1190
    %1204 = vmatpush.bf16.msra.mxu0 %v1189
    %1205 = vmatpush.bf16.msra.mxu0 %v1188
    %1206 = vmatpush.bf16.msra.mxu0 %v1187
    %1207 = vmatpush.bf16.msra.mxu0 %v1186
    %1208 = vmatpush.bf16.msra.mxu0 %v1185
    %1209 = vmatmul.bf16.gmra.mxu0 %v1133
    %v1210 = vpop.f32.mrf.mxu0
    %v1211 = vadd.f32 %v1152, %v1210
    %v1212 = vpop.f32.mrf.mxu0
    %v1213 = vadd.f32 %v1152, %v1212
    %1214 = vdwg.mxu0
    %v1215 = vadd.f32 %v1211, %v1031
    %v1216 = vadd.f32 %v1213, %v1032
    %1217 = vadd.xlane.f32.xlu0 %v1215
    %v1218 = vpop.xlane.xlu0 %1217
    %1219 = vadd.xlane.f32.xlu0 %v1216
    %v1220 = vpop.xlane.xlu0 %1219
    %v1221 = vmul.f32 %v1218, 0.015625
    %v1222 = vmul.f32 %v1220, 0.015625
    %v1223 = vmul.f32 %v1215, %v1215
    %v1224 = vmul.f32 %v1216, %v1216
    %1225 = vadd.xlane.f32.xlu0 %v1223
    %v1226 = vpop.xlane.xlu0 %1225
    %1227 = vadd.xlane.f32.xlu0 %v1224
    %v1228 = vpop.xlane.xlu0 %1227
    %v1229 = vmul.f32 %v1226, 0.015625
    %v1230 = vmul.f32 %v1228, 0.015625
    %v1231 = vmul.f32 %v1221, %v1221
    %v1232 = vmul.f32 %v1222, %v1222
    %v1233 = vsub.f32 %v1229, %v1231
    %v1234 = vsub.f32 %v1230, %v1232
    %v1235 = vsub.f32 %v1215, %v1221
    %v1236 = vsub.f32 %v1216, %v1222
    %v1237 = vadd.f32 %v1233, 1e-05
    %v1238 = vadd.f32 %v1234, 1e-05
    %v1239 = vrsqrt.pop %v1237
    %v1240 = vmul.f32 %v1239, %v1237
    %v1241 = vmul.f32 %v1240, %v1239
    %v1242 = vmul.f32 0.5, %v1241
    %v1243 = vsub.f32 1.5, %v1242
    %v1244 = vmul.f32 %v1239, %v1243
    %vm1245 = vweird.f32 %v1237
    %vm1246 = vweird.f32 %v1239
    %vm1247 = vmor %vm1245, %vm1246
    %v1248 = vsel %vm1247, %v1239, %v1244
    %v1249 = vrsqrt.pop %v1238
    %v1250 = vmul.f32 %v1249, %v1238
    %v1251 = vmul.f32 %v1250, %v1249
    %v1252 = vmul.f32 0.5, %v1251
    %v1253 = vsub.f32 1.5, %v1252
    %v1254 = vmul.f32 %v1249, %v1253
    %vm1255 = vweird.f32 %v1238
    %vm1256 = vweird.f32 %v1249
    %vm1257 = vmor %vm1255, %vm1256
    %v1258 = vsel %vm1257, %v1249, %v1254
    %v1259 = vmul.f32 %v1235, %v1248
    %v1260 = vmul.f32 %v1236, %v1258
    %v1261 = vld [vmem:[#allocation8 + $0xd] sm:$0x1]
    %v1262 = vperm.slane %v1261, 0
    %v1263 = vmul.f32 %v1259, %v1262
    %v1264 = vmul.f32 %v1260, %v1262
    %v1265 = vld [vmem:[#allocation8 + $0xe] sm:$0x1]
    %v1266 = vperm.slane %v1265, 0
    %v1267 = vadd.f32 %v1263, %v1266
    %v1268 = vadd.f32 %v1264, %v1266
    %v1269 = vpack.c.bf16 %v1268, %v1267
    %s1270 = scalar_lea.vmem [#allocation7], 640
    %v1271 = vld [vmem:[%s1270] sm:$0xf]
    %v1272 = vld [vmem:[%s1270 + $0x4] sm:$0xf]
    %v1273 = vld [vmem:[%s1270 + $0x8] sm:$0xf]
    %v1274 = vld [vmem:[%s1270 + $0xc] sm:$0xf]
    %v1275 = vld [vmem:[%s1270 + $0x10] sm:$0xf]
    %v1276 = vld [vmem:[%s1270 + $0x14] sm:$0xf]
    %v1277 = vld [vmem:[%s1270 + $0x18] sm:$0xf]
    %v1278 = vld [vmem:[%s1270 + $0x1c] sm:$0xf]
    %v1279 = vld [vmem:[%s1270 + $0x20] sm:$0xf]
    %v1280 = vld [vmem:[%s1270 + $0x24] sm:$0xf]
    %v1281 = vld [vmem:[%s1270 + $0x28] sm:$0xf]
    %v1282 = vld [vmem:[%s1270 + $0x2c] sm:$0xf]
    %v1283 = vld [vmem:[%s1270 + $0x30] sm:$0xf]
    %v1284 = vld [vmem:[%s1270 + $0x34] sm:$0xf]
    %v1285 = vld [vmem:[%s1270 + $0x38] sm:$0xf]
    %v1286 = vld [vmem:[%s1270 + $0x3c] sm:$0xf]
    %v1287 = vld [vmem:[#allocation8 + $0xf] sm:$0x1]
    %v1288 = vperm.slane %v1287, 0
    %v1305 = vunpack.c.l.b16 %v1271
    %v1306 = vunpack.c.l.b16 %v1272
    %v1307 = vunpack.c.l.b16 %v1273
    %v1308 = vunpack.c.l.b16 %v1274
    %v1309 = vunpack.c.l.b16 %v1275
    %v1310 = vunpack.c.l.b16 %v1276
    %v1311 = vunpack.c.l.b16 %v1277
    %v1312 = vunpack.c.l.b16 %v1278
    %v1313 = vunpack.c.l.b16 %v1279
    %v1314 = vunpack.c.l.b16 %v1280
    %v1315 = vunpack.c.l.b16 %v1281
    %v1316 = vunpack.c.l.b16 %v1282
    %v1317 = vunpack.c.l.b16 %v1283
    %v1318 = vunpack.c.l.b16 %v1284
    %v1319 = vunpack.c.l.b16 %v1285
    %v1320 = vunpack.c.l.b16 %v1286
    %v1321 = vpack.c.b16 %v1306, %v1305
    %v1322 = vpack.c.b16 %v1308, %v1307
    %v1323 = vpack.c.b16 %v1310, %v1309
    %v1324 = vpack.c.b16 %v1312, %v1311
    %v1325 = vpack.c.b16 %v1314, %v1313
    %v1326 = vpack.c.b16 %v1316, %v1315
    %v1327 = vpack.c.b16 %v1318, %v1317
    %v1328 = vpack.c.b16 %v1320, %v1319
    %1337 = vmatpush.bf16.msra.mxu0 %v1328
    %1338 = vmatpush.bf16.msra.mxu0 %v1327
    %1339 = vmatpush.bf16.msra.mxu0 %v1326
    %1340 = vmatpush.bf16.msra.mxu0 %v1325
    %1341 = vmatpush.bf16.msra.mxu0 %v1324
    %1342 = vmatpush.bf16.msra.mxu0 %v1323
    %1343 = vmatpush.bf16.msra.mxu0 %v1322
    %1344 = vmatpush.bf16.msra.mxu0 %v1321
    %1345 = vmatmul.bf16.gmra.mxu0 %v1269
    %v1346 = vpop.f32.mrf.mxu0
    %v1347 = vadd.f32 %v1288, %v1346
    %v1348 = vpop.f32.mrf.mxu0
    %v1349 = vadd.f32 %v1288, %v1348
    %1350 = vdwg.mxu0
    %s1351 = scalar_lea.vmem [#allocation7], 768
    %v1352 = vld [vmem:[%s1351] sm:$0xf]
    %v1353 = vld [vmem:[%s1351 + $0x4] sm:$0xf]
    %v1354 = vld [vmem:[%s1351 + $0x8] sm:$0xf]
    %v1355 = vld [vmem:[%s1351 + $0xc] sm:$0xf]
    %v1356 = vld [vmem:[%s1351 + $0x10] sm:$0xf]
    %v1357 = vld [vmem:[%s1351 + $0x14] sm:$0xf]
    %v1358 = vld [vmem:[%s1351 + $0x18] sm:$0xf]
    %v1359 = vld [vmem:[%s1351 + $0x1c] sm:$0xf]
    %v1360 = vld [vmem:[%s1351 + $0x20] sm:$0xf]
    %v1361 = vld [vmem:[%s1351 + $0x24] sm:$0xf]
    %v1362 = vld [vmem:[%s1351 + $0x28] sm:$0xf]
    %v1363 = vld [vmem:[%s1351 + $0x2c] sm:$0xf]
    %v1364 = vld [vmem:[%s1351 + $0x30] sm:$0xf]
    %v1365 = vld [vmem:[%s1351 + $0x34] sm:$0xf]
    %v1366 = vld [vmem:[%s1351 + $0x38] sm:$0xf]
    %v1367 = vld [vmem:[%s1351 + $0x3c] sm:$0xf]
    %v1368 = vld [vmem:[#allocation8 + $0x11] sm:$0x1]
    %v1369 = vperm.slane %v1368, 0
    %v1386 = vunpack.c.l.b16 %v1352
    %v1387 = vunpack.c.l.b16 %v1353
    %v1388 = vunpack.c.l.b16 %v1354
    %v1389 = vunpack.c.l.b16 %v1355
    %v1390 = vunpack.c.l.b16 %v1356
    %v1391 = vunpack.c.l.b16 %v1357
    %v1392 = vunpack.c.l.b16 %v1358
    %v1393 = vunpack.c.l.b16 %v1359
    %v1394 = vunpack.c.l.b16 %v1360
    %v1395 = vunpack.c.l.b16 %v1361
    %v1396 = vunpack.c.l.b16 %v1362
    %v1397 = vunpack.c.l.b16 %v1363
    %v1398 = vunpack.c.l.b16 %v1364
    %v1399 = vunpack.c.l.b16 %v1365
    %v1400 = vunpack.c.l.b16 %v1366
    %v1401 = vunpack.c.l.b16 %v1367
    %v1402 = vpack.c.b16 %v1387, %v1386
    %v1403 = vpack.c.b16 %v1389, %v1388
    %v1404 = vpack.c.b16 %v1391, %v1390
    %v1405 = vpack.c.b16 %v1393, %v1392
    %v1406 = vpack.c.b16 %v1395, %v1394
    %v1407 = vpack.c.b16 %v1397, %v1396
    %v1408 = vpack.c.b16 %v1399, %v1398
    %v1409 = vpack.c.b16 %v1401, %v1400
    %1418 = vmatpush.bf16.msra.mxu0 %v1409
    %1419 = vmatpush.bf16.msra.mxu0 %v1408
    %1420 = vmatpush.bf16.msra.mxu0 %v1407
    %1421 = vmatpush.bf16.msra.mxu0 %v1406
    %1422 = vmatpush.bf16.msra.mxu0 %v1405
    %1423 = vmatpush.bf16.msra.mxu0 %v1404
    %1424 = vmatpush.bf16.msra.mxu0 %v1403
    %1425 = vmatpush.bf16.msra.mxu0 %v1402
    %1426 = vmatmul.bf16.gmra.mxu0 %v1269
    %v1427 = vpop.f32.mrf.mxu0
    %v1428 = vadd.f32 %v1369, %v1427
    %v1429 = vpop.f32.mrf.mxu0
    %v1430 = vadd.f32 %v1369, %v1429
    %1431 = vdwg.mxu0
    %s1432 = scalar_lea.vmem [#allocation7], 896
    %v1433 = vld [vmem:[%s1432] sm:$0xf]
    %v1434 = vld [vmem:[%s1432 + $0x4] sm:$0xf]
    %v1435 = vld [vmem:[%s1432 + $0x8] sm:$0xf]
    %v1436 = vld [vmem:[%s1432 + $0xc] sm:$0xf]
    %v1437 = vld [vmem:[%s1432 + $0x10] sm:$0xf]
    %v1438 = vld [vmem:[%s1432 + $0x14] sm:$0xf]
    %v1439 = vld [vmem:[%s1432 + $0x18] sm:$0xf]
    %v1440 = vld [vmem:[%s1432 + $0x1c] sm:$0xf]
    %v1441 = vld [vmem:[%s1432 + $0x20] sm:$0xf]
    %v1442 = vld [vmem:[%s1432 + $0x24] sm:$0xf]
    %v1443 = vld [vmem:[%s1432 + $0x28] sm:$0xf]
    %v1444 = vld [vmem:[%s1432 + $0x2c] sm:$0xf]
    %v1445 = vld [vmem:[%s1432 + $0x30] sm:$0xf]
    %v1446 = vld [vmem:[%s1432 + $0x34] sm:$0xf]
    %v1447 = vld [vmem:[%s1432 + $0x38] sm:$0xf]
    %v1448 = vld [vmem:[%s1432 + $0x3c] sm:$0xf]
    %v1449 = vld [vmem:[#allocation8 + $0x13] sm:$0x1]
    %v1450 = vperm.slane %v1449, 0
    %v1467 = vunpack.c.l.b16 %v1433
    %v1468 = vunpack.c.l.b16 %v1434
    %v1469 = vunpack.c.l.b16 %v1435
    %v1470 = vunpack.c.l.b16 %v1436
    %v1471 = vunpack.c.l.b16 %v1437
    %v1472 = vunpack.c.l.b16 %v1438
    %v1473 = vunpack.c.l.b16 %v1439
    %v1474 = vunpack.c.l.b16 %v1440
    %v1475 = vunpack.c.l.b16 %v1441
    %v1476 = vunpack.c.l.b16 %v1442
    %v1477 = vunpack.c.l.b16 %v1443
    %v1478 = vunpack.c.l.b16 %v1444
    %v1479 = vunpack.c.l.b16 %v1445
    %v1480 = vunpack.c.l.b16 %v1446
    %v1481 = vunpack.c.l.b16 %v1447
    %v1482 = vunpack.c.l.b16 %v1448
    %v1483 = vpack.c.b16 %v1468, %v1467
    %v1484 = vpack.c.b16 %v1470, %v1469
    %v1485 = vpack.c.b16 %v1472, %v1471
    %v1486 = vpack.c.b16 %v1474, %v1473
    %v1487 = vpack.c.b16 %v1476, %v1475
    %v1488 = vpack.c.b16 %v1478, %v1477
    %v1489 = vpack.c.b16 %v1480, %v1479
    %v1490 = vpack.c.b16 %v1482, %v1481
    %1499 = vmatpush.bf16.msra.mxu0 %v1490
    %1500 = vmatpush.bf16.msra.mxu0 %v1489
    %1501 = vmatpush.bf16.msra.mxu0 %v1488
    %1502 = vmatpush.bf16.msra.mxu0 %v1487
    %1503 = vmatpush.bf16.msra.mxu0 %v1486
    %1504 = vmatpush.bf16.msra.mxu0 %v1485
    %1505 = vmatpush.bf16.msra.mxu0 %v1484
    %1506 = vmatpush.bf16.msra.mxu0 %v1483
    %1507 = vmatmul.bf16.gmra.mxu0 %v1269
    %v1508 = vpop.f32.mrf.mxu0
    %v1509 = vadd.f32 %v1450, %v1508
    %v1510 = vpop.f32.mrf.mxu0
    %v1511 = vadd.f32 %v1450, %v1510
    %1512 = vdwg.mxu0
    %v1513 = vpack.c.bf16 %v1347, %v1347
    %v1514 = vpack.c.bf16 %v1428, %v1428
    %v1515 = vpack.c.bf16 %v1509, %v1509
    %1516 = vmatpush.bf16.xpose.msra.mxu0 0
    %1517 = vmatpush.bf16.xpose.msra.mxu0 0
    %1518 = vmatpush.bf16.xpose.msra.mxu0 0
    %1519 = vmatpush.bf16.xpose.msra.mxu0 0
    %1520 = vmatpush.bf16.xpose.msra.mxu0 0
    %1521 = vmatpush.bf16.xpose.msra.mxu0 0
    %1522 = vmatpush.bf16.xpose.msra.mxu0 0
    %1523 = vmatpush.bf16.xpose.msra.mxu0 %v1514
    %1524 = vmatmul.bf16.gmra.mxu0 %v1513
    %v1525 = vpop.f32.mrf.mxu0
    %v1526 = vadd.f32 %v136, %v1525
    %v1527 = vpop.f32.mrf.mxu0
    %1528 = vdwg.mxu0
    %v1529 = vsel %vm398, %v1526, -inf
    %1530 = vmax.xlane.f32.xlu0 %v1529
    %v1531 = vpop.xlane.xlu0 %1530
    %v1532 = vsub.f32 %v1526, %v1531
    %v1533 = vmul.f32 %v1532, 1.442695
    %v1534 = vpow.pop %v1533
    %v1535 = vsel %vm398, %v1534, 0.0
    %1536 = vadd.xlane.f32.xlu0 %v1535
    %v1537 = vpop.xlane.xlu0 %1536
    %v1538 = vrcp.pop %v1537
    %v1539 = vmul.f32 %v1534, %v1538
    %v1540 = vpack.c.bf16 %v1539, %v1539
    %v1542 = vsel %vm398, %v1540, 0
    %v1545 = vsel %vm414, %v1515, 0
    %1547 = vmatpush.bf16.msra.mxu0 0
    %1548 = vmatpush.bf16.msra.mxu0 0
    %1549 = vmatpush.bf16.msra.mxu0 0
    %1550 = vmatpush.bf16.msra.mxu0 0
    %1551 = vmatpush.bf16.msra.mxu0 0
    %1552 = vmatpush.bf16.msra.mxu0 0
    %1553 = vmatpush.bf16.msra.mxu0 0
    %1554 = vmatpush.bf16.msra.mxu0 %v1545
    %1555 = vmatmul.bf16.gmra.mxu0 %v1542
    %v1556 = vpop.f32.mrf.mxu0
    %v1557 = vadd.f32 0.0, %v1556
    %v1558 = vpop.f32.mrf.mxu0
    %1559 = vdwg.mxu0
    %v1560 = vpack.c.bf16 %v1349, %v1349
    %v1561 = vpack.c.bf16 %v1430, %v1430
    %v1562 = vpack.c.bf16 %v1511, %v1511
    %1563 = vmatpush.bf16.xpose.msra.mxu0 0
    %1564 = vmatpush.bf16.xpose.msra.mxu0 0
    %1565 = vmatpush.bf16.xpose.msra.mxu0 0
    %1566 = vmatpush.bf16.xpose.msra.mxu0 0
    %1567 = vmatpush.bf16.xpose.msra.mxu0 0
    %1568 = vmatpush.bf16.xpose.msra.mxu0 0
    %1569 = vmatpush.bf16.xpose.msra.mxu0 0
    %1570 = vmatpush.bf16.xpose.msra.mxu0 %v1561
    %1571 = vmatmul.bf16.gmra.mxu0 %v1560
    %v1572 = vpop.f32.mrf.mxu0
    %v1573 = vadd.f32 %v138, %v1572
    %v1574 = vpop.f32.mrf.mxu0
    %1575 = vdwg.mxu0
    %v1576 = vsel %vm398, %v1573, -inf
    %1577 = vmax.xlane.f32.xlu0 %v1576
    %v1578 = vpop.xlane.xlu0 %1577
    %v1579 = vsub.f32 %v1573, %v1578
    %v1580 = vmul.f32 %v1579, 1.442695
    %v1581 = vpow.pop %v1580
    %v1582 = vsel %vm398, %v1581, 0.0
    %1583 = vadd.xlane.f32.xlu0 %v1582
    %v1584 = vpop.xlane.xlu0 %1583
    %v1585 = vrcp.pop %v1584
    %v1586 = vmul.f32 %v1581, %v1585
    %v1587 = vpack.c.bf16 %v1586, %v1586
    %v1589 = vsel %vm398, %v1587, 0
    %v1592 = vsel %vm414, %v1562, 0
    %1594 = vmatpush.bf16.msra.mxu0 0
    %1595 = vmatpush.bf16.msra.mxu0 0
    %1596 = vmatpush.bf16.msra.mxu0 0
    %1597 = vmatpush.bf16.msra.mxu0 0
    %1598 = vmatpush.bf16.msra.mxu0 0
    %1599 = vmatpush.bf16.msra.mxu0 0
    %1600 = vmatpush.bf16.msra.mxu0 0
    %1601 = vmatpush.bf16.msra.mxu0 %v1592
    %1602 = vmatmul.bf16.gmra.mxu0 %v1589
    %v1603 = vpop.f32.mrf.mxu0
    %v1604 = vadd.f32 0.0, %v1603
    %v1605 = vpop.f32.mrf.mxu0
    %1606 = vdwg.mxu0
    %v1607 = vpack.c.bf16 %v1604, %v1557
    %s1608 = scalar_lea.vmem [#allocation7], 1024
    %v1609 = vld [vmem:[%s1608] sm:$0xf]
    %v1610 = vld [vmem:[%s1608 + $0x4] sm:$0xf]
    %v1611 = vld [vmem:[%s1608 + $0x8] sm:$0xf]
    %v1612 = vld [vmem:[%s1608 + $0xc] sm:$0xf]
    %v1613 = vld [vmem:[%s1608 + $0x10] sm:$0xf]
    %v1614 = vld [vmem:[%s1608 + $0x14] sm:$0xf]
    %v1615 = vld [vmem:[%s1608 + $0x18] sm:$0xf]
    %v1616 = vld [vmem:[%s1608 + $0x1c] sm:$0xf]
    %v1617 = vld [vmem:[%s1608 + $0x20] sm:$0xf]
    %v1618 = vld [vmem:[%s1608 + $0x24] sm:$0xf]
    %v1619 = vld [vmem:[%s1608 + $0x28] sm:$0xf]
    %v1620 = vld [vmem:[%s1608 + $0x2c] sm:$0xf]
    %v1621 = vld [vmem:[%s1608 + $0x30] sm:$0xf]
    %v1622 = vld [vmem:[%s1608 + $0x34] sm:$0xf]
    %v1623 = vld [vmem:[%s1608 + $0x38] sm:$0xf]
    %v1624 = vld [vmem:[%s1608 + $0x3c] sm:$0xf]
    %s1625 = scalar_lea.vmem [#allocation7], 704
    %v1626 = vld [vmem:[%s1625] sm:$0xf]
    %v1627 = vld [vmem:[%s1625 + $0x4] sm:$0xf]
    %v1628 = vld [vmem:[%s1625 + $0x8] sm:$0xf]
    %v1629 = vld [vmem:[%s1625 + $0xc] sm:$0xf]
    %v1630 = vld [vmem:[%s1625 + $0x10] sm:$0xf]
    %v1631 = vld [vmem:[%s1625 + $0x14] sm:$0xf]
    %v1632 = vld [vmem:[%s1625 + $0x18] sm:$0xf]
    %v1633 = vld [vmem:[%s1625 + $0x1c] sm:$0xf]
    %v1634 = vld [vmem:[%s1625 + $0x20] sm:$0xf]
    %v1635 = vld [vmem:[%s1625 + $0x24] sm:$0xf]
    %v1636 = vld [vmem:[%s1625 + $0x28] sm:$0xf]
    %v1637 = vld [vmem:[%s1625 + $0x2c] sm:$0xf]
    %v1638 = vld [vmem:[%s1625 + $0x30] sm:$0xf]
    %v1639 = vld [vmem:[%s1625 + $0x34] sm:$0xf]
    %v1640 = vld [vmem:[%s1625 + $0x38] sm:$0xf]
    %v1641 = vld [vmem:[%s1625 + $0x3c] sm:$0xf]
    %v1642 = vld [vmem:[#allocation8 + $0x10] sm:$0x1]
    %v1643 = vperm.slane %v1642, 0
    %v1660 = vunpack.c.l.b16 %v1626
    %v1661 = vunpack.c.l.b16 %v1627
    %v1662 = vunpack.c.l.b16 %v1628
    %v1663 = vunpack.c.l.b16 %v1629
    %v1664 = vunpack.c.l.b16 %v1630
    %v1665 = vunpack.c.l.b16 %v1631
    %v1666 = vunpack.c.l.b16 %v1632
    %v1667 = vunpack.c.l.b16 %v1633
    %v1668 = vunpack.c.l.b16 %v1634
    %v1669 = vunpack.c.l.b16 %v1635
    %v1670 = vunpack.c.l.b16 %v1636
    %v1671 = vunpack.c.l.b16 %v1637
    %v1672 = vunpack.c.l.b16 %v1638
    %v1673 = vunpack.c.l.b16 %v1639
    %v1674 = vunpack.c.l.b16 %v1640
    %v1675 = vunpack.c.l.b16 %v1641
    %v1676 = vpack.c.b16 %v1661, %v1660
    %v1677 = vpack.c.b16 %v1663, %v1662
    %v1678 = vpack.c.b16 %v1665, %v1664
    %v1679 = vpack.c.b16 %v1667, %v1666
    %v1680 = vpack.c.b16 %v1669, %v1668
    %v1681 = vpack.c.b16 %v1671, %v1670
    %v1682 = vpack.c.b16 %v1673, %v1672
    %v1683 = vpack.c.b16 %v1675, %v1674
    %1692 = vmatpush.bf16.msra.mxu0 %v1683
    %1693 = vmatpush.bf16.msra.mxu0 %v1682
    %1694 = vmatpush.bf16.msra.mxu0 %v1681
    %1695 = vmatpush.bf16.msra.mxu0 %v1680
    %1696 = vmatpush.bf16.msra.mxu0 %v1679
    %1697 = vmatpush.bf16.msra.mxu0 %v1678
    %1698 = vmatpush.bf16.msra.mxu0 %v1677
    %1699 = vmatpush.bf16.msra.mxu0 %v1676
    %1700 = vmatmul.bf16.gmra.mxu0 %v1269
    %v1701 = vpop.f32.mrf.mxu0
    %v1702 = vadd.f32 %v1643, %v1701
    %v1703 = vpop.f32.mrf.mxu0
    %v1704 = vadd.f32 %v1643, %v1703
    %1705 = vdwg.mxu0
    %s1706 = scalar_lea.vmem [#allocation7], 832
    %v1707 = vld [vmem:[%s1706] sm:$0xf]
    %v1708 = vld [vmem:[%s1706 + $0x4] sm:$0xf]
    %v1709 = vld [vmem:[%s1706 + $0x8] sm:$0xf]
    %v1710 = vld [vmem:[%s1706 + $0xc] sm:$0xf]
    %v1711 = vld [vmem:[%s1706 + $0x10] sm:$0xf]
    %v1712 = vld [vmem:[%s1706 + $0x14] sm:$0xf]
    %v1713 = vld [vmem:[%s1706 + $0x18] sm:$0xf]
    %v1714 = vld [vmem:[%s1706 + $0x1c] sm:$0xf]
    %v1715 = vld [vmem:[%s1706 + $0x20] sm:$0xf]
    %v1716 = vld [vmem:[%s1706 + $0x24] sm:$0xf]
    %v1717 = vld [vmem:[%s1706 + $0x28] sm:$0xf]
    %v1718 = vld [vmem:[%s1706 + $0x2c] sm:$0xf]
    %v1719 = vld [vmem:[%s1706 + $0x30] sm:$0xf]
    %v1720 = vld [vmem:[%s1706 + $0x34] sm:$0xf]
    %v1721 = vld [vmem:[%s1706 + $0x38] sm:$0xf]
    %v1722 = vld [vmem:[%s1706 + $0x3c] sm:$0xf]
    %v1723 = vld [vmem:[#allocation8 + $0x12] sm:$0x1]
    %v1724 = vperm.slane %v1723, 0
    %v1741 = vunpack.c.l.b16 %v1707
    %v1742 = vunpack.c.l.b16 %v1708
    %v1743 = vunpack.c.l.b16 %v1709
    %v1744 = vunpack.c.l.b16 %v1710
    %v1745 = vunpack.c.l.b16 %v1711
    %v1746 = vunpack.c.l.b16 %v1712
    %v1747 = vunpack.c.l.b16 %v1713
    %v1748 = vunpack.c.l.b16 %v1714
    %v1749 = vunpack.c.l.b16 %v1715
    %v1750 = vunpack.c.l.b16 %v1716
    %v1751 = vunpack.c.l.b16 %v1717
    %v1752 = vunpack.c.l.b16 %v1718
    %v1753 = vunpack.c.l.b16 %v1719
    %v1754 = vunpack.c.l.b16 %v1720
    %v1755 = vunpack.c.l.b16 %v1721
    %v1756 = vunpack.c.l.b16 %v1722
    %v1757 = vpack.c.b16 %v1742, %v1741
    %v1758 = vpack.c.b16 %v1744, %v1743
    %v1759 = vpack.c.b16 %v1746, %v1745
    %v1760 = vpack.c.b16 %v1748, %v1747
    %v1761 = vpack.c.b16 %v1750, %v1749
    %v1762 = vpack.c.b16 %v1752, %v1751
    %v1763 = vpack.c.b16 %v1754, %v1753
    %v1764 = vpack.c.b16 %v1756, %v1755
    %1773 = vmatpush.bf16.msra.mxu0 %v1764
    %1774 = vmatpush.bf16.msra.mxu0 %v1763
    %1775 = vmatpush.bf16.msra.mxu0 %v1762
    %1776 = vmatpush.bf16.msra.mxu0 %v1761
    %1777 = vmatpush.bf16.msra.mxu0 %v1760
    %1778 = vmatpush.bf16.msra.mxu0 %v1759
    %1779 = vmatpush.bf16.msra.mxu0 %v1758
    %1780 = vmatpush.bf16.msra.mxu0 %v1757
    %1781 = vmatmul.bf16.gmra.mxu0 %v1269
    %v1782 = vpop.f32.mrf.mxu0
    %v1783 = vadd.f32 %v1724, %v1782
    %v1784 = vpop.f32.mrf.mxu0
    %v1785 = vadd.f32 %v1724, %v1784
    %1786 = vdwg.mxu0
    %s1787 = scalar_lea.vmem [#allocation7], 960
    %v1788 = vld [vmem:[%s1787] sm:$0xf]
    %v1789 = vld [vmem:[%s1787 + $0x4] sm:$0xf]
    %v1790 = vld [vmem:[%s1787 + $0x8] sm:$0xf]
    %v1791 = vld [vmem:[%s1787 + $0xc] sm:$0xf]
    %v1792 = vld [vmem:[%s1787 + $0x10] sm:$0xf]
    %v1793 = vld [vmem:[%s1787 + $0x14] sm:$0xf]
    %v1794 = vld [vmem:[%s1787 + $0x18] sm:$0xf]
    %v1795 = vld [vmem:[%s1787 + $0x1c] sm:$0xf]
    %v1796 = vld [vmem:[%s1787 + $0x20] sm:$0xf]
    %v1797 = vld [vmem:[%s1787 + $0x24] sm:$0xf]
    %v1798 = vld [vmem:[%s1787 + $0x28] sm:$0xf]
    %v1799 = vld [vmem:[%s1787 + $0x2c] sm:$0xf]
    %v1800 = vld [vmem:[%s1787 + $0x30] sm:$0xf]
    %v1801 = vld [vmem:[%s1787 + $0x34] sm:$0xf]
    %v1802 = vld [vmem:[%s1787 + $0x38] sm:$0xf]
    %v1803 = vld [vmem:[%s1787 + $0x3c] sm:$0xf]
    %v1804 = vld [vmem:[#allocation8 + $0x14] sm:$0x1]
    %v1805 = vperm.slane %v1804, 0
    %v1822 = vunpack.c.l.b16 %v1788
    %v1823 = vunpack.c.l.b16 %v1789
    %v1824 = vunpack.c.l.b16 %v1790
    %v1825 = vunpack.c.l.b16 %v1791
    %v1826 = vunpack.c.l.b16 %v1792
    %v1827 = vunpack.c.l.b16 %v1793
    %v1828 = vunpack.c.l.b16 %v1794
    %v1829 = vunpack.c.l.b16 %v1795
    %v1830 = vunpack.c.l.b16 %v1796
    %v1831 = vunpack.c.l.b16 %v1797
    %v1832 = vunpack.c.l.b16 %v1798
    %v1833 = vunpack.c.l.b16 %v1799
    %v1834 = vunpack.c.l.b16 %v1800
    %v1835 = vunpack.c.l.b16 %v1801
    %v1836 = vunpack.c.l.b16 %v1802
    %v1837 = vunpack.c.l.b16 %v1803
    %v1838 = vpack.c.b16 %v1823, %v1822
    %v1839 = vpack.c.b16 %v1825, %v1824
    %v1840 = vpack.c.b16 %v1827, %v1826
    %v1841 = vpack.c.b16 %v1829, %v1828
    %v1842 = vpack.c.b16 %v1831, %v1830
    %v1843 = vpack.c.b16 %v1833, %v1832
    %v1844 = vpack.c.b16 %v1835, %v1834
    %v1845 = vpack.c.b16 %v1837, %v1836
    %1854 = vmatpush.bf16.msra.mxu0 %v1845
    %1855 = vmatpush.bf16.msra.mxu0 %v1844
    %1856 = vmatpush.bf16.msra.mxu0 %v1843
    %1857 = vmatpush.bf16.msra.mxu0 %v1842
    %1858 = vmatpush.bf16.msra.mxu0 %v1841
    %1859 = vmatpush.bf16.msra.mxu0 %v1840
    %1860 = vmatpush.bf16.msra.mxu0 %v1839
    %1861 = vmatpush.bf16.msra.mxu0 %v1838
    %1862 = vmatmul.bf16.gmra.mxu0 %v1269
    %v1863 = vpop.f32.mrf.mxu0
    %v1864 = vadd.f32 %v1805, %v1863
    %v1865 = vpop.f32.mrf.mxu0
    %v1866 = vadd.f32 %v1805, %v1865
    %1867 = vdwg.mxu0
    %v1868 = vpack.c.bf16 %v1702, %v1702
    %v1869 = vpack.c.bf16 %v1783, %v1783
    %v1870 = vpack.c.bf16 %v1864, %v1864
    %1871 = vmatpush.bf16.xpose.msra.mxu0 0
    %1872 = vmatpush.bf16.xpose.msra.mxu0 0
    %1873 = vmatpush.bf16.xpose.msra.mxu0 0
    %1874 = vmatpush.bf16.xpose.msra.mxu0 0
    %1875 = vmatpush.bf16.xpose.msra.mxu0 0
    %1876 = vmatpush.bf16.xpose.msra.mxu0 0
    %1877 = vmatpush.bf16.xpose.msra.mxu0 0
    %1878 = vmatpush.bf16.xpose.msra.mxu0 %v1869
    %1879 = vmatmul.bf16.gmra.mxu0 %v1868
    %v1880 = vpop.f32.mrf.mxu0
    %v1881 = vadd.f32 %v136, %v1880
    %v1882 = vpop.f32.mrf.mxu0
    %1883 = vdwg.mxu0
    %v1884 = vsel %vm398, %v1881, -inf
    %1885 = vmax.xlane.f32.xlu0 %v1884
    %v1886 = vpop.xlane.xlu0 %1885
    %v1887 = vsub.f32 %v1881, %v1886
    %v1888 = vmul.f32 %v1887, 1.442695
    %v1889 = vpow.pop %v1888
    %v1890 = vsel %vm398, %v1889, 0.0
    %1891 = vadd.xlane.f32.xlu0 %v1890
    %v1892 = vpop.xlane.xlu0 %1891
    %v1893 = vrcp.pop %v1892
    %v1894 = vmul.f32 %v1889, %v1893
    %v1895 = vpack.c.bf16 %v1894, %v1894
    %v1897 = vsel %vm398, %v1895, 0
    %v1900 = vsel %vm414, %v1870, 0
    %1902 = vmatpush.bf16.msra.mxu0 0
    %1903 = vmatpush.bf16.msra.mxu0 0
    %1904 = vmatpush.bf16.msra.mxu0 0
    %1905 = vmatpush.bf16.msra.mxu0 0
    %1906 = vmatpush.bf16.msra.mxu0 0
    %1907 = vmatpush.bf16.msra.mxu0 0
    %1908 = vmatpush.bf16.msra.mxu0 0
    %1909 = vmatpush.bf16.msra.mxu0 %v1900
    %1910 = vmatmul.bf16.gmra.mxu0 %v1897
    %v1911 = vpop.f32.mrf.mxu0
    %v1912 = vadd.f32 0.0, %v1911
    %v1913 = vpop.f32.mrf.mxu0
    %1914 = vdwg.mxu0
    %v1915 = vpack.c.bf16 %v1704, %v1704
    %v1916 = vpack.c.bf16 %v1785, %v1785
    %v1917 = vpack.c.bf16 %v1866, %v1866
    %1918 = vmatpush.bf16.xpose.msra.mxu0 0
    %1919 = vmatpush.bf16.xpose.msra.mxu0 0
    %1920 = vmatpush.bf16.xpose.msra.mxu0 0
    %1921 = vmatpush.bf16.xpose.msra.mxu0 0
    %1922 = vmatpush.bf16.xpose.msra.mxu0 0
    %1923 = vmatpush.bf16.xpose.msra.mxu0 0
    %1924 = vmatpush.bf16.xpose.msra.mxu0 0
    %1925 = vmatpush.bf16.xpose.msra.mxu0 %v1916
    %1926 = vmatmul.bf16.gmra.mxu0 %v1915
    %v1927 = vpop.f32.mrf.mxu0
    %v1928 = vadd.f32 %v138, %v1927
    %v1929 = vpop.f32.mrf.mxu0
    %1930 = vdwg.mxu0
    %v1931 = vsel %vm398, %v1928, -inf
    %1932 = vmax.xlane.f32.xlu0 %v1931
    %v1933 = vpop.xlane.xlu0 %1932
    %v1934 = vsub.f32 %v1928, %v1933
    %v1935 = vmul.f32 %v1934, 1.442695
    %v1936 = vpow.pop %v1935
    %v1937 = vsel %vm398, %v1936, 0.0
    %1938 = vadd.xlane.f32.xlu0 %v1937
    %v1939 = vpop.xlane.xlu0 %1938
    %v1940 = vrcp.pop %v1939
    %v1941 = vmul.f32 %v1936, %v1940
    %v1942 = vpack.c.bf16 %v1941, %v1941
    %v1944 = vsel %vm398, %v1942, 0
    %v1947 = vsel %vm414, %v1917, 0
    %1949 = vmatpush.bf16.msra.mxu0 0
    %1950 = vmatpush.bf16.msra.mxu0 0
    %1951 = vmatpush.bf16.msra.mxu0 0
    %1952 = vmatpush.bf16.msra.mxu0 0
    %1953 = vmatpush.bf16.msra.mxu0 0
    %1954 = vmatpush.bf16.msra.mxu0 0
    %1955 = vmatpush.bf16.msra.mxu0 0
    %1956 = vmatpush.bf16.msra.mxu0 %v1947
    %1957 = vmatmul.bf16.gmra.mxu0 %v1944
    %v1958 = vpop.f32.mrf.mxu0
    %v1959 = vadd.f32 0.0, %v1958
    %v1960 = vpop.f32.mrf.mxu0
    %1961 = vdwg.mxu0
    %v1962 = vpack.c.bf16 %v1959, %v1912
    %s1963 = scalar_lea.vmem [#allocation7], 1088
    %v1964 = vld [vmem:[%s1963] sm:$0xf]
    %v1965 = vld [vmem:[%s1963 + $0x4] sm:$0xf]
    %v1966 = vld [vmem:[%s1963 + $0x8] sm:$0xf]
    %v1967 = vld [vmem:[%s1963 + $0xc] sm:$0xf]
    %v1968 = vld [vmem:[%s1963 + $0x10] sm:$0xf]
    %v1969 = vld [vmem:[%s1963 + $0x14] sm:$0xf]
    %v1970 = vld [vmem:[%s1963 + $0x18] sm:$0xf]
    %v1971 = vld [vmem:[%s1963 + $0x1c] sm:$0xf]
    %v1972 = vld [vmem:[%s1963 + $0x20] sm:$0xf]
    %v1973 = vld [vmem:[%s1963 + $0x24] sm:$0xf]
    %v1974 = vld [vmem:[%s1963 + $0x28] sm:$0xf]
    %v1975 = vld [vmem:[%s1963 + $0x2c] sm:$0xf]
    %v1976 = vld [vmem:[%s1963 + $0x30] sm:$0xf]
    %v1977 = vld [vmem:[%s1963 + $0x34] sm:$0xf]
    %v1978 = vld [vmem:[%s1963 + $0x38] sm:$0xf]
    %v1979 = vld [vmem:[%s1963 + $0x3c] sm:$0xf]
    %v1996 = vunpack.c.l.b16 %v1964
    %v1997 = vunpack.c.l.b16 %v1965
    %v1998 = vunpack.c.l.b16 %v1966
    %v1999 = vunpack.c.l.b16 %v1967
    %v2000 = vunpack.c.l.b16 %v1968
    %v2001 = vunpack.c.l.b16 %v1969
    %v2002 = vunpack.c.l.b16 %v1970
    %v2003 = vunpack.c.l.b16 %v1971
    %v2004 = vunpack.c.l.b16 %v1972
    %v2005 = vunpack.c.l.b16 %v1973
    %v2006 = vunpack.c.l.b16 %v1974
    %v2007 = vunpack.c.l.b16 %v1975
    %v2008 = vunpack.c.l.b16 %v1976
    %v2009 = vunpack.c.l.b16 %v1977
    %v2010 = vunpack.c.l.b16 %v1978
    %v2011 = vunpack.c.l.b16 %v1979
    %v2012 = vpack.c.b16 %v1997, %v1996
    %v2013 = vpack.c.b16 %v1999, %v1998
    %v2014 = vpack.c.b16 %v2001, %v2000
    %v2015 = vpack.c.b16 %v2003, %v2002
    %v2016 = vpack.c.b16 %v2005, %v2004
    %v2017 = vpack.c.b16 %v2007, %v2006
    %v2018 = vpack.c.b16 %v2009, %v2008
    %v2019 = vpack.c.b16 %v2011, %v2010
    %2028 = vmatpush.bf16.msra.mxu0 %v2019
    %2029 = vmatpush.bf16.msra.mxu0 %v2018
    %2030 = vmatpush.bf16.msra.mxu0 %v2017
    %2031 = vmatpush.bf16.msra.mxu0 %v2016
    %2032 = vmatpush.bf16.msra.mxu0 %v2015
    %2033 = vmatpush.bf16.msra.mxu0 %v2014
    %2034 = vmatpush.bf16.msra.mxu0 %v2013
    %2035 = vmatpush.bf16.msra.mxu0 %v2012
    %2036 = vmatmul.bf16.gmra.mxu0 %v1962
    %v2037 = vpop.f32.mrf.mxu0
    %v2038 = vadd.f32 0.0, %v2037
    %v2039 = vpop.f32.mrf.mxu0
    %v2040 = vadd.f32 0.0, %v2039
    %2041 = vdwg.mxu0
    %v2058 = vunpack.c.l.b16 %v1609
    %v2059 = vunpack.c.l.b16 %v1610
    %v2060 = vunpack.c.l.b16 %v1611
    %v2061 = vunpack.c.l.b16 %v1612
    %v2062 = vunpack.c.l.b16 %v1613
    %v2063 = vunpack.c.l.b16 %v1614
    %v2064 = vunpack.c.l.b16 %v1615
    %v2065 = vunpack.c.l.b16 %v1616
    %v2066 = vunpack.c.l.b16 %v1617
    %v2067 = vunpack.c.l.b16 %v1618
    %v2068 = vunpack.c.l.b16 %v1619
    %v2069 = vunpack.c.l.b16 %v1620
    %v2070 = vunpack.c.l.b16 %v1621
    %v2071 = vunpack.c.l.b16 %v1622
    %v2072 = vunpack.c.l.b16 %v1623
    %v2073 = vunpack.c.l.b16 %v1624
    %v2074 = vpack.c.b16 %v2059, %v2058
    %v2075 = vpack.c.b16 %v2061, %v2060
    %v2076 = vpack.c.b16 %v2063, %v2062
    %v2077 = vpack.c.b16 %v2065, %v2064
    %v2078 = vpack.c.b16 %v2067, %v2066
    %v2079 = vpack.c.b16 %v2069, %v2068
    %v2080 = vpack.c.b16 %v2071, %v2070
    %v2081 = vpack.c.b16 %v2073, %v2072
    %2090 = vmatpush.bf16.msra.mxu0 %v2081
    %2091 = vmatpush.bf16.msra.mxu0 %v2080
    %2092 = vmatpush.bf16.msra.mxu0 %v2079
    %2093 = vmatpush.bf16.msra.mxu0 %v2078
    %2094 = vmatpush.bf16.msra.mxu0 %v2077
    %2095 = vmatpush.bf16.msra.mxu0 %v2076
    %2096 = vmatpush.bf16.msra.mxu0 %v2075
    %2097 = vmatpush.bf16.msra.mxu0 %v2074
    %2098 = vmatmul.bf16.gmra.mxu0 %v1607
    %v2099 = vpop.f32.mrf.mxu0
    %v2100 = vadd.f32 %v2038, %v2099
    %v2101 = vpop.f32.mrf.mxu0
    %v2102 = vadd.f32 %v2040, %v2101
    %2103 = vdwg.mxu0
    %v2104 = vld [vmem:[#allocation8 + $0x15] sm:$0x1]
    %v2105 = vperm.slane %v2104, 0
    %v2106 = vadd.f32 %v2100, %v2105
    %v2107 = vadd.f32 %v2102, %v2105
    %v2108 = vadd.f32 %v2106, %v1267
    %v2109 = vadd.f32 %v2107, %v1268
    %2110 = vadd.xlane.f32.xlu0 %v2108
    %v2111 = vpop.xlane.xlu0 %2110
    %2112 = vadd.xlane.f32.xlu0 %v2109
    %v2113 = vpop.xlane.xlu0 %2112
    %v2114 = vmul.f32 %v2111, 0.015625
    %v2115 = vmul.f32 %v2113, 0.015625
    %v2116 = vmul.f32 %v2108, %v2108
    %v2117 = vmul.f32 %v2109, %v2109
    %2118 = vadd.xlane.f32.xlu0 %v2116
    %v2119 = vpop.xlane.xlu0 %2118
    %2120 = vadd.xlane.f32.xlu0 %v2117
    %v2121 = vpop.xlane.xlu0 %2120
    %v2122 = vmul.f32 %v2119, 0.015625
    %v2123 = vmul.f32 %v2121, 0.015625
    %v2124 = vmul.f32 %v2114, %v2114
    %v2125 = vmul.f32 %v2115, %v2115
    %v2126 = vsub.f32 %v2122, %v2124
    %v2127 = vsub.f32 %v2123, %v2125
    %v2128 = vsub.f32 %v2108, %v2114
    %v2129 = vsub.f32 %v2109, %v2115
    %v2130 = vadd.f32 %v2126, 1e-05
    %v2131 = vadd.f32 %v2127, 1e-05
    %v2132 = vrsqrt.pop %v2130
    %v2133 = vmul.f32 %v2132, %v2130
    %v2134 = vmul.f32 %v2133, %v2132
    %v2135 = vmul.f32 0.5, %v2134
    %v2136 = vsub.f32 1.5, %v2135
    %v2137 = vmul.f32 %v2132, %v2136
    %vm2138 = vweird.f32 %v2130
    %vm2139 = vweird.f32 %v2132
    %vm2140 = vmor %vm2138, %vm2139
    %v2141 = vsel %vm2140, %v2132, %v2137
    %v2142 = vrsqrt.pop %v2131
    %v2143 = vmul.f32 %v2142, %v2131
    %v2144 = vmul.f32 %v2143, %v2142
    %v2145 = vmul.f32 0.5, %v2144
    %v2146 = vsub.f32 1.5, %v2145
    %v2147 = vmul.f32 %v2142, %v2146
    %vm2148 = vweird.f32 %v2131
    %vm2149 = vweird.f32 %v2142
    %vm2150 = vmor %vm2148, %vm2149
    %v2151 = vsel %vm2150, %v2142, %v2147
    %v2152 = vmul.f32 %v2128, %v2141
    %v2153 = vmul.f32 %v2129, %v2151
    %v2154 = vld [vmem:[#allocation8 + $0x16] sm:$0x1]
    %v2155 = vperm.slane %v2154, 0
    %v2156 = vmul.f32 %v2152, %v2155
    %v2157 = vmul.f32 %v2153, %v2155
    %v2158 = vld [vmem:[#allocation8 + $0x17] sm:$0x1]
    %v2159 = vperm.slane %v2158, 0
    %v2160 = vadd.f32 %v2156, %v2159
    %v2161 = vadd.f32 %v2157, %v2159
    %v2162 = vpack.c.bf16 %v2161, %v2160
    %s2163 = scalar_lea.vmem [#allocation7], 1152
    %v2164 = vld [vmem:[%s2163] sm:$0xf]
    %v2165 = vld [vmem:[%s2163 + $0x4] sm:$0xf]
    %v2166 = vld [vmem:[%s2163 + $0x8] sm:$0xf]
    %v2167 = vld [vmem:[%s2163 + $0xc] sm:$0xf]
    %v2168 = vld [vmem:[%s2163 + $0x10] sm:$0xf]
    %v2169 = vld [vmem:[%s2163 + $0x14] sm:$0xf]
    %v2170 = vld [vmem:[%s2163 + $0x18] sm:$0xf]
    %v2171 = vld [vmem:[%s2163 + $0x1c] sm:$0xf]
    %v2172 = vld [vmem:[%s2163 + $0x20] sm:$0xf]
    %v2173 = vld [vmem:[%s2163 + $0x24] sm:$0xf]
    %v2174 = vld [vmem:[%s2163 + $0x28] sm:$0xf]
    %v2175 = vld [vmem:[%s2163 + $0x2c] sm:$0xf]
    %v2176 = vld [vmem:[%s2163 + $0x30] sm:$0xf]
    %v2177 = vld [vmem:[%s2163 + $0x34] sm:$0xf]
    %v2178 = vld [vmem:[%s2163 + $0x38] sm:$0xf]
    %v2179 = vld [vmem:[%s2163 + $0x3c] sm:$0xf]
    %v2180 = vld [vmem:[#allocation8 + $0x18] sm:$0x1]
    %v2181 = vperm.slane %v2180, 0
    %v2198 = vunpack.c.l.b16 %v2164
    %v2199 = vunpack.c.l.b16 %v2165
    %v2200 = vunpack.c.l.b16 %v2166
    %v2201 = vunpack.c.l.b16 %v2167
    %v2202 = vunpack.c.l.b16 %v2168
    %v2203 = vunpack.c.l.b16 %v2169
    %v2204 = vunpack.c.l.b16 %v2170
    %v2205 = vunpack.c.l.b16 %v2171
    %v2206 = vunpack.c.l.b16 %v2172
    %v2207 = vunpack.c.l.b16 %v2173
    %v2208 = vunpack.c.l.b16 %v2174
    %v2209 = vunpack.c.l.b16 %v2175
    %v2210 = vunpack.c.l.b16 %v2176
    %v2211 = vunpack.c.l.b16 %v2177
    %v2212 = vunpack.c.l.b16 %v2178
    %v2213 = vunpack.c.l.b16 %v2179
    %v2214 = vpack.c.b16 %v2199, %v2198
    %v2215 = vpack.c.b16 %v2201, %v2200
    %v2216 = vpack.c.b16 %v2203, %v2202
    %v2217 = vpack.c.b16 %v2205, %v2204
    %v2218 = vpack.c.b16 %v2207, %v2206
    %v2219 = vpack.c.b16 %v2209, %v2208
    %v2220 = vpack.c.b16 %v2211, %v2210
    %v2221 = vpack.c.b16 %v2213, %v2212
    %2230 = vmatpush.bf16.msra.mxu0 %v2221
    %2231 = vmatpush.bf16.msra.mxu0 %v2220
    %2232 = vmatpush.bf16.msra.mxu0 %v2219
    %2233 = vmatpush.bf16.msra.mxu0 %v2218
    %2234 = vmatpush.bf16.msra.mxu0 %v2217
    %2235 = vmatpush.bf16.msra.mxu0 %v2216
    %2236 = vmatpush.bf16.msra.mxu0 %v2215
    %2237 = vmatpush.bf16.msra.mxu0 %v2214
    %2238 = vmatmul.bf16.gmra.mxu0 %v2162
    %v2239 = vpop.f32.mrf.mxu0
    %v2240 = vadd.f32 %v2181, %v2239
    %v2241 = vpop.f32.mrf.mxu0
    %v2242 = vadd.f32 %v2181, %v2241
    %2243 = vdwg.mxu0
    %v2244 = vmul.f32 %v2240, 0.5
    %v2245 = vmul.f32 %v2242, 0.5
    %v2246 = vmul.f32 %v2240, 0.044715
    %v2247 = vmul.f32 %v2242, 0.044715
    %v2248 = vmul.f32 %v2246, %v2240
    %v2249 = vmul.f32 %v2247, %v2242
    %v2250 = vmul.f32 %v2248, %v2240
    %v2251 = vmul.f32 %v2249, %v2242
    %v2252 = vadd.f32 %v2240, %v2250
    %v2253 = vadd.f32 %v2242, %v2251
    %v2254 = vmul.f32 %v2252, 0.7978846
    %v2255 = vmul.f32 %v2253, 0.7978846
    %v2256 = vtanh.pop %v2254
    %v2257 = vtanh.pop %v2255
    %v2258 = vadd.f32 %v2256, 1.0
    %v2259 = vadd.f32 %v2257, 1.0
    %v2260 = vmul.f32 %v2244, %v2258
    %v2261 = vmul.f32 %v2245, %v2259
    %v2262 = vpack.c.bf16 %v2261, %v2260
    %s2263 = scalar_lea.vmem [#allocation7], 1216
    %v2264 = vld [vmem:[%s2263] sm:$0xf]
    %v2265 = vld [vmem:[%s2263 + $0x4] sm:$0xf]
    %v2266 = vld [vmem:[%s2263 + $0x8] sm:$0xf]
    %v2267 = vld [vmem:[%s2263 + $0xc] sm:$0xf]
    %v2268 = vld [vmem:[%s2263 + $0x10] sm:$0xf]
    %v2269 = vld [vmem:[%s2263 + $0x14] sm:$0xf]
    %v2270 = vld [vmem:[%s2263 + $0x18] sm:$0xf]
    %v2271 = vld [vmem:[%s2263 + $0x1c] sm:$0xf]
    %v2272 = vld [vmem:[%s2263 + $0x20] sm:$0xf]
    %v2273 = vld [vmem:[%s2263 + $0x24] sm:$0xf]
    %v2274 = vld [vmem:[%s2263 + $0x28] sm:$0xf]
    %v2275 = vld [vmem:[%s2263 + $0x2c] sm:$0xf]
    %v2276 = vld [vmem:[%s2263 + $0x30] sm:$0xf]
    %v2277 = vld [vmem:[%s2263 + $0x34] sm:$0xf]
    %v2278 = vld [vmem:[%s2263 + $0x38] sm:$0xf]
    %v2279 = vld [vmem:[%s2263 + $0x3c] sm:$0xf]
    %v2280 = vld [vmem:[#allocation8 + $0x19] sm:$0x1]
    %v2281 = vperm.slane %v2280, 0
    %v2298 = vunpack.c.l.b16 %v2264
    %v2299 = vunpack.c.l.b16 %v2265
    %v2300 = vunpack.c.l.b16 %v2266
    %v2301 = vunpack.c.l.b16 %v2267
    %v2302 = vunpack.c.l.b16 %v2268
    %v2303 = vunpack.c.l.b16 %v2269
    %v2304 = vunpack.c.l.b16 %v2270
    %v2305 = vunpack.c.l.b16 %v2271
    %v2306 = vunpack.c.l.b16 %v2272
    %v2307 = vunpack.c.l.b16 %v2273
    %v2308 = vunpack.c.l.b16 %v2274
    %v2309 = vunpack.c.l.b16 %v2275
    %v2310 = vunpack.c.l.b16 %v2276
    %v2311 = vunpack.c.l.b16 %v2277
    %v2312 = vunpack.c.l.b16 %v2278
    %v2313 = vunpack.c.l.b16 %v2279
    %v2314 = vpack.c.b16 %v2299, %v2298
    %v2315 = vpack.c.b16 %v2301, %v2300
    %v2316 = vpack.c.b16 %v2303, %v2302
    %v2317 = vpack.c.b16 %v2305, %v2304
    %v2318 = vpack.c.b16 %v2307, %v2306
    %v2319 = vpack.c.b16 %v2309, %v2308
    %v2320 = vpack.c.b16 %v2311, %v2310
    %v2321 = vpack.c.b16 %v2313, %v2312
    %2330 = vmatpush.bf16.msra.mxu0 %v2321
    %2331 = vmatpush.bf16.msra.mxu0 %v2320
    %2332 = vmatpush.bf16.msra.mxu0 %v2319
    %2333 = vmatpush.bf16.msra.mxu0 %v2318
    %2334 = vmatpush.bf16.msra.mxu0 %v2317
    %2335 = vmatpush.bf16.msra.mxu0 %v2316
    %2336 = vmatpush.bf16.msra.mxu0 %v2315
    %2337 = vmatpush.bf16.msra.mxu0 %v2314
    %2338 = vmatmul.bf16.gmra.mxu0 %v2262
    %v2339 = vpop.f32.mrf.mxu0
    %v2340 = vadd.f32 %v2281, %v2339
    %v2341 = vpop.f32.mrf.mxu0
    %v2342 = vadd.f32 %v2281, %v2341
    %2343 = vdwg.mxu0
    %v2344 = vadd.f32 %v2340, %v2160
    %v2345 = vadd.f32 %v2342, %v2161
    %2346 = vadd.xlane.f32.xlu0 %v2344
    %v2347 = vpop.xlane.xlu0 %2346
    %2348 = vadd.xlane.f32.xlu0 %v2345
    %v2349 = vpop.xlane.xlu0 %2348
    %v2350 = vmul.f32 %v2347, 0.015625
    %v2351 = vmul.f32 %v2349, 0.015625
    %v2352 = vmul.f32 %v2344, %v2344
    %v2353 = vmul.f32 %v2345, %v2345
    %2354 = vadd.xlane.f32.xlu0 %v2352
    %v2355 = vpop.xlane.xlu0 %2354
    %2356 = vadd.xlane.f32.xlu0 %v2353
    %v2357 = vpop.xlane.xlu0 %2356
    %v2358 = vmul.f32 %v2355, 0.015625
    %v2359 = vmul.f32 %v2357, 0.015625
    %v2360 = vmul.f32 %v2350, %v2350
    %v2361 = vmul.f32 %v2351, %v2351
    %v2362 = vsub.f32 %v2358, %v2360
    %v2363 = vsub.f32 %v2359, %v2361
    %v2364 = vsub.f32 %v2344, %v2350
    %v2365 = vsub.f32 %v2345, %v2351
    %v2366 = vadd.f32 %v2362, 1e-05
    %v2367 = vadd.f32 %v2363, 1e-05
    %v2368 = vrsqrt.pop %v2366
    %v2369 = vmul.f32 %v2368, %v2366
    %v2370 = vmul.f32 %v2369, %v2368
    %v2371 = vmul.f32 0.5, %v2370
    %v2372 = vsub.f32 1.5, %v2371
    %v2373 = vmul.f32 %v2368, %v2372
    %vm2374 = vweird.f32 %v2366
    %vm2375 = vweird.f32 %v2368
    %vm2376 = vmor %vm2374, %vm2375
    %v2377 = vsel %vm2376, %v2368, %v2373
    %v2378 = vrsqrt.pop %v2367
    %v2379 = vmul.f32 %v2378, %v2367
    %v2380 = vmul.f32 %v2379, %v2378
    %v2381 = vmul.f32 0.5, %v2380
    %v2382 = vsub.f32 1.5, %v2381
    %v2383 = vmul.f32 %v2378, %v2382
    %vm2384 = vweird.f32 %v2367
    %vm2385 = vweird.f32 %v2378
    %vm2386 = vmor %vm2384, %vm2385
    %v2387 = vsel %vm2386, %v2378, %v2383
    %v2388 = vmul.f32 %v2364, %v2377
    %v2389 = vmul.f32 %v2365, %v2387
    %v2390 = vld [vmem:[#allocation8 + $0x1a] sm:$0x1]
    %v2391 = vperm.slane %v2390, 0
    %v2392 = vmul.f32 %v2388, %v2391
    %v2393 = vmul.f32 %v2389, %v2391
    %v2394 = vld [vmem:[#allocation8 + $0x1b] sm:$0x1]
    %v2395 = vperm.slane %v2394, 0
    %v2396 = vadd.f32 %v2392, %v2395
    %v2397 = vadd.f32 %v2393, %v2395
    %v2399 = vrot.slane %v2397, 7
    %vm2401 = vcmask 1040384
    %v2402 = vsel %vm2401, %v2396, %v2399
    %v2403 = vpack.c.bf16 %v2402, %v2402
    %s2404 = scalar_lea.vmem [#allocation7], 1280
    %v2405 = vld [vmem:[%s2404] sm:$0xf]
    %v2406 = vld [vmem:[%s2404 + $0x4] sm:$0xf]
    %v2407 = vld [vmem:[%s2404 + $0x8] sm:$0xf]
    %v2408 = vld [vmem:[%s2404 + $0xc] sm:$0xf]
    %v2409 = vld [vmem:[%s2404 + $0x10] sm:$0xf]
    %v2410 = vld [vmem:[%s2404 + $0x14] sm:$0xf]
    %v2411 = vld [vmem:[%s2404 + $0x18] sm:$0xf]
    %v2412 = vld [vmem:[%s2404 + $0x1c] sm:$0xf]
    %v2413 = vld [vmem:[%s2404 + $0x20] sm:$0xf]
    %v2414 = vld [vmem:[%s2404 + $0x24] sm:$0xf]
    %v2415 = vld [vmem:[%s2404 + $0x28] sm:$0xf]
    %v2416 = vld [vmem:[%s2404 + $0x2c] sm:$0xf]
    %v2417 = vld [vmem:[%s2404 + $0x30] sm:$0xf]
    %v2418 = vld [vmem:[%s2404 + $0x34] sm:$0xf]
    %v2419 = vld [vmem:[%s2404 + $0x38] sm:$0xf]
    %v2420 = vld [vmem:[%s2404 + $0x3c] sm:$0xf]
    %v2421 = vld [vmem:[#allocation8 + $0x1c] sm:$0x1]
    %v2422 = vperm.slane %v2421, 0
    %v2439 = vunpack.c.l.b16 %v2405
    %v2440 = vunpack.c.l.b16 %v2406
    %v2441 = vunpack.c.l.b16 %v2407
    %v2442 = vunpack.c.l.b16 %v2408
    %v2443 = vunpack.c.l.b16 %v2409
    %v2444 = vunpack.c.l.b16 %v2410
    %v2445 = vunpack.c.l.b16 %v2411
    %v2446 = vunpack.c.l.b16 %v2412
    %v2447 = vunpack.c.l.b16 %v2413
    %v2448 = vunpack.c.l.b16 %v2414
    %v2449 = vunpack.c.l.b16 %v2415
    %v2450 = vunpack.c.l.b16 %v2416
    %v2451 = vunpack.c.l.b16 %v2417
    %v2452 = vunpack.c.l.b16 %v2418
    %v2453 = vunpack.c.l.b16 %v2419
    %v2454 = vunpack.c.l.b16 %v2420
    %v2455 = vpack.c.b16 %v2440, %v2439
    %v2456 = vpack.c.b16 %v2442, %v2441
    %v2457 = vpack.c.b16 %v2444, %v2443
    %v2458 = vpack.c.b16 %v2446, %v2445
    %v2459 = vpack.c.b16 %v2448, %v2447
    %v2460 = vpack.c.b16 %v2450, %v2449
    %v2461 = vpack.c.b16 %v2452, %v2451
    %v2462 = vpack.c.b16 %v2454, %v2453
    %2471 = vmatpush.bf16.msra.mxu0 %v2462
    %2472 = vmatpush.bf16.msra.mxu0 %v2461
    %2473 = vmatpush.bf16.msra.mxu0 %v2460
    %2474 = vmatpush.bf16.msra.mxu0 %v2459
    %2475 = vmatpush.bf16.msra.mxu0 %v2458
    %2476 = vmatpush.bf16.msra.mxu0 %v2457
    %2477 = vmatpush.bf16.msra.mxu0 %v2456
    %2478 = vmatpush.bf16.msra.mxu0 %v2455
    %2479 = vmatmul.bf16.gmra.mxu0 %v2403
    %v2480 = vpop.f32.mrf.mxu0
    %v2481 = vadd.f32 %v2422, %v2480
    %v2482 = vpop.f32.mrf.mxu0
    %2483 = vdwg.mxu0
    %v2484 = vmax.f32 %v2481, 0.0
    %v2485 = vpack.c.bf16 %v2484, %v2484
    %s2486 = scalar_lea.vmem [#allocation7], 1344
    %v2487 = vld [vmem:[%s2486] sm:$0xf]
    %v2488 = vld [vmem:[%s2486 + $0x4] sm:$0xf]
    %v2489 = vld [vmem:[%s2486 + $0x8] sm:$0xf]
    %v2490 = vld [vmem:[%s2486 + $0xc] sm:$0xf]
    %v2491 = vld [vmem:[%s2486 + $0x10] sm:$0xf]
    %v2492 = vld [vmem:[%s2486 + $0x14] sm:$0xf]
    %v2493 = vld [vmem:[%s2486 + $0x18] sm:$0xf]
    %v2494 = vld [vmem:[%s2486 + $0x1c] sm:$0xf]
    %v2495 = vld [vmem:[%s2486 + $0x20] sm:$0xf]
    %v2496 = vld [vmem:[%s2486 + $0x24] sm:$0xf]
    %v2497 = vld [vmem:[%s2486 + $0x28] sm:$0xf]
    %v2498 = vld [vmem:[%s2486 + $0x2c] sm:$0xf]
    %v2499 = vld [vmem:[%s2486 + $0x30] sm:$0xf]
    %v2500 = vld [vmem:[%s2486 + $0x34] sm:$0xf]
    %v2501 = vld [vmem:[%s2486 + $0x38] sm:$0xf]
    %v2502 = vld [vmem:[%s2486 + $0x3c] sm:$0xf]
    %v2503 = vld [vmem:[#allocation8 + $0x1d] sm:$0x1]
    %v2504 = vperm.slane %v2503, 0
    %v2521 = vunpack.c.l.b16 %v2487
    %v2522 = vunpack.c.l.b16 %v2488
    %v2523 = vunpack.c.l.b16 %v2489
    %v2524 = vunpack.c.l.b16 %v2490
    %v2525 = vunpack.c.l.b16 %v2491
    %v2526 = vunpack.c.l.b16 %v2492
    %v2527 = vunpack.c.l.b16 %v2493
    %v2528 = vunpack.c.l.b16 %v2494
    %v2529 = vunpack.c.l.b16 %v2495
    %v2530 = vunpack.c.l.b16 %v2496
    %v2531 = vunpack.c.l.b16 %v2497
    %v2532 = vunpack.c.l.b16 %v2498
    %v2533 = vunpack.c.l.b16 %v2499
    %v2534 = vunpack.c.l.b16 %v2500
    %v2535 = vunpack.c.l.b16 %v2501
    %v2536 = vunpack.c.l.b16 %v2502
    %v2537 = vpack.c.b16 %v2522, %v2521
    %v2538 = vpack.c.b16 %v2524, %v2523
    %v2539 = vpack.c.b16 %v2526, %v2525
    %v2540 = vpack.c.b16 %v2528, %v2527
    %v2541 = vpack.c.b16 %v2530, %v2529
    %v2542 = vpack.c.b16 %v2532, %v2531
    %v2543 = vpack.c.b16 %v2534, %v2533
    %v2544 = vpack.c.b16 %v2536, %v2535
    %2553 = vmatpush.bf16.msra.mxu0 %v2544
    %2554 = vmatpush.bf16.msra.mxu0 %v2543
    %2555 = vmatpush.bf16.msra.mxu0 %v2542
    %2556 = vmatpush.bf16.msra.mxu0 %v2541
    %2557 = vmatpush.bf16.msra.mxu0 %v2540
    %2558 = vmatpush.bf16.msra.mxu0 %v2539
    %2559 = vmatpush.bf16.msra.mxu0 %v2538
    %2560 = vmatpush.bf16.msra.mxu0 %v2537
    %2561 = vmatmul.bf16.gmra.mxu0 %v2485
    %v2562 = vpop.f32.mrf.mxu0
    %v2563 = vadd.f32 %v2504, %v2562
    %v2564 = vpop.f32.mrf.mxu0
    %2565 = vdwg.mxu0
    %2566 = vst [vmem:[#allocation10] sm:$0x3] %v2563
    // Predicated region
    $region34: #{tpu_custom_call.1} parent=1 // pred_check
      _
    $region35: #{tpu_custom_call.1} parent=1 // pred_check_branch
      %2568 = sbr.rel (0) target = $region37
    $region36: #{tpu_custom_call.1} parent=1 // pred_region
      %2570 = vsyncadd [#allocation4], 0
      %s2572 = sshll.u32 [#allocation10], 4
      %s2573 = int_to_ptr.vmem [resolvable:$true] %s2572
      %s2574 = sshll.u32 %s4, 4
      %s2575 = int_to_ptr.hbm [resolvable:$true] %s2574
      %2577 = dma.vmem_to_hbm [thread:$0]  %s2573, 32, %s2575, [#allocation4]
    $region37: #{tpu_custom_call.1} parent=1 // pred_fallthru
      _
    // Predicated region
    $region38: #{tpu_custom_call.1} parent=1 // pred_check
      _
    $region39: #{tpu_custom_call.1} parent=1 // pred_check_branch
      %2579 = sbr.rel (0) target = $region41
    $region40: #{tpu_custom_call.1} parent=1 // pred_region
      %2581 = dma.done [#allocation4], 32
    $region41: #{tpu_custom_call.1} parent=1 // pred_fallthru
      _
    %2582 = vsyncpa [#allocation3], 1
    %2583 = vsyncpa [#allocation6], 1
    %2584 = vsyncpa [#allocation9], 1
    %2585 = vsyncpa [#allocation4], 1

</llo_original>
